<compile_context>
chip_gen: v7x
topology: tpu7x:2x2x1
jax: 0.10.0
libtpu: 0.0.40
codegen_flags: <defaults>
</compile_context>

<pallas_src>
import functools

import jax
import jax.numpy as jnp
import numpy as np
from jax import lax
from jax.experimental import pallas as pl
from jax.experimental.pallas import tpu as pltpu

# MXU-native on all TPU generations; accumulation stays f32.
MATMUL_DTYPE = jnp.bfloat16
# Fits v7x physical (64 MiB) and is above v5e/v6e default scoped limits.
_VMEM_LIMIT = 64 * 1024 * 1024


def _round_up(x, m):
    return -(-x // m) * m


# -----------------------------------------------------------------------------
# Tiled matmul + bias kernel. Used for the hoisted LSTM input projection
# (x @ W_ih^T + b over all timesteps at once) and for the final fc6 Linear.
# -----------------------------------------------------------------------------
def _matmul_bias_kernel(x_ref, w_ref, b_ref, o_ref):
    acc = jnp.dot(x_ref[...], w_ref[...], preferred_element_type=jnp.float32)
    o_ref[...] = (acc + b_ref[...]).astype(o_ref.dtype)


def _pick_tn(op, pref):
    """Largest multiple of 128 <= pref dividing op (op is a 128-multiple)."""
    t = min(pref, op)
    t -= t % 128
    while t > 128 and op % t:
        t -= 128
    return max(t, 128)


def matmul_bias_pallas(x, w_t, b, *, tm_pref=256, tn_pref=512,
                       out_dtype=jnp.float32, weight_stationary=None):
    """x: (M, K); w_t: (K, O) pre-transposed; b: (O,) f32 -> (M, O) out_dtype.

    M is padded internally to a 16-aligned tile multiple and O to a
    128-multiple (weights are normally pre-padded at init); the result is
    sliced back to (M, O).
    """
    M, K = x.shape
    O = w_t.shape[1]

    Op = _round_up(O, 128)
    if Op != O:                       # weights are normally pre-padded at init
        w_t = jnp.pad(w_t, ((0, 0), (0, Op - O)))
        b = jnp.pad(b, (0, Op - O))
    tn = _pick_tn(Op, tn_pref)

    tm = min(tm_pref, _round_up(M, 16))   # 16-row align for bf16 sublane packing
    Mp = _round_up(M, tm)
    if Mp != M:
        x = jnp.pad(x, ((0, Mp - M), (0, 0)))

    x = x.astype(MATMUL_DTYPE)
    w_t = w_t.astype(MATMUL_DTYPE)
    b2 = b.reshape(1, Op).astype(jnp.float32)

    gm, gn = Mp // tm, Op // tn
    if weight_stationary is None:
        # Keep the larger operand resident / streamed once.
        weight_stationary = (K * Op) >= (Mp * K)

    if weight_stationary:
        # Output(O)-major grid: the (K, tn) weight block index only changes on
        # the outer axis, so each weight tile is fetched from HBM exactly once
        # (the small activation tile is re-streamed instead).
        grid = (gn, gm)
        in_specs = [pl.BlockSpec((tm, K), lambda j, i: (i, 0)),
                    pl.BlockSpec((K, tn), lambda j, i: (0, j)),
                    pl.BlockSpec((1, tn), lambda j, i: (0, j))]
        out_spec = pl.BlockSpec((tm, tn), lambda j, i: (i, j))
    else:
        grid = (gm, gn)
        in_specs = [pl.BlockSpec((tm, K), lambda i, j: (i, 0)),
                    pl.BlockSpec((K, tn), lambda i, j: (0, j)),
                    pl.BlockSpec((1, tn), lambda i, j: (0, j))]
        out_spec = pl.BlockSpec((tm, tn), lambda i, j: (i, j))

    out = pl.pallas_call(
        _matmul_bias_kernel,
        out_shape=jax.ShapeDtypeStruct((Mp, Op), out_dtype),
        grid_spec=pltpu.PrefetchScalarGridSpec(
            num_scalar_prefetch=0,
            grid=grid,
            in_specs=in_specs,
            out_specs=out_spec),
        compiler_params=pltpu.CompilerParams(
            dimension_semantics=("parallel", "parallel"),
            vmem_limit_bytes=_VMEM_LIMIT),
    )(x, w_t, b2)
    if (Mp, Op) != (M, O):
        out = out[:M, :O]
    return out


# -----------------------------------------------------------------------------
# LSTM recurrence kernel. Grid iterates sequentially over blocks of TB time
# steps; h/c state lives in VMEM scratch across grid iterations. The input
# projection Z_x (combined bias folded in, bf16) is precomputed, so per-step
# work is a single (Np,Hp) x (Hp,4Hp) matmul plus the gate epilogue.
# W_hh is copied ONCE into a single-buffered VMEM scratch (manual DMA), never
# double-buffered by the pipeline.
# -----------------------------------------------------------------------------
def _lstm_recur_kernel(zx_ref, h0_ref, c0_ref, whh_hbm,
                       y_ref, hT_ref, cT_ref,
                       whh_sc, h_sc, c_sc, dma_sem):
    tb = pl.program_id(0)

    @pl.when(tb == 0)
    def _():
        cp = pltpu.make_async_copy(whh_hbm, whh_sc, dma_sem)
        cp.start()
        cp.wait()
        h_sc[...] = h0_ref[...]
        c_sc[...] = c0_ref[...]

    TB = zx_ref.shape[0]
    Hp = h_sc.shape[-1]
    whh = whh_sc[...]                               # (Hp, 4Hp) bf16, resident

    def step(i, carry):
        h, c = carry                                # f32 state
        z = zx_ref[i].astype(jnp.float32) + jnp.dot(
            h.astype(whh.dtype), whh, preferred_element_type=jnp.float32)
        # PyTorch gate order [i, f, g, o]; Hp % 128 == 0 so every gate slice
        # starts on a lane boundary (no XLU relayout in the serial loop).
        i_g = jax.nn.sigmoid(z[:, 0 * Hp:1 * Hp])
        f_g = jax.nn.sigmoid(z[:, 1 * Hp:2 * Hp])
        g_g = jnp.tanh(z[:, 2 * Hp:3 * Hp])
        o_g = jax.nn.sigmoid(z[:, 3 * Hp:4 * Hp])
        c_new = f_g * c + i_g * g_g
        h_new = o_g * jnp.tanh(c_new)
        y_ref[i] = h_new
        return h_new, c_new

    # TODO(synk): sweep TB / drop unroll=True if the bundle shows vreg spills
    #             at large H (z is (Np, 4Hp) f32 live per step).
    h, c = lax.fori_loop(0, TB, step, (h_sc[...], c_sc[...]), unroll=True)
    h_sc[...] = h
    c_sc[...] = c

    @pl.when(tb == pl.num_programs(0) - 1)
    def _():
        hT_ref[...] = h
        cT_ref[...] = c


def _pick_tb(T, pref):
    tb = min(pref, T)
    while T % tb:
        tb -= 1
    return tb


def lstm_layer_pallas(x, h0, c0, wih_t, whh_t, b, *, tb_pref=8):
    """x: (T, Np, INp) f32; h0/c0: (Np, Hp) f32; wih_t: (INp, 4Hp) bf16;
    whh_t: (Hp, 4Hp) bf16; b: (4Hp,) f32.  Np % 8 == 0, Hp % 128 == 0."""
    T, Np, INp = x.shape
    Hp = h0.shape[-1]

    # 1) Hoisted input projection: one MXU-friendly (T*Np, INp) x (INp, 4Hp)
    #    matmul (bias folded in), emitted in bf16 to halve the zx round trip.
    zx = matmul_bias_pallas(x.reshape(T * Np, INp), wih_t, b,
                            out_dtype=MATMUL_DTYPE)
    zx = zx.reshape(T, Np, 4 * Hp)

    # 2) Sequential recurrence, blocked over TB timesteps per grid iteration.
    TB = _pick_tb(T, tb_pref)
    ys, hT, cT = pl.pallas_call(
        _lstm_recur_kernel,
        out_shape=(jax.ShapeDtypeStruct((T, Np, Hp), jnp.float32),
                   jax.ShapeDtypeStruct((Np, Hp), jnp.float32),
                   jax.ShapeDtypeStruct((Np, Hp), jnp.float32)),
        grid_spec=pltpu.PrefetchScalarGridSpec(
            num_scalar_prefetch=0,
            grid=(T // TB,),
            in_specs=[pl.BlockSpec((TB, Np, 4 * Hp), lambda t: (t, 0, 0)),
                      pl.BlockSpec((Np, Hp), lambda t: (0, 0)),
                      pl.BlockSpec((Np, Hp), lambda t: (0, 0)),
                      pl.BlockSpec(memory_space=pl.ANY)],   # W_hh stays in HBM
            out_specs=[pl.BlockSpec((TB, Np, Hp), lambda t: (t, 0, 0)),
                       pl.BlockSpec((Np, Hp), lambda t: (0, 0)),
                       pl.BlockSpec((Np, Hp), lambda t: (0, 0))],
            scratch_shapes=[pltpu.VMEM((Hp, 4 * Hp), MATMUL_DTYPE),
                            pltpu.VMEM((Np, Hp), jnp.float32),
                            pltpu.VMEM((Np, Hp), jnp.float32),
                            pltpu.SemaphoreType.DMA(())]),
        compiler_params=pltpu.CompilerParams(
            dimension_semantics=("arbitrary",),
            vmem_limit_bytes=_VMEM_LIMIT),
    )(zx, h0, c0, whh_t)
    return ys, hT, cT


# -----------------------------------------------------------------------------
# Full model forward (matches PyTorch Model.forward semantics, eval mode).
# Note: PyTorch code feeds lstm3's returned hidden into lstm4 — reproduced.
# -----------------------------------------------------------------------------
def model_forward(params, tokens, hidden=None):
    T, N = tokens.shape
    H = params["nhid"]
    Hp = params["nhid_p"]
    ntoken = params["ntoken"]
    Np = _round_up(N, 8)

    # Embedding gather (plain-JAX glue); drop2 is identity (eval mode).
    emb = jnp.take(params["embed_w"], tokens, axis=0)            # (T, N, ninp)
    if Np != N:
        emb = jnp.pad(emb, ((0, 0), (0, Np - N), (0, 0)))

    if hidden is None:
        h0 = jnp.zeros((Np, Hp), jnp.float32)
        c0 = jnp.zeros((Np, Hp), jnp.float32)
    else:
        h0 = jnp.pad(hidden[0][0], ((0, Np - N), (0, Hp - H)))
        c0 = jnp.pad(hidden[1][0], ((0, Np - N), (0, Hp - H)))

    y3, h3, c3 = lstm_layer_pallas(emb, h0, c0,
                                   params["l3_wih_t"], params["l3_whh_t"],
                                   params["l3_b"])
    y4, h4, c4 = lstm_layer_pallas(y3, h3, c3,
                                   params["l4_wih_t"], params["l4_whh_t"],
                                   params["l4_b"])
    # drop5: identity (eval mode).

    y4 = y4[:, :N, :H]                       # strip batch / hidden padding
    logits = matmul_bias_pallas(y4.reshape(T * N, H),
                                params["fc_wt"], params["fc_b"],
                                weight_stationary=True)
    logits = logits[:, :ntoken].reshape(T, N, ntoken)
    h_out = h4[:N, :H][None]
    c_out = c4[:N, :H][None]
    return logits, (h_out, c_out)


# -----------------------------------------------------------------------------
# Pure-JAX f32 reference (uses the same bf16-cast, unpadded weight copies).
# -----------------------------------------------------------------------------
def _lstm_ref(x, h0, c0, wih_t, whh_t, b):
    wih_t = wih_t.astype(jnp.float32)
    whh_t = whh_t.astype(jnp.float32)

    def step(carry, x_t):
        h, c = carry
        z = x_t @ wih_t + h @ whh_t + b
        i, f, g, o = jnp.split(z, 4, axis=-1)
        c = jax.nn.sigmoid(f) * c + jax.nn.sigmoid(i) * jnp.tanh(g)
        h = jax.nn.sigmoid(o) * jnp.tanh(c)
        return (h, c), h

    (hT, cT), ys = lax.scan(step, (h0, c0), x)
    return ys, hT, cT


def model_forward_ref(params, tokens):
    T, N = tokens.shape
    H = params["nhid"]
    ntoken = params["ntoken"]
    emb = jnp.take(params["embed_w"], tokens, axis=0)
    h0 = jnp.zeros((N, H), jnp.float32)
    c0 = jnp.zeros((N, H), jnp.float32)
    y3, h3, c3 = _lstm_ref(emb, h0, c0, params["l3_wih_t_ref"],
                           params["l3_whh_t_ref"], params["l3_b_ref"])
    y4, h4, c4 = _lstm_ref(y3, h3, c3, params["l4_wih_t_ref"],
                           params["l4_whh_t_ref"], params["l4_b_ref"])
    fc_w = params["fc_wt"].astype(jnp.float32)[:, :ntoken]
    logits = y4.reshape(T * N, H) @ fc_w + params["fc_b"][:ntoken]
    return logits.reshape(T, N, -1), (h4[None], c4[None])


# -----------------------------------------------------------------------------
# Deterministic parameter init (mirrors PyTorch init shapes / ranges), with
# weights pre-transposed to (K, O), per-gate padded to Hp, biases combined,
# vocab padded to a 128-multiple, and matmul weights pre-cast to bf16 once.
# -----------------------------------------------------------------------------
def _prep_lstm_params(wih, whh, bih, bhh, H, Hp, in_dim, in_dim_p):
    """PyTorch (4H,in)/(4H,H) layout -> per-gate-padded transposed bf16 kernel
    weights plus unpadded reference copies (same bf16 cast, so padding is the
    only difference and it is exactly zero)."""
    wih_p = jnp.pad(wih.reshape(4, H, in_dim),
                    ((0, 0), (0, Hp - H), (0, in_dim_p - in_dim)))
    whh_p = jnp.pad(whh.reshape(4, H, H),
                    ((0, 0), (0, Hp - H), (0, Hp - H)))
    b_p = jnp.pad((bih + bhh).reshape(4, H), ((0, 0), (0, Hp - H)))

    kern = (wih_p.reshape(4 * Hp, in_dim_p).T.astype(MATMUL_DTYPE),
            whh_p.reshape(4 * Hp, Hp).T.astype(MATMUL_DTYPE),
            b_p.reshape(4 * Hp).astype(jnp.float32))
    ref = (wih.T.astype(MATMUL_DTYPE),
           whh.T.astype(MATMUL_DTYPE),
           (bih + bhh).astype(jnp.float32))
    return kern, ref


def init_params(key, ntoken, ninp, nhid):
    ks = jax.random.split(key, 10)
    u = lambda k, shape, r: jax.random.uniform(k, shape, jnp.float32, -r, r)
    klstm = 1.0 / float(np.sqrt(nhid))
    Hp = _round_up(nhid, 128)
    Op = _round_up(ntoken, 128)

    l3_wih = u(ks[1], (4 * nhid, ninp), klstm)
    l3_whh = u(ks[2], (4 * nhid, nhid), klstm)
    l3_bih = u(ks[3], (4 * nhid,), klstm)
    l3_bhh = u(ks[4], (4 * nhid,), klstm)
    l4_wih = u(ks[5], (4 * nhid, nhid), klstm)
    l4_whh = u(ks[6], (4 * nhid, nhid), klstm)
    l4_bih = u(ks[7], (4 * nhid,), klstm)
    l4_bhh = u(ks[8], (4 * nhid,), klstm)
    fc_w = u(ks[9], (ntoken, nhid), 0.1)

    (l3_wih_t, l3_whh_t, l3_b), (l3_wih_tr, l3_whh_tr, l3_br) = \
        _prep_lstm_params(l3_wih, l3_whh, l3_bih, l3_bhh, nhid, Hp, ninp, ninp)
    (l4_wih_t, l4_whh_t, l4_b), (l4_wih_tr, l4_whh_tr, l4_br) = \
        _prep_lstm_params(l4_wih, l4_whh, l4_bih, l4_bhh, nhid, Hp, nhid, Hp)

    fc_wt = jnp.pad(fc_w.T, ((0, 0), (0, Op - ntoken))).astype(MATMUL_DTYPE)
    fc_b = jnp.zeros((Op,), jnp.float32)

    return {
        "nhid": nhid, "nhid_p": Hp, "ntoken": ntoken,
        "embed_w": u(ks[0], (ntoken, ninp), 0.1),
        "l3_wih_t": l3_wih_t, "l3_whh_t": l3_whh_t, "l3_b": l3_b,
        "l4_wih_t": l4_wih_t, "l4_whh_t": l4_whh_t, "l4_b": l4_b,
        "fc_wt": fc_wt, "fc_b": fc_b,
        # Unpadded copies (same bf16 cast) for the pure-JAX reference.
        "l3_wih_t_ref": l3_wih_tr, "l3_whh_t_ref": l3_whh_tr, "l3_b_ref": l3_br,
        "l4_wih_t_ref": l4_wih_tr, "l4_whh_t_ref": l4_whh_tr, "l4_b_ref": l4_br,
    }


if __name__ == "__main__":
    NTOKEN, NINP, NHID = 50, 32, 32
    T, N = 8, 2

    key = jax.random.PRNGKey(0)
    pkey, tkey = jax.random.split(key)
    params = init_params(pkey, NTOKEN, NINP, NHID)
    tokens = jax.random.randint(tkey, (T, N), 0, NTOKEN, dtype=jnp.int32)

    logits, (h_out, c_out) = jax.jit(
        functools.partial(model_forward, params))(tokens)
    jax.block_until_ready((logits, h_out, c_out))

    assert logits.shape == (T, N, NTOKEN)
    assert h_out.shape == (1, N, NHID) and c_out.shape == (1, N, NHID)

    ref_logits, (ref_h, ref_c) = model_forward_ref(params, tokens)
    np.testing.assert_allclose(np.asarray(logits), np.asarray(ref_logits),
                               rtol=2e-2, atol=2e-2)
    np.testing.assert_allclose(np.asarray(h_out), np.asarray(ref_h),
                               rtol=2e-2, atol=2e-2)
    np.testing.assert_allclose(np.asarray(c_out), np.asarray(ref_c),
                               rtol=2e-2, atol=2e-2)

    print("KERNEL_OK")
</pallas_src>

<mosaic_0001>
module attributes {stable_mosaic.version = 11 : i64} {
  func.func @_matmul_bias_kernel(%arg0: i32, %arg1: i32, %arg2: memref<64x32xbf16, #tpu.memory_space<vmem>>, %arg3: memref<32x512xbf16, #tpu.memory_space<vmem>>, %arg4: memref<1x512xf32, #tpu.memory_space<vmem>>, %arg5: memref<64x512xbf16, #tpu.memory_space<vmem>>) attributes {dimension_semantics = [#tpu.dimension_semantics<parallel>, #tpu.dimension_semantics<parallel>], iteration_bounds = array<i64: 1, 1>, scalar_prefetch = 0 : i64, scratch_operands = 0 : i64, tpu.core_type = #tpu.core_type<tc>, window_params = [{transform_indices = @transform_0, window_bounds = array<i64: 64, 32>}, {transform_indices = @transform_1, window_bounds = array<i64: 32, 512>}, {transform_indices = @transform_2, window_bounds = array<i64: 1, 512>}, {transform_indices = @transform_3, window_bounds = array<i64: 64, 512>}]} {
    %c0 = arith.constant 0 : index
    %c0_0 = arith.constant 0 : index
    %0 = vector.load %arg2[%c0, %c0_0] : memref<64x32xbf16, #tpu.memory_space<vmem>>, vector<64x32xbf16>
    %c0_1 = arith.constant 0 : index
    %c0_2 = arith.constant 0 : index
    %1 = vector.load %arg3[%c0_1, %c0_2] : memref<32x512xbf16, #tpu.memory_space<vmem>>, vector<32x512xbf16>
    %cst = arith.constant dense<0.000000e+00> : vector<64x512xf32>
    %2 = tpu.matmul %0, %1, %cst {dimension_numbers = #tpu.dot_dimension_numbers<[1], [0], [0], [1], [0, 0, 1, 1], [], []>} : vector<64x32xbf16>, vector<32x512xbf16>, vector<64x512xf32> -> vector<64x512xf32>
    %c0_3 = arith.constant 0 : index
    %c0_4 = arith.constant 0 : index
    %3 = vector.load %arg4[%c0_3, %c0_4] : memref<1x512xf32, #tpu.memory_space<vmem>>, vector<1x512xf32>
    %4 = vector.broadcast %3 : vector<1x512xf32> to vector<64x512xf32>
    %5 = arith.addf %2, %4 : vector<64x512xf32>
    %6 = arith.truncf %5 : vector<64x512xf32> to vector<64x512xbf16>
    %c0_5 = arith.constant 0 : index
    %c0_6 = arith.constant 0 : index
    %7 = vector.load %arg5[%c0_5, %c0_6] : memref<64x512xbf16, #tpu.memory_space<vmem>>, vector<64x512xbf16>
    tpu.vector_store %arg5[%c0_5, %c0_6], %6 {strides = array<i32>} : memref<64x512xbf16, #tpu.memory_space<vmem>>, vector<64x512xbf16>,
    return
  }
  func.func @transform_0(%arg0: i32, %arg1: i32) -> (i32, i32) {
    %c0_i32 = arith.constant 0 : i32
    %c0_i32_0 = arith.constant 0 : i32
    return %arg1, %c0_i32 : i32, i32
  }
  func.func @transform_1(%arg0: i32, %arg1: i32) -> (i32, i32) {
    %c0_i32 = arith.constant 0 : i32
    %c0_i32_0 = arith.constant 0 : i32
    return %c0_i32, %arg0 : i32, i32
  }
  func.func @transform_2(%arg0: i32, %arg1: i32) -> (i32, i32) {
    %c0_i32 = arith.constant 0 : i32
    %c0_i32_0 = arith.constant 0 : i32
    return %c0_i32, %arg0 : i32, i32
  }
  func.func @transform_3(%arg0: i32, %arg1: i32) -> (i32, i32) {
    %c0_i32 = arith.constant 0 : i32
    return %arg1, %arg0 : i32, i32
  }
}

module attributes {stable_mosaic.version = 11 : i64} {
  func.func @_matmul_bias_kernel(%arg0: i32, %arg1: i32, %arg2: memref<64x128xbf16, #tpu.memory_space<vmem>>, %arg3: memref<128x512xbf16, #tpu.memory_space<vmem>>, %arg4: memref<1x512xf32, #tpu.memory_space<vmem>>, %arg5: memref<64x512xbf16, #tpu.memory_space<vmem>>) attributes {dimension_semantics = [#tpu.dimension_semantics<parallel>, #tpu.dimension_semantics<parallel>], iteration_bounds = array<i64: 1, 1>, scalar_prefetch = 0 : i64, scratch_operands = 0 : i64, tpu.core_type = #tpu.core_type<tc>, window_params = [{transform_indices = @transform_0, window_bounds = array<i64: 64, 128>}, {transform_indices = @transform_1, window_bounds = array<i64: 128, 512>}, {transform_indices = @transform_2, window_bounds = array<i64: 1, 512>}, {transform_indices = @transform_3, window_bounds = array<i64: 64, 512>}]} {
    %c0 = arith.constant 0 : index
    %c0_0 = arith.constant 0 : index
    %0 = vector.load %arg2[%c0, %c0_0] : memref<64x128xbf16, #tpu.memory_space<vmem>>, vector<64x128xbf16>
    %c0_1 = arith.constant 0 : index
    %c0_2 = arith.constant 0 : index
    %1 = vector.load %arg3[%c0_1, %c0_2] : memref<128x512xbf16, #tpu.memory_space<vmem>>, vector<128x512xbf16>
    %cst = arith.constant dense<0.000000e+00> : vector<64x512xf32>
    %2 = tpu.matmul %0, %1, %cst {dimension_numbers = #tpu.dot_dimension_numbers<[1], [0], [0], [1], [0, 0, 1, 1], [], []>} : vector<64x128xbf16>, vector<128x512xbf16>, vector<64x512xf32> -> vector<64x512xf32>
    %c0_3 = arith.constant 0 : index
    %c0_4 = arith.constant 0 : index
    %3 = vector.load %arg4[%c0_3, %c0_4] : memref<1x512xf32, #tpu.memory_space<vmem>>, vector<1x512xf32>
    %4 = vector.broadcast %3 : vector<1x512xf32> to vector<64x512xf32>
    %5 = arith.addf %2, %4 : vector<64x512xf32>
    %6 = arith.truncf %5 : vector<64x512xf32> to vector<64x512xbf16>
    %c0_5 = arith.constant 0 : index
    %c0_6 = arith.constant 0 : index
    %7 = vector.load %arg5[%c0_5, %c0_6] : memref<64x512xbf16, #tpu.memory_space<vmem>>, vector<64x512xbf16>
    tpu.vector_store %arg5[%c0_5, %c0_6], %6 {strides = array<i32>} : memref<64x512xbf16, #tpu.memory_space<vmem>>, vector<64x512xbf16>,
    return
  }
  func.func @transform_0(%arg0: i32, %arg1: i32) -> (i32, i32) {
    %c0_i32 = arith.constant 0 : i32
    %c0_i32_0 = arith.constant 0 : i32
    return %arg1, %c0_i32 : i32, i32
  }
  func.func @transform_1(%arg0: i32, %arg1: i32) -> (i32, i32) {
    %c0_i32 = arith.constant 0 : i32
    %c0_i32_0 = arith.constant 0 : i32
    return %c0_i32, %arg0 : i32, i32
  }
  func.func @transform_2(%arg0: i32, %arg1: i32) -> (i32, i32) {
    %c0_i32 = arith.constant 0 : i32
    %c0_i32_0 = arith.constant 0 : i32
    return %c0_i32, %arg0 : i32, i32
  }
  func.func @transform_3(%arg0: i32, %arg1: i32) -> (i32, i32) {
    %c0_i32 = arith.constant 0 : i32
    return %arg1, %arg0 : i32, i32
  }
}

module attributes {stable_mosaic.version = 11 : i64} {
  func.func @_lstm_recur_kernel(%arg0: i32, %arg1: memref<8x8x512xbf16, #tpu.memory_space<vmem>>, %arg2: memref<8x128xf32, #tpu.memory_space<vmem>>, %arg3: memref<8x128xf32, #tpu.memory_space<vmem>>, %arg4: memref<128x512xbf16, #tpu.memory_space<any>>, %arg5: memref<8x8x128xf32, #tpu.memory_space<vmem>>, %arg6: memref<8x128xf32, #tpu.memory_space<vmem>>, %arg7: memref<8x128xf32, #tpu.memory_space<vmem>>, %arg8: memref<128x512xbf16, #tpu.memory_space<vmem>>, %arg9: memref<8x128xf32, #tpu.memory_space<vmem>>, %arg10: memref<8x128xf32, #tpu.memory_space<vmem>>, %arg11: memref<!tpu.dma_semaphore, #tpu.memory_space<semaphore_mem>>) attributes {dimension_semantics = [#tpu.dimension_semantics<arbitrary>], iteration_bounds = array<i64: 1>, scalar_prefetch = 0 : i64, scratch_operands = 4 : i64, tpu.core_type = #tpu.core_type<tc>, window_params = [{transform_indices = @transform_0, window_bounds = array<i64: 8, 8, 512>}, {pipeline_mode = #tpu.pipeline_mode<synchronous>, transform_indices = @transform_1, window_bounds = array<i64: 8, 128>}, {pipeline_mode = #tpu.pipeline_mode<synchronous>, transform_indices = @transform_2, window_bounds = array<i64: 8, 128>}, {}, {transform_indices = @transform_4, window_bounds = array<i64: 8, 8, 128>}, {pipeline_mode = #tpu.pipeline_mode<synchronous>, transform_indices = @transform_5, window_bounds = array<i64: 8, 128>}, {pipeline_mode = #tpu.pipeline_mode<synchronous>, transform_indices = @transform_6, window_bounds = array<i64: 8, 128>}]} {
    %c0_i32 = arith.constant 0 : i32
    %0 = arith.cmpi eq, %arg0, %c0_i32 : i32
    %1 = arith.extui %0 : i1 to i32
    %c0_i32_0 = arith.constant 0 : i32
    %2 = arith.cmpi ne, %1, %c0_i32_0 : i32
    scf.if %2 {
      tpu.enqueue_dma source(%arg4 : memref<128x512xbf16, #tpu.memory_space<any>>) target(%arg8 : memref<128x512xbf16, #tpu.memory_space<vmem>>) target_semaphore(%arg11 : memref<!tpu.dma_semaphore, #tpu.memory_space<semaphore_mem>>)
      tpu.wait_dma2 semaphore(%arg11 : memref<!tpu.dma_semaphore, #tpu.memory_space<semaphore_mem>>) src(%arg4 : memref<128x512xbf16, #tpu.memory_space<any>>) dst(%arg8 : memref<128x512xbf16, #tpu.memory_space<vmem>>)
      %c0_76 = arith.constant 0 : index
      %c0_77 = arith.constant 0 : index
      %299 = vector.load %arg2[%c0_76, %c0_77] : memref<8x128xf32, #tpu.memory_space<vmem>>, vector<8x128xf32>
      %c0_78 = arith.constant 0 : index
      %c0_79 = arith.constant 0 : index
      %300 = vector.load %arg9[%c0_78, %c0_79] : memref<8x128xf32, #tpu.memory_space<vmem>>, vector<8x128xf32>
      tpu.vector_store %arg9[%c0_78, %c0_79], %299 {strides = array<i32>} : memref<8x128xf32, #tpu.memory_space<vmem>>, vector<8x128xf32>,
      %c0_80 = arith.constant 0 : index
      %c0_81 = arith.constant 0 : index
      %301 = vector.load %arg3[%c0_80, %c0_81] : memref<8x128xf32, #tpu.memory_space<vmem>>, vector<8x128xf32>
      %c0_82 = arith.constant 0 : index
      %c0_83 = arith.constant 0 : index
      %302 = vector.load %arg10[%c0_82, %c0_83] : memref<8x128xf32, #tpu.memory_space<vmem>>, vector<8x128xf32>
      tpu.vector_store %arg10[%c0_82, %c0_83], %301 {strides = array<i32>} : memref<8x128xf32, #tpu.memory_space<vmem>>, vector<8x128xf32>,
    } else {
    }
    %c0 = arith.constant 0 : index
    %c0_1 = arith.constant 0 : index
    %3 = vector.load %arg8[%c0, %c0_1] : memref<128x512xbf16, #tpu.memory_space<vmem>>, vector<128x512xbf16>
    %c0_2 = arith.constant 0 : index
    %c0_3 = arith.constant 0 : index
    %4 = vector.load %arg9[%c0_2, %c0_3] : memref<8x128xf32, #tpu.memory_space<vmem>>, vector<8x128xf32>
    %c0_4 = arith.constant 0 : index
    %c0_5 = arith.constant 0 : index
    %5 = vector.load %arg10[%c0_4, %c0_5] : memref<8x128xf32, #tpu.memory_space<vmem>>, vector<8x128xf32>
    %c0_i32_6 = arith.constant 0 : i32
    %6 = arith.index_cast %c0_i32_6 : i32 to index
    %c0_7 = arith.constant 0 : index
    %c0_8 = arith.constant 0 : index
    %7 = vector.load %arg1[%6, %c0_7, %c0_8] : memref<8x8x512xbf16, #tpu.memory_space<vmem>>, vector<1x8x512xbf16>
    %8 = vector.shape_cast %7 : vector<1x8x512xbf16> to vector<8x512xbf16>
    %9 = arith.extf %8 : vector<8x512xbf16> to vector<8x512xf32>
    %10 = arith.truncf %4 : vector<8x128xf32> to vector<8x128xbf16>
    %cst = arith.constant dense<0.000000e+00> : vector<8x512xf32>
    %11 = tpu.matmul %10, %3, %cst {dimension_numbers = #tpu.dot_dimension_numbers<[1], [0], [0], [1], [0, 0, 1, 1], [], []>} : vector<8x128xbf16>, vector<128x512xbf16>, vector<8x512xf32> -> vector<8x512xf32>
    %12 = arith.addf %9, %11 : vector<8x512xf32>
    %13 = vector.extract_strided_slice %12 {offsets = [0, 0], sizes = [8, 128], strides = [1, 1]} : vector<8x512xf32> to vector<8x128xf32>
    %14 = arith.negf %13 : vector<8x128xf32>
    %15 = math.exp %14 : vector<8x128xf32>
    %cst_9 = arith.constant 1.000000e+00 : f32
    %16 = vector.broadcast %cst_9 : f32 to vector<8x128xf32>
    %17 = arith.addf %16, %15 : vector<8x128xf32>
    %18 = arith.divf %16, %17 : vector<8x128xf32>
    %19 = vector.extract_strided_slice %12 {offsets = [0, 128], sizes = [8, 128], strides = [1, 1]} : vector<8x512xf32> to vector<8x128xf32>
    %20 = arith.negf %19 : vector<8x128xf32>
    %21 = math.exp %20 : vector<8x128xf32>
    %cst_10 = arith.constant 1.000000e+00 : f32
    %22 = vector.broadcast %cst_10 : f32 to vector<8x128xf32>
    %23 = arith.addf %22, %21 : vector<8x128xf32>
    %24 = arith.divf %22, %23 : vector<8x128xf32>
    %25 = vector.extract_strided_slice %12 {offsets = [0, 256], sizes = [8, 128], strides = [1, 1]} : vector<8x512xf32> to vector<8x128xf32>
    %26 = math.tanh %25 : vector<8x128xf32>
    %27 = vector.extract_strided_slice %12 {offsets = [0, 384], sizes = [8, 128], strides = [1, 1]} : vector<8x512xf32> to vector<8x128xf32>
    %28 = arith.negf %27 : vector<8x128xf32>
    %29 = math.exp %28 : vector<8x128xf32>
    %cst_11 = arith.constant 1.000000e+00 : f32
    %30 = vector.broadcast %cst_11 : f32 to vector<8x128xf32>
    %31 = arith.addf %30, %29 : vector<8x128xf32>
    %32 = arith.divf %30, %31 : vector<8x128xf32>
    %33 = arith.mulf %24, %5 : vector<8x128xf32>
    %34 = arith.mulf %18, %26 : vector<8x128xf32>
    %35 = arith.addf %33, %34 : vector<8x128xf32>
    %36 = math.tanh %35 : vector<8x128xf32>
    %37 = arith.mulf %32, %36 : vector<8x128xf32>
    %38 = arith.index_cast %c0_i32_6 : i32 to index
    %c0_12 = arith.constant 0 : index
    %c0_13 = arith.constant 0 : index
    %39 = vector.load %arg5[%38, %c0_12, %c0_13] : memref<8x8x128xf32, #tpu.memory_space<vmem>>, vector<1x8x128xf32>
    %40 = vector.shape_cast %39 : vector<1x8x128xf32> to vector<8x128xf32>
    %41 = vector.shape_cast %37 : vector<8x128xf32> to vector<1x8x128xf32>
    tpu.vector_store %arg5[%38, %c0_12, %c0_13], %41 {strides = array<i32>} : memref<8x8x128xf32, #tpu.memory_space<vmem>>, vector<1x8x128xf32>,
    %c1_i32 = arith.constant 1 : i32
    %42 = arith.index_cast %c1_i32 : i32 to index
    %c0_14 = arith.constant 0 : index
    %c0_15 = arith.constant 0 : index
    %43 = vector.load %arg1[%42, %c0_14, %c0_15] : memref<8x8x512xbf16, #tpu.memory_space<vmem>>, vector<1x8x512xbf16>
    %44 = vector.shape_cast %43 : vector<1x8x512xbf16> to vector<8x512xbf16>
    %45 = arith.extf %44 : vector<8x512xbf16> to vector<8x512xf32>
    %46 = arith.truncf %37 : vector<8x128xf32> to vector<8x128xbf16>
    %cst_16 = arith.constant dense<0.000000e+00> : vector<8x512xf32>
    %47 = tpu.matmul %46, %3, %cst_16 {dimension_numbers = #tpu.dot_dimension_numbers<[1], [0], [0], [1], [0, 0, 1, 1], [], []>} : vector<8x128xbf16>, vector<128x512xbf16>, vector<8x512xf32> -> vector<8x512xf32>
    %48 = arith.addf %45, %47 : vector<8x512xf32>
    %49 = vector.extract_strided_slice %48 {offsets = [0, 0], sizes = [8, 128], strides = [1, 1]} : vector<8x512xf32> to vector<8x128xf32>
    %50 = arith.negf %49 : vector<8x128xf32>
    %51 = math.exp %50 : vector<8x128xf32>
    %cst_17 = arith.constant 1.000000e+00 : f32
    %52 = vector.broadcast %cst_17 : f32 to vector<8x128xf32>
    %53 = arith.addf %52, %51 : vector<8x128xf32>
    %54 = arith.divf %52, %53 : vector<8x128xf32>
    %55 = vector.extract_strided_slice %48 {offsets = [0, 128], sizes = [8, 128], strides = [1, 1]} : vector<8x512xf32> to vector<8x128xf32>
    %56 = arith.negf %55 : vector<8x128xf32>
    %57 = math.exp %56 : vector<8x128xf32>
    %cst_18 = arith.constant 1.000000e+00 : f32
    %58 = vector.broadcast %cst_18 : f32 to vector<8x128xf32>
    %59 = arith.addf %58, %57 : vector<8x128xf32>
    %60 = arith.divf %58, %59 : vector<8x128xf32>
    %61 = vector.extract_strided_slice %48 {offsets = [0, 256], sizes = [8, 128], strides = [1, 1]} : vector<8x512xf32> to vector<8x128xf32>
    %62 = math.tanh %61 : vector<8x128xf32>
    %63 = vector.extract_strided_slice %48 {offsets = [0, 384], sizes = [8, 128], strides = [1, 1]} : vector<8x512xf32> to vector<8x128xf32>
    %64 = arith.negf %63 : vector<8x128xf32>
    %65 = math.exp %64 : vector<8x128xf32>
    %cst_19 = arith.constant 1.000000e+00 : f32
    %66 = vector.broadcast %cst_19 : f32 to vector<8x128xf32>
    %67 = arith.addf %66, %65 : vector<8x128xf32>
    %68 = arith.divf %66, %67 : vector<8x128xf32>
    %69 = arith.mulf %60, %35 : vector<8x128xf32>
    %70 = arith.mulf %54, %62 : vector<8x128xf32>
    %71 = arith.addf %69, %70 : vector<8x128xf32>
    %72 = math.tanh %71 : vector<8x128xf32>
    %73 = arith.mulf %68, %72 : vector<8x128xf32>
    %74 = arith.index_cast %c1_i32 : i32 to index
    %c0_20 = arith.constant 0 : index
    %c0_21 = arith.constant 0 : index
    %75 = vector.load %arg5[%74, %c0_20, %c0_21] : memref<8x8x128xf32, #tpu.memory_space<vmem>>, vector<1x8x128xf32>
    %76 = vector.shape_cast %75 : vector<1x8x128xf32> to vector<8x128xf32>
    %77 = vector.shape_cast %73 : vector<8x128xf32> to vector<1x8x128xf32>
    tpu.vector_store %arg5[%74, %c0_20, %c0_21], %77 {strides = array<i32>} : memref<8x8x128xf32, #tpu.memory_space<vmem>>, vector<1x8x128xf32>,
    %c2_i32 = arith.constant 2 : i32
    %78 = arith.index_cast %c2_i32 : i32 to index
    %c0_22 = arith.constant 0 : index
    %c0_23 = arith.constant 0 : index
    %79 = vector.load %arg1[%78, %c0_22, %c0_23] : memref<8x8x512xbf16, #tpu.memory_space<vmem>>, vector<1x8x512xbf16>
    %80 = vector.shape_cast %79 : vector<1x8x512xbf16> to vector<8x512xbf16>
    %81 = arith.extf %80 : vector<8x512xbf16> to vector<8x512xf32>
    %82 = arith.truncf %73 : vector<8x128xf32> to vector<8x128xbf16>
    %cst_24 = arith.constant dense<0.000000e+00> : vector<8x512xf32>
    %83 = tpu.matmul %82, %3, %cst_24 {dimension_numbers = #tpu.dot_dimension_numbers<[1], [0], [0], [1], [0, 0, 1, 1], [], []>} : vector<8x128xbf16>, vector<128x512xbf16>, vector<8x512xf32> -> vector<8x512xf32>
    %84 = arith.addf %81, %83 : vector<8x512xf32>
    %85 = vector.extract_strided_slice %84 {offsets = [0, 0], sizes = [8, 128], strides = [1, 1]} : vector<8x512xf32> to vector<8x128xf32>
    %86 = arith.negf %85 : vector<8x128xf32>
    %87 = math.exp %86 : vector<8x128xf32>
    %cst_25 = arith.constant 1.000000e+00 : f32
    %88 = vector.broadcast %cst_25 : f32 to vector<8x128xf32>
    %89 = arith.addf %88, %87 : vector<8x128xf32>
    %90 = arith.divf %88, %89 : vector<8x128xf32>
    %91 = vector.extract_strided_slice %84 {offsets = [0, 128], sizes = [8, 128], strides = [1, 1]} : vector<8x512xf32> to vector<8x128xf32>
    %92 = arith.negf %91 : vector<8x128xf32>
    %93 = math.exp %92 : vector<8x128xf32>
    %cst_26 = arith.constant 1.000000e+00 : f32
    %94 = vector.broadcast %cst_26 : f32 to vector<8x128xf32>
    %95 = arith.addf %94, %93 : vector<8x128xf32>
    %96 = arith.divf %94, %95 : vector<8x128xf32>
    %97 = vector.extract_strided_slice %84 {offsets = [0, 256], sizes = [8, 128], strides = [1, 1]} : vector<8x512xf32> to vector<8x128xf32>
    %98 = math.tanh %97 : vector<8x128xf32>
    %99 = vector.extract_strided_slice %84 {offsets = [0, 384], sizes = [8, 128], strides = [1, 1]} : vector<8x512xf32> to vector<8x128xf32>
    %100 = arith.negf %99 : vector<8x128xf32>
    %101 = math.exp %100 : vector<8x128xf32>
    %cst_27 = arith.constant 1.000000e+00 : f32
    %102 = vector.broadcast %cst_27 : f32 to vector<8x128xf32>
    %103 = arith.addf %102, %101 : vector<8x128xf32>
    %104 = arith.divf %102, %103 : vector<8x128xf32>
    %105 = arith.mulf %96, %71 : vector<8x128xf32>
    %106 = arith.mulf %90, %98 : vector<8x128xf32>
    %107 = arith.addf %105, %106 : vector<8x128xf32>
    %108 = math.tanh %107 : vector<8x128xf32>
    %109 = arith.mulf %104, %108 : vector<8x128xf32>
    %110 = arith.index_cast %c2_i32 : i32 to index
    %c0_28 = arith.constant 0 : index
    %c0_29 = arith.constant 0 : index
    %111 = vector.load %arg5[%110, %c0_28, %c0_29] : memref<8x8x128xf32, #tpu.memory_space<vmem>>, vector<1x8x128xf32>
    %112 = vector.shape_cast %111 : vector<1x8x128xf32> to vector<8x128xf32>
    %113 = vector.shape_cast %109 : vector<8x128xf32> to vector<1x8x128xf32>
    tpu.vector_store %arg5[%110, %c0_28, %c0_29], %113 {strides = array<i32>} : memref<8x8x128xf32, #tpu.memory_space<vmem>>, vector<1x8x128xf32>,
    %c3_i32 = arith.constant 3 : i32
    %114 = arith.index_cast %c3_i32 : i32 to index
    %c0_30 = arith.constant 0 : index
    %c0_31 = arith.constant 0 : index
    %115 = vector.load %arg1[%114, %c0_30, %c0_31] : memref<8x8x512xbf16, #tpu.memory_space<vmem>>, vector<1x8x512xbf16>
    %116 = vector.shape_cast %115 : vector<1x8x512xbf16> to vector<8x512xbf16>
    %117 = arith.extf %116 : vector<8x512xbf16> to vector<8x512xf32>
    %118 = arith.truncf %109 : vector<8x128xf32> to vector<8x128xbf16>
    %cst_32 = arith.constant dense<0.000000e+00> : vector<8x512xf32>
    %119 = tpu.matmul %118, %3, %cst_32 {dimension_numbers = #tpu.dot_dimension_numbers<[1], [0], [0], [1], [0, 0, 1, 1], [], []>} : vector<8x128xbf16>, vector<128x512xbf16>, vector<8x512xf32> -> vector<8x512xf32>
    %120 = arith.addf %117, %119 : vector<8x512xf32>
    %121 = vector.extract_strided_slice %120 {offsets = [0, 0], sizes = [8, 128], strides = [1, 1]} : vector<8x512xf32> to vector<8x128xf32>
    %122 = arith.negf %121 : vector<8x128xf32>
    %123 = math.exp %122 : vector<8x128xf32>
    %cst_33 = arith.constant 1.000000e+00 : f32
    %124 = vector.broadcast %cst_33 : f32 to vector<8x128xf32>
    %125 = arith.addf %124, %123 : vector<8x128xf32>
    %126 = arith.divf %124, %125 : vector<8x128xf32>
    %127 = vector.extract_strided_slice %120 {offsets = [0, 128], sizes = [8, 128], strides = [1, 1]} : vector<8x512xf32> to vector<8x128xf32>
    %128 = arith.negf %127 : vector<8x128xf32>
    %129 = math.exp %128 : vector<8x128xf32>
    %cst_34 = arith.constant 1.000000e+00 : f32
    %130 = vector.broadcast %cst_34 : f32 to vector<8x128xf32>
    %131 = arith.addf %130, %129 : vector<8x128xf32>
    %132 = arith.divf %130, %131 : vector<8x128xf32>
    %133 = vector.extract_strided_slice %120 {offsets = [0, 256], sizes = [8, 128], strides = [1, 1]} : vector<8x512xf32> to vector<8x128xf32>
    %134 = math.tanh %133 : vector<8x128xf32>
    %135 = vector.extract_strided_slice %120 {offsets = [0, 384], sizes = [8, 128], strides = [1, 1]} : vector<8x512xf32> to vector<8x128xf32>
    %136 = arith.negf %135 : vector<8x128xf32>
    %137 = math.exp %136 : vector<8x128xf32>
    %cst_35 = arith.constant 1.000000e+00 : f32
    %138 = vector.broadcast %cst_35 : f32 to vector<8x128xf32>
    %139 = arith.addf %138, %137 : vector<8x128xf32>
    %140 = arith.divf %138, %139 : vector<8x128xf32>
    %141 = arith.mulf %132, %107 : vector<8x128xf32>
    %142 = arith.mulf %126, %134 : vector<8x128xf32>
    %143 = arith.addf %141, %142 : vector<8x128xf32>
    %144 = math.tanh %143 : vector<8x128xf32>
    %145 = arith.mulf %140, %144 : vector<8x128xf32>
    %146 = arith.index_cast %c3_i32 : i32 to index
    %c0_36 = arith.constant 0 : index
    %c0_37 = arith.constant 0 : index
    %147 = vector.load %arg5[%146, %c0_36, %c0_37] : memref<8x8x128xf32, #tpu.memory_space<vmem>>, vector<1x8x128xf32>
    %148 = vector.shape_cast %147 : vector<1x8x128xf32> to vector<8x128xf32>
    %149 = vector.shape_cast %145 : vector<8x128xf32> to vector<1x8x128xf32>
    tpu.vector_store %arg5[%146, %c0_36, %c0_37], %149 {strides = array<i32>} : memref<8x8x128xf32, #tpu.memory_space<vmem>>, vector<1x8x128xf32>,
    %c4_i32 = arith.constant 4 : i32
    %150 = arith.index_cast %c4_i32 : i32 to index
    %c0_38 = arith.constant 0 : index
    %c0_39 = arith.constant 0 : index
    %151 = vector.load %arg1[%150, %c0_38, %c0_39] : memref<8x8x512xbf16, #tpu.memory_space<vmem>>, vector<1x8x512xbf16>
    %152 = vector.shape_cast %151 : vector<1x8x512xbf16> to vector<8x512xbf16>
    %153 = arith.extf %152 : vector<8x512xbf16> to vector<8x512xf32>
    %154 = arith.truncf %145 : vector<8x128xf32> to vector<8x128xbf16>
    %cst_40 = arith.constant dense<0.000000e+00> : vector<8x512xf32>
    %155 = tpu.matmul %154, %3, %cst_40 {dimension_numbers = #tpu.dot_dimension_numbers<[1], [0], [0], [1], [0, 0, 1, 1], [], []>} : vector<8x128xbf16>, vector<128x512xbf16>, vector<8x512xf32> -> vector<8x512xf32>
    %156 = arith.addf %153, %155 : vector<8x512xf32>
    %157 = vector.extract_strided_slice %156 {offsets = [0, 0], sizes = [8, 128], strides = [1, 1]} : vector<8x512xf32> to vector<8x128xf32>
    %158 = arith.negf %157 : vector<8x128xf32>
    %159 = math.exp %158 : vector<8x128xf32>
    %cst_41 = arith.constant 1.000000e+00 : f32
    %160 = vector.broadcast %cst_41 : f32 to vector<8x128xf32>
    %161 = arith.addf %160, %159 : vector<8x128xf32>
    %162 = arith.divf %160, %161 : vector<8x128xf32>
    %163 = vector.extract_strided_slice %156 {offsets = [0, 128], sizes = [8, 128], strides = [1, 1]} : vector<8x512xf32> to vector<8x128xf32>
    %164 = arith.negf %163 : vector<8x128xf32>
    %165 = math.exp %164 : vector<8x128xf32>
    %cst_42 = arith.constant 1.000000e+00 : f32
    %166 = vector.broadcast %cst_42 : f32 to vector<8x128xf32>
    %167 = arith.addf %166, %165 : vector<8x128xf32>
    %168 = arith.divf %166, %167 : vector<8x128xf32>
    %169 = vector.extract_strided_slice %156 {offsets = [0, 256], sizes = [8, 128], strides = [1, 1]} : vector<8x512xf32> to vector<8x128xf32>
    %170 = math.tanh %169 : vector<8x128xf32>
    %171 = vector.extract_strided_slice %156 {offsets = [0, 384], sizes = [8, 128], strides = [1, 1]} : vector<8x512xf32> to vector<8x128xf32>
    %172 = arith.negf %171 : vector<8x128xf32>
    %173 = math.exp %172 : vector<8x128xf32>
    %cst_43 = arith.constant 1.000000e+00 : f32
    %174 = vector.broadcast %cst_43 : f32 to vector<8x128xf32>
    %175 = arith.addf %174, %173 : vector<8x128xf32>
    %176 = arith.divf %174, %175 : vector<8x128xf32>
    %177 = arith.mulf %168, %143 : vector<8x128xf32>
    %178 = arith.mulf %162, %170 : vector<8x128xf32>
    %179 = arith.addf %177, %178 : vector<8x128xf32>
    %180 = math.tanh %179 : vector<8x128xf32>
    %181 = arith.mulf %176, %180 : vector<8x128xf32>
    %182 = arith.index_cast %c4_i32 : i32 to index
    %c0_44 = arith.constant 0 : index
    %c0_45 = arith.constant 0 : index
    %183 = vector.load %arg5[%182, %c0_44, %c0_45] : memref<8x8x128xf32, #tpu.memory_space<vmem>>, vector<1x8x128xf32>
    %184 = vector.shape_cast %183 : vector<1x8x128xf32> to vector<8x128xf32>
    %185 = vector.shape_cast %181 : vector<8x128xf32> to vector<1x8x128xf32>
    tpu.vector_store %arg5[%182, %c0_44, %c0_45], %185 {strides = array<i32>} : memref<8x8x128xf32, #tpu.memory_space<vmem>>, vector<1x8x128xf32>,
    %c5_i32 = arith.constant 5 : i32
    %186 = arith.index_cast %c5_i32 : i32 to index
    %c0_46 = arith.constant 0 : index
    %c0_47 = arith.constant 0 : index
    %187 = vector.load %arg1[%186, %c0_46, %c0_47] : memref<8x8x512xbf16, #tpu.memory_space<vmem>>, vector<1x8x512xbf16>
    %188 = vector.shape_cast %187 : vector<1x8x512xbf16> to vector<8x512xbf16>
    %189 = arith.extf %188 : vector<8x512xbf16> to vector<8x512xf32>
    %190 = arith.truncf %181 : vector<8x128xf32> to vector<8x128xbf16>
    %cst_48 = arith.constant dense<0.000000e+00> : vector<8x512xf32>
    %191 = tpu.matmul %190, %3, %cst_48 {dimension_numbers = #tpu.dot_dimension_numbers<[1], [0], [0], [1], [0, 0, 1, 1], [], []>} : vector<8x128xbf16>, vector<128x512xbf16>, vector<8x512xf32> -> vector<8x512xf32>
    %192 = arith.addf %189, %191 : vector<8x512xf32>
    %193 = vector.extract_strided_slice %192 {offsets = [0, 0], sizes = [8, 128], strides = [1, 1]} : vector<8x512xf32> to vector<8x128xf32>
    %194 = arith.negf %193 : vector<8x128xf32>
    %195 = math.exp %194 : vector<8x128xf32>
    %cst_49 = arith.constant 1.000000e+00 : f32
    %196 = vector.broadcast %cst_49 : f32 to vector<8x128xf32>
    %197 = arith.addf %196, %195 : vector<8x128xf32>
    %198 = arith.divf %196, %197 : vector<8x128xf32>
    %199 = vector.extract_strided_slice %192 {offsets = [0, 128], sizes = [8, 128], strides = [1, 1]} : vector<8x512xf32> to vector<8x128xf32>
    %200 = arith.negf %199 : vector<8x128xf32>
    %201 = math.exp %200 : vector<8x128xf32>
    %cst_50 = arith.constant 1.000000e+00 : f32
    %202 = vector.broadcast %cst_50 : f32 to vector<8x128xf32>
    %203 = arith.addf %202, %201 : vector<8x128xf32>
    %204 = arith.divf %202, %203 : vector<8x128xf32>
    %205 = vector.extract_strided_slice %192 {offsets = [0, 256], sizes = [8, 128], strides = [1, 1]} : vector<8x512xf32> to vector<8x128xf32>
    %206 = math.tanh %205 : vector<8x128xf32>
    %207 = vector.extract_strided_slice %192 {offsets = [0, 384], sizes = [8, 128], strides = [1, 1]} : vector<8x512xf32> to vector<8x128xf32>
    %208 = arith.negf %207 : vector<8x128xf32>
    %209 = math.exp %208 : vector<8x128xf32>
    %cst_51 = arith.constant 1.000000e+00 : f32
    %210 = vector.broadcast %cst_51 : f32 to vector<8x128xf32>
    %211 = arith.addf %210, %209 : vector<8x128xf32>
    %212 = arith.divf %210, %211 : vector<8x128xf32>
    %213 = arith.mulf %204, %179 : vector<8x128xf32>
    %214 = arith.mulf %198, %206 : vector<8x128xf32>
    %215 = arith.addf %213, %214 : vector<8x128xf32>
    %216 = math.tanh %215 : vector<8x128xf32>
    %217 = arith.mulf %212, %216 : vector<8x128xf32>
    %218 = arith.index_cast %c5_i32 : i32 to index
    %c0_52 = arith.constant 0 : index
    %c0_53 = arith.constant 0 : index
    %219 = vector.load %arg5[%218, %c0_52, %c0_53] : memref<8x8x128xf32, #tpu.memory_space<vmem>>, vector<1x8x128xf32>
    %220 = vector.shape_cast %219 : vector<1x8x128xf32> to vector<8x128xf32>
    %221 = vector.shape_cast %217 : vector<8x128xf32> to vector<1x8x128xf32>
    tpu.vector_store %arg5[%218, %c0_52, %c0_53], %221 {strides = array<i32>} : memref<8x8x128xf32, #tpu.memory_space<vmem>>, vector<1x8x128xf32>,
    %c6_i32 = arith.constant 6 : i32
    %222 = arith.index_cast %c6_i32 : i32 to index
    %c0_54 = arith.constant 0 : index
    %c0_55 = arith.constant 0 : index
    %223 = vector.load %arg1[%222, %c0_54, %c0_55] : memref<8x8x512xbf16, #tpu.memory_space<vmem>>, vector<1x8x512xbf16>
    %224 = vector.shape_cast %223 : vector<1x8x512xbf16> to vector<8x512xbf16>
    %225 = arith.extf %224 : vector<8x512xbf16> to vector<8x512xf32>
    %226 = arith.truncf %217 : vector<8x128xf32> to vector<8x128xbf16>
    %cst_56 = arith.constant dense<0.000000e+00> : vector<8x512xf32>
    %227 = tpu.matmul %226, %3, %cst_56 {dimension_numbers = #tpu.dot_dimension_numbers<[1], [0], [0], [1], [0, 0, 1, 1], [], []>} : vector<8x128xbf16>, vector<128x512xbf16>, vector<8x512xf32> -> vector<8x512xf32>
    %228 = arith.addf %225, %227 : vector<8x512xf32>
    %229 = vector.extract_strided_slice %228 {offsets = [0, 0], sizes = [8, 128], strides = [1, 1]} : vector<8x512xf32> to vector<8x128xf32>
    %230 = arith.negf %229 : vector<8x128xf32>
    %231 = math.exp %230 : vector<8x128xf32>
    %cst_57 = arith.constant 1.000000e+00 : f32
    %232 = vector.broadcast %cst_57 : f32 to vector<8x128xf32>
    %233 = arith.addf %232, %231 : vector<8x128xf32>
    %234 = arith.divf %232, %233 : vector<8x128xf32>
    %235 = vector.extract_strided_slice %228 {offsets = [0, 128], sizes = [8, 128], strides = [1, 1]} : vector<8x512xf32> to vector<8x128xf32>
    %236 = arith.negf %235 : vector<8x128xf32>
    %237 = math.exp %236 : vector<8x128xf32>
    %cst_58 = arith.constant 1.000000e+00 : f32
    %238 = vector.broadcast %cst_58 : f32 to vector<8x128xf32>
    %239 = arith.addf %238, %237 : vector<8x128xf32>
    %240 = arith.divf %238, %239 : vector<8x128xf32>
    %241 = vector.extract_strided_slice %228 {offsets = [0, 256], sizes = [8, 128], strides = [1, 1]} : vector<8x512xf32> to vector<8x128xf32>
    %242 = math.tanh %241 : vector<8x128xf32>
    %243 = vector.extract_strided_slice %228 {offsets = [0, 384], sizes = [8, 128], strides = [1, 1]} : vector<8x512xf32> to vector<8x128xf32>
    %244 = arith.negf %243 : vector<8x128xf32>
    %245 = math.exp %244 : vector<8x128xf32>
    %cst_59 = arith.constant 1.000000e+00 : f32
    %246 = vector.broadcast %cst_59 : f32 to vector<8x128xf32>
    %247 = arith.addf %246, %245 : vector<8x128xf32>
    %248 = arith.divf %246, %247 : vector<8x128xf32>
    %249 = arith.mulf %240, %215 : vector<8x128xf32>
    %250 = arith.mulf %234, %242 : vector<8x128xf32>
    %251 = arith.addf %249, %250 : vector<8x128xf32>
    %252 = math.tanh %251 : vector<8x128xf32>
    %253 = arith.mulf %248, %252 : vector<8x128xf32>
    %254 = arith.index_cast %c6_i32 : i32 to index
    %c0_60 = arith.constant 0 : index
    %c0_61 = arith.constant 0 : index
    %255 = vector.load %arg5[%254, %c0_60, %c0_61] : memref<8x8x128xf32, #tpu.memory_space<vmem>>, vector<1x8x128xf32>
    %256 = vector.shape_cast %255 : vector<1x8x128xf32> to vector<8x128xf32>
    %257 = vector.shape_cast %253 : vector<8x128xf32> to vector<1x8x128xf32>
    tpu.vector_store %arg5[%254, %c0_60, %c0_61], %257 {strides = array<i32>} : memref<8x8x128xf32, #tpu.memory_space<vmem>>, vector<1x8x128xf32>,
    %c7_i32 = arith.constant 7 : i32
    %258 = arith.index_cast %c7_i32 : i32 to index
    %c0_62 = arith.constant 0 : index
    %c0_63 = arith.constant 0 : index
    %259 = vector.load %arg1[%258, %c0_62, %c0_63] : memref<8x8x512xbf16, #tpu.memory_space<vmem>>, vector<1x8x512xbf16>
    %260 = vector.shape_cast %259 : vector<1x8x512xbf16> to vector<8x512xbf16>
    %261 = arith.extf %260 : vector<8x512xbf16> to vector<8x512xf32>
    %262 = arith.truncf %253 : vector<8x128xf32> to vector<8x128xbf16>
    %cst_64 = arith.constant dense<0.000000e+00> : vector<8x512xf32>
    %263 = tpu.matmul %262, %3, %cst_64 {dimension_numbers = #tpu.dot_dimension_numbers<[1], [0], [0], [1], [0, 0, 1, 1], [], []>} : vector<8x128xbf16>, vector<128x512xbf16>, vector<8x512xf32> -> vector<8x512xf32>
    %264 = arith.addf %261, %263 : vector<8x512xf32>
    %265 = vector.extract_strided_slice %264 {offsets = [0, 0], sizes = [8, 128], strides = [1, 1]} : vector<8x512xf32> to vector<8x128xf32>
    %266 = arith.negf %265 : vector<8x128xf32>
    %267 = math.exp %266 : vector<8x128xf32>
    %cst_65 = arith.constant 1.000000e+00 : f32
    %268 = vector.broadcast %cst_65 : f32 to vector<8x128xf32>
    %269 = arith.addf %268, %267 : vector<8x128xf32>
    %270 = arith.divf %268, %269 : vector<8x128xf32>
    %271 = vector.extract_strided_slice %264 {offsets = [0, 128], sizes = [8, 128], strides = [1, 1]} : vector<8x512xf32> to vector<8x128xf32>
    %272 = arith.negf %271 : vector<8x128xf32>
    %273 = math.exp %272 : vector<8x128xf32>
    %cst_66 = arith.constant 1.000000e+00 : f32
    %274 = vector.broadcast %cst_66 : f32 to vector<8x128xf32>
    %275 = arith.addf %274, %273 : vector<8x128xf32>
    %276 = arith.divf %274, %275 : vector<8x128xf32>
    %277 = vector.extract_strided_slice %264 {offsets = [0, 256], sizes = [8, 128], strides = [1, 1]} : vector<8x512xf32> to vector<8x128xf32>
    %278 = math.tanh %277 : vector<8x128xf32>
    %279 = vector.extract_strided_slice %264 {offsets = [0, 384], sizes = [8, 128], strides = [1, 1]} : vector<8x512xf32> to vector<8x128xf32>
    %280 = arith.negf %279 : vector<8x128xf32>
    %281 = math.exp %280 : vector<8x128xf32>
    %cst_67 = arith.constant 1.000000e+00 : f32
    %282 = vector.broadcast %cst_67 : f32 to vector<8x128xf32>
    %283 = arith.addf %282, %281 : vector<8x128xf32>
    %284 = arith.divf %282, %283 : vector<8x128xf32>
    %285 = arith.mulf %276, %251 : vector<8x128xf32>
    %286 = arith.mulf %270, %278 : vector<8x128xf32>
    %287 = arith.addf %285, %286 : vector<8x128xf32>
    %288 = math.tanh %287 : vector<8x128xf32>
    %289 = arith.mulf %284, %288 : vector<8x128xf32>
    %290 = arith.index_cast %c7_i32 : i32 to index
    %c0_68 = arith.constant 0 : index
    %c0_69 = arith.constant 0 : index
    %291 = vector.load %arg5[%290, %c0_68, %c0_69] : memref<8x8x128xf32, #tpu.memory_space<vmem>>, vector<1x8x128xf32>
    %292 = vector.shape_cast %291 : vector<1x8x128xf32> to vector<8x128xf32>
    %293 = vector.shape_cast %289 : vector<8x128xf32> to vector<1x8x128xf32>
    tpu.vector_store %arg5[%290, %c0_68, %c0_69], %293 {strides = array<i32>} : memref<8x8x128xf32, #tpu.memory_space<vmem>>, vector<1x8x128xf32>,
    %c8_i32 = arith.constant 8 : i32
    %c0_70 = arith.constant 0 : index
    %c0_71 = arith.constant 0 : index
    %294 = vector.load %arg9[%c0_70, %c0_71] : memref<8x128xf32, #tpu.memory_space<vmem>>, vector<8x128xf32>
    tpu.vector_store %arg9[%c0_70, %c0_71], %289 {strides = array<i32>} : memref<8x128xf32, #tpu.memory_space<vmem>>, vector<8x128xf32>,
    %c0_72 = arith.constant 0 : index
    %c0_73 = arith.constant 0 : index
    %295 = vector.load %arg10[%c0_72, %c0_73] : memref<8x128xf32, #tpu.memory_space<vmem>>, vector<8x128xf32>
    tpu.vector_store %arg10[%c0_72, %c0_73], %287 {strides = array<i32>} : memref<8x128xf32, #tpu.memory_space<vmem>>, vector<8x128xf32>,
    %c0_i32_74 = arith.constant 0 : i32
    %296 = arith.cmpi eq, %arg0, %c0_i32_74 : i32
    %297 = arith.extui %296 : i1 to i32
    %c0_i32_75 = arith.constant 0 : i32
    %298 = arith.cmpi ne, %297, %c0_i32_75 : i32
    scf.if %298 {
      %c0_76 = arith.constant 0 : index
      %c0_77 = arith.constant 0 : index
      %299 = vector.load %arg6[%c0_76, %c0_77] : memref<8x128xf32, #tpu.memory_space<vmem>>, vector<8x128xf32>
      tpu.vector_store %arg6[%c0_76, %c0_77], %289 {strides = array<i32>} : memref<8x128xf32, #tpu.memory_space<vmem>>, vector<8x128xf32>,
      %c0_78 = arith.constant 0 : index
      %c0_79 = arith.constant 0 : index
      %300 = vector.load %arg7[%c0_78, %c0_79] : memref<8x128xf32, #tpu.memory_space<vmem>>, vector<8x128xf32>
      tpu.vector_store %arg7[%c0_78, %c0_79], %287 {strides = array<i32>} : memref<8x128xf32, #tpu.memory_space<vmem>>, vector<8x128xf32>,
    } else {
    }
    return
  }
  func.func @transform_0(%arg0: i32) -> (i32, i32, i32) {
    %c0_i32 = arith.constant 0 : i32
    %c0_i32_0 = arith.constant 0 : i32
    %c0_i32_1 = arith.constant 0 : i32
    return %arg0, %c0_i32, %c0_i32_0 : i32, i32, i32
  }
  func.func @transform_1(%arg0: i32) -> (i32, i32) {
    %c0_i32 = arith.constant 0 : i32
    %c0_i32_0 = arith.constant 0 : i32
    %c0_i32_1 = arith.constant 0 : i32
    return %c0_i32, %c0_i32_0 : i32, i32
  }
  func.func @transform_2(%arg0: i32) -> (i32, i32) {
    %c0_i32 = arith.constant 0 : i32
    %c0_i32_0 = arith.constant 0 : i32
    %c0_i32_1 = arith.constant 0 : i32
    return %c0_i32, %c0_i32_0 : i32, i32
  }
  func.func @transform_4(%arg0: i32) -> (i32, i32, i32) {
    %c0_i32 = arith.constant 0 : i32
    %c0_i32_0 = arith.constant 0 : i32
    %c0_i32_1 = arith.constant 0 : i32
    return %arg0, %c0_i32, %c0_i32_0 : i32, i32, i32
  }
  func.func @transform_5(%arg0: i32) -> (i32, i32) {
    %c0_i32 = arith.constant 0 : i32
    %c0_i32_0 = arith.constant 0 : i32
    %c0_i32_1 = arith.constant 0 : i32
    return %c0_i32, %c0_i32_0 : i32, i32
  }
  func.func @transform_6(%arg0: i32) -> (i32, i32) {
    %c0_i32 = arith.constant 0 : i32
    %c0_i32_0 = arith.constant 0 : i32
    %c0_i32_1 = arith.constant 0 : i32
    return %c0_i32, %c0_i32_0 : i32, i32
  }
}

module attributes {stable_mosaic.version = 11 : i64} {
  func.func @_matmul_bias_kernel(%arg0: i32, %arg1: i32, %arg2: memref<16x32xbf16, #tpu.memory_space<vmem>>, %arg3: memref<32x128xbf16, #tpu.memory_space<vmem>>, %arg4: memref<1x128xf32, #tpu.memory_space<vmem>>, %arg5: memref<16x128xf32, #tpu.memory_space<vmem>>) attributes {dimension_semantics = [#tpu.dimension_semantics<parallel>, #tpu.dimension_semantics<parallel>], iteration_bounds = array<i64: 1, 1>, scalar_prefetch = 0 : i64, scratch_operands = 0 : i64, tpu.core_type = #tpu.core_type<tc>, window_params = [{transform_indices = @transform_0, window_bounds = array<i64: 16, 32>}, {transform_indices = @transform_1, window_bounds = array<i64: 32, 128>}, {transform_indices = @transform_2, window_bounds = array<i64: 1, 128>}, {transform_indices = @transform_3, window_bounds = array<i64: 16, 128>}]} {
    %c0 = arith.constant 0 : index
    %c0_0 = arith.constant 0 : index
    %0 = vector.load %arg2[%c0, %c0_0] : memref<16x32xbf16, #tpu.memory_space<vmem>>, vector<16x32xbf16>
    %c0_1 = arith.constant 0 : index
    %c0_2 = arith.constant 0 : index
    %1 = vector.load %arg3[%c0_1, %c0_2] : memref<32x128xbf16, #tpu.memory_space<vmem>>, vector<32x128xbf16>
    %cst = arith.constant dense<0.000000e+00> : vector<16x128xf32>
    %2 = tpu.matmul %0, %1, %cst {dimension_numbers = #tpu.dot_dimension_numbers<[1], [0], [0], [1], [0, 0, 1, 1], [], []>} : vector<16x32xbf16>, vector<32x128xbf16>, vector<16x128xf32> -> vector<16x128xf32>
    %c0_3 = arith.constant 0 : index
    %c0_4 = arith.constant 0 : index
    %3 = vector.load %arg4[%c0_3, %c0_4] : memref<1x128xf32, #tpu.memory_space<vmem>>, vector<1x128xf32>
    %4 = vector.broadcast %3 : vector<1x128xf32> to vector<16x128xf32>
    %5 = arith.addf %2, %4 : vector<16x128xf32>
    %c0_5 = arith.constant 0 : index
    %c0_6 = arith.constant 0 : index
    %6 = vector.load %arg5[%c0_5, %c0_6] : memref<16x128xf32, #tpu.memory_space<vmem>>, vector<16x128xf32>
    tpu.vector_store %arg5[%c0_5, %c0_6], %5 {strides = array<i32>} : memref<16x128xf32, #tpu.memory_space<vmem>>, vector<16x128xf32>,
    return
  }
  func.func @transform_0(%arg0: i32, %arg1: i32) -> (i32, i32) {
    %c0_i32 = arith.constant 0 : i32
    %c0_i32_0 = arith.constant 0 : i32
    return %arg1, %c0_i32 : i32, i32
  }
  func.func @transform_1(%arg0: i32, %arg1: i32) -> (i32, i32) {
    %c0_i32 = arith.constant 0 : i32
    %c0_i32_0 = arith.constant 0 : i32
    return %c0_i32, %arg0 : i32, i32
  }
  func.func @transform_2(%arg0: i32, %arg1: i32) -> (i32, i32) {
    %c0_i32 = arith.constant 0 : i32
    %c0_i32_0 = arith.constant 0 : i32
    return %c0_i32, %arg0 : i32, i32
  }
  func.func @transform_3(%arg0: i32, %arg1: i32) -> (i32, i32) {
    %c0_i32 = arith.constant 0 : i32
    return %arg1, %arg0 : i32, i32
  }
}

</mosaic_0001>

<llo_original>
// kernel: model_forward.5
$region0: #{model_forward.5}
  #allocation0 [shape = 'u32[]', space=smem, size = 0x4, offset = 0x4, fixed_abs, tag = 'smem constant byte address 0x4 - core index']
  #allocation1 [shape = 'u32[144,128]{1,0:T(1,128)}', space=vmem, size = 0x12000, scoped, tag = 'internal scratch']
  %s0 = inlined_call_operand.hbm [shape: bf16[64,32], index: 0, kind: input, shape index: {}]
  %s1 = inlined_call_operand.hbm [shape: bf16[32,512], index: 1, kind: input, shape index: {}]
  %s2 = inlined_call_operand.hbm [shape: f32[1,512], index: 2, kind: input, shape index: {}]
  %s3 = inlined_call_operand.hbm [shape: bf16[64,512], index: 3, kind: output, shape index: {}]
  %s4 = sld [smem:[#allocation0]]
  $region34: #{model_forward.5} parent=0
    _
  %s6 = ssub.s32 1, %s4
  %s7 = scalar_select 0, %s6, %s4
  $region1: #{model_forward.5} parent=0
    #allocation2 [shape = 'u8[16384]{0}', space=vmem, size = 0x4000, scoped, tag = 'input window, operand 0, single buffered']
    #allocation3 [shape = 's32[1]{0}', space=sflag, size = 0x4, scoped, tag = 'scoped memory for model_forward.5']
    #allocation4 [shape = 's32[1]{0}', space=sflag, size = 0x4, scoped, tag = 'scoped memory for model_forward.5']
    #allocation5 [shape = 'u8[32768]{0}', space=vmem, size = 0x8000, scoped, tag = 'input window, operand 1, single buffered']
    #allocation6 [shape = 's32[1]{0}', space=sflag, size = 0x4, scoped, tag = 'scoped memory for model_forward.5']
    #allocation7 [shape = 'u8[2048]{0}', space=vmem, size = 0x800, scoped, tag = 'input window, operand 2, single buffered']
    #allocation8 [shape = 'u8[65536]{0}', space=vmem, size = 0x10000, scoped, tag = 'output window, operand 0, single buffered']
    %8 = vsyncpa [#allocation3], 0
    %9 = vsyncpa [#allocation6], 0
    %10 = vsyncpa [#allocation4], 0
    // Predicated region
    $region2: #{model_forward.5} parent=1 // pred_check
      _
    $region3: #{model_forward.5} parent=1 // pred_check_branch
      %12 = sbr.rel (0) target = $region5
    $region4: #{model_forward.5} parent=1 // pred_region
      %s14 = ssub.s32 512, 512
      %15 = vsyncadd [#allocation3], %s14
      %s16 = sshll.u32 [#allocation2], 4
      %s17 = int_to_ptr.vmem [resolvable:$true] %s16
      %22 = dma.hbm_to_vmem [thread:$0]  %s0, 512, %s17, [#allocation3], 64, 64, 4
    $region5: #{model_forward.5} parent=1 // pred_fallthru
      _
    // Predicated region
    $region6: #{model_forward.5} parent=1 // pred_check
      _
    $region7: #{model_forward.5} parent=1 // pred_check_branch
      %24 = sbr.rel (0) target = $region9
    $region8: #{model_forward.5} parent=1 // pred_region
      %s26 = ssub.s32 1024, 1024
      %27 = vsyncadd [#allocation6], %s26
      %s28 = sshll.u32 [#allocation5], 4
      %s29 = int_to_ptr.vmem [resolvable:$true] %s28
      %34 = dma.hbm_to_vmem [thread:$0]  %s1, 1024, %s29, [#allocation6], 256, 256, 16
    $region9: #{model_forward.5} parent=1 // pred_fallthru
      _
    // Predicated region
    $region10: #{model_forward.5} parent=1 // pred_check
      _
    $region11: #{model_forward.5} parent=1 // pred_check_branch
      %36 = sbr.rel (0) target = $region13
    $region12: #{model_forward.5} parent=1 // pred_region
      %s38 = ssub.s32 64, 64
      %39 = vsyncadd [#allocation6], %s38
      %s41 = sshll.u32 [#allocation7], 4
      %s42 = int_to_ptr.vmem [resolvable:$true] %s41
      %44 = dma.hbm_to_vmem [thread:$0]  %s2, 64, %s42, [#allocation6]
    $region13: #{model_forward.5} parent=1 // pred_fallthru
      _
    // Predicated region
    $region14: #{model_forward.5} parent=1 // pred_check
      _
    $region15: #{model_forward.5} parent=1 // pred_check_branch
      %46 = sbr.rel (0) target = $region17
    $region16: #{model_forward.5} parent=1 // pred_region
      %47 = dma.done [#allocation3], 512
    $region17: #{model_forward.5} parent=1 // pred_fallthru
      _
    // Predicated region
    $region18: #{model_forward.5} parent=1 // pred_check
      _
    $region19: #{model_forward.5} parent=1 // pred_check_branch
      %49 = sbr.rel (0) target = $region21
    $region20: #{model_forward.5} parent=1 // pred_region
      %50 = dma.done [#allocation6], 1024
    $region21: #{model_forward.5} parent=1 // pred_fallthru
      _
    // Predicated region
    $region22: #{model_forward.5} parent=1 // pred_check
      _
    $region23: #{model_forward.5} parent=1 // pred_check_branch
      %52 = sbr.rel (0) target = $region25
    $region24: #{model_forward.5} parent=1 // pred_region
      %53 = dma.done [#allocation6], 64
    $region25: #{model_forward.5} parent=1 // pred_fallthru
      _
    %v55 = vld [vmem:[#allocation2] sm:$0xf]
    %v56 = vld [vmem:[#allocation2 + $0x4] sm:$0xf]
    %v57 = vld [vmem:[#allocation2 + $0x8] sm:$0xf]
    %v58 = vld [vmem:[#allocation2 + $0xc] sm:$0xf]
    %v59 = vld [vmem:[#allocation2 + $0x10] sm:$0xf]
    %v60 = vld [vmem:[#allocation2 + $0x14] sm:$0xf]
    %v61 = vld [vmem:[#allocation2 + $0x18] sm:$0xf]
    %v62 = vld [vmem:[#allocation2 + $0x1c] sm:$0xf]
    %v63 = vld [vmem:[#allocation5] sm:$0xff]
    %v64 = vld [vmem:[#allocation5 + $0x8] sm:$0xff]
    %v65 = vld [vmem:[#allocation5 + $0x10] sm:$0xff]
    %v66 = vld [vmem:[#allocation5 + $0x18] sm:$0xff]
    %v67 = vld [vmem:[#allocation5 + $0x20] sm:$0xff]
    %v68 = vld [vmem:[#allocation5 + $0x28] sm:$0xff]
    %v69 = vld [vmem:[#allocation5 + $0x30] sm:$0xff]
    %v70 = vld [vmem:[#allocation5 + $0x38] sm:$0xff]
    %v71 = vld [vmem:[#allocation7] sm:$0xf]
    %v73 = vlaneseq
    %v74 = vshrl.u32 %v73, 7
    %v75 = vsub.s32 0, %v74
    %v76 = vrot.slane %v71, %v75
    %v77 = vlaneseq
    %v78 = vshrl.u32 %v77, 7
    %v79 = vsub.s32 1, %v78
    %v80 = vrot.slane %v71, %v79
    %v81 = vlaneseq
    %v82 = vshrl.u32 %v81, 7
    %v83 = vsub.s32 2, %v82
    %v84 = vrot.slane %v71, %v83
    %v85 = vlaneseq
    %v86 = vshrl.u32 %v85, 7
    %v87 = vsub.s32 3, %v86
    %v88 = vrot.slane %v71, %v87
    %v101 = vunpack.c.l.b16 %v55
    %v102 = vunpack.c.l.b16 %v56
    %v103 = vunpack.c.l.b16 %v57
    %v104 = vunpack.c.l.b16 %v58
    %v105 = vunpack.c.l.b16 %v59
    %v106 = vunpack.c.l.b16 %v60
    %v107 = vunpack.c.l.b16 %v61
    %v108 = vunpack.c.l.b16 %v62
    %v109 = vpack.c.b16 %v102, %v101
    %v110 = vpack.c.b16 %v104, %v103
    %v111 = vpack.c.b16 %v106, %v105
    %v112 = vpack.c.b16 %v108, %v107
    %v121 = vunpack.c.l.b16 %v63
    %v122 = vunpack.c.h.b16 %v63
    %v123 = vunpack.c.l.b16 %v64
    %v124 = vunpack.c.h.b16 %v64
    %v125 = vunpack.c.l.b16 %v65
    %v126 = vunpack.c.h.b16 %v65
    %v127 = vunpack.c.l.b16 %v66
    %v128 = vunpack.c.h.b16 %v66
    %v129 = vunpack.c.l.b16 %v67
    %v130 = vunpack.c.h.b16 %v67
    %v131 = vunpack.c.l.b16 %v68
    %v132 = vunpack.c.h.b16 %v68
    %v133 = vunpack.c.l.b16 %v69
    %v134 = vunpack.c.h.b16 %v69
    %v135 = vunpack.c.l.b16 %v70
    %v136 = vunpack.c.h.b16 %v70
    %v137 = vpack.c.b16 %v125, %v121
    %v138 = vpack.c.b16 %v126, %v122
    %v139 = vpack.c.b16 %v127, %v123
    %v140 = vpack.c.b16 %v128, %v124
    %v141 = vpack.c.b16 %v133, %v129
    %v142 = vpack.c.b16 %v134, %v130
    %v143 = vpack.c.b16 %v135, %v131
    %v144 = vpack.c.b16 %v136, %v132
    %vm153 = vcmask 261120
    %v155 = vsel %vm153, %v109, 0
    %v158 = vsel %vm153, %v110, 0
    %v161 = vsel %vm153, %v111, 0
    %v164 = vsel %vm153, %v112, 0
    %166 = vmatprep.subr.bf16.mxu0 %v138
    %167 = vmatpush1.bf16.msra.mxu0 %v137
    %168 = vmatprep.subr.bf16.mxu0 %v142
    %169 = vmatpush1.bf16.msra.mxu0 %v141
    %170 = vmatprep.subr.bf16.mxu0 0
    %171 = vmatpush1.bf16.msra.mxu0 0
    %172 = vmatprep.subr.bf16.mxu0 0
    %173 = vmatpush1.bf16.msra.mxu0 0
    %174 = vmatprep.subr.bf16.mxu0 0
    %175 = vmatpush1.bf16.msra.mxu0 0
    %176 = vmatprep.subr.bf16.mxu0 0
    %177 = vmatpush1.bf16.msra.mxu0 0
    %178 = vmatprep.subr.bf16.mxu0 0
    %179 = vmatpush1.bf16.msra.mxu0 0
    %180 = vmatprep.subr.bf16.mxu0 0
    %181 = vmatpush1.bf16.msra.mxu0 0
    %182 = vmatprep.subr.bf16.mxu0 0
    %183 = vmatpush1.bf16.msra.mxu0 0
    %184 = vmatprep.subr.bf16.mxu0 0
    %185 = vmatpush1.bf16.msra.mxu0 0
    %186 = vmatprep.subr.bf16.mxu0 0
    %187 = vmatpush1.bf16.msra.mxu0 0
    %188 = vmatprep.subr.bf16.mxu0 0
    %189 = vmatpush1.bf16.msra.mxu0 0
    %190 = vmatprep.subr.bf16.mxu0 0
    %191 = vmatpush1.bf16.msra.mxu0 0
    %192 = vmatprep.subr.bf16.mxu0 0
    %193 = vmatpush1.bf16.msra.mxu0 0
    %194 = vmatprep.subr.bf16.mxu0 0
    %195 = vmatpush1.bf16.msra.mxu0 0
    %196 = vmatprep.subr.bf16.mxu0 0
    %197 = vmatpush1.bf16.msra.mxu0 0
    %198 = vmatprep.mubr.bf16.mxu0 0
    %199 = vmatmul.mubr.bf16.gmra.mrb[0].mxu0 %v155
    %v200 = vpop.f32.mrb[0].mxu0
    %v201 = vadd.f32 %v76, %v200
    %v202 = vpop.f32.mrb[0].mxu0
    %v203 = vadd.f32 %v80, %v202
    %v204 = vpop.f32.mrb[0].mxu0
    %v205 = vadd.f32 %v76, %v204
    %v206 = vpop.f32.mrb[0].mxu0
    %v207 = vadd.f32 %v80, %v206
    %208 = vmatprep.mubr.bf16.mxu0 0
    %209 = vmatmul.mubr.bf16.gmra.mrb[0].mxu0 %v158
    %v210 = vpop.f32.mrb[0].mxu0
    %v211 = vadd.f32 %v76, %v210
    %v212 = vpop.f32.mrb[0].mxu0
    %v213 = vadd.f32 %v80, %v212
    %v214 = vpop.f32.mrb[0].mxu0
    %v215 = vadd.f32 %v76, %v214
    %v216 = vpop.f32.mrb[0].mxu0
    %v217 = vadd.f32 %v80, %v216
    %218 = vmatprep.mubr.bf16.mxu0 0
    %219 = vmatmul.mubr.bf16.gmra.mrb[0].mxu0 %v161
    %v220 = vpop.f32.mrb[0].mxu0
    %v221 = vadd.f32 %v76, %v220
    %v222 = vpop.f32.mrb[0].mxu0
    %v223 = vadd.f32 %v80, %v222
    %v224 = vpop.f32.mrb[0].mxu0
    %v225 = vadd.f32 %v76, %v224
    %v226 = vpop.f32.mrb[0].mxu0
    %v227 = vadd.f32 %v80, %v226
    %228 = vmatprep.mubr.bf16.mxu0 0
    %229 = vmatmul.mubr.bf16.gmra.mrb[0].mxu0 %v164
    %v230 = vpop.f32.mrb[0].mxu0
    %v231 = vadd.f32 %v76, %v230
    %v232 = vpop.f32.mrb[0].mxu0
    %v233 = vadd.f32 %v80, %v232
    %v234 = vpop.f32.mrb[0].mxu0
    %v235 = vadd.f32 %v76, %v234
    %v236 = vpop.f32.mrb[0].mxu0
    %v237 = vadd.f32 %v80, %v236
    %238 = vdwg.mxu0
    %239 = vmatprep.subr.bf16.mxu0 %v140
    %240 = vmatpush1.bf16.msra.mxu0 %v139
    %241 = vmatprep.subr.bf16.mxu0 %v144
    %242 = vmatpush1.bf16.msra.mxu0 %v143
    %243 = vmatprep.subr.bf16.mxu0 0
    %244 = vmatpush1.bf16.msra.mxu0 0
    %245 = vmatprep.subr.bf16.mxu0 0
    %246 = vmatpush1.bf16.msra.mxu0 0
    %247 = vmatprep.subr.bf16.mxu0 0
    %248 = vmatpush1.bf16.msra.mxu0 0
    %249 = vmatprep.subr.bf16.mxu0 0
    %250 = vmatpush1.bf16.msra.mxu0 0
    %251 = vmatprep.subr.bf16.mxu0 0
    %252 = vmatpush1.bf16.msra.mxu0 0
    %253 = vmatprep.subr.bf16.mxu0 0
    %254 = vmatpush1.bf16.msra.mxu0 0
    %255 = vmatprep.subr.bf16.mxu0 0
    %256 = vmatpush1.bf16.msra.mxu0 0
    %257 = vmatprep.subr.bf16.mxu0 0
    %258 = vmatpush1.bf16.msra.mxu0 0
    %259 = vmatprep.subr.bf16.mxu0 0
    %260 = vmatpush1.bf16.msra.mxu0 0
    %261 = vmatprep.subr.bf16.mxu0 0
    %262 = vmatpush1.bf16.msra.mxu0 0
    %263 = vmatprep.subr.bf16.mxu0 0
    %264 = vmatpush1.bf16.msra.mxu0 0
    %265 = vmatprep.subr.bf16.mxu0 0
    %266 = vmatpush1.bf16.msra.mxu0 0
    %267 = vmatprep.subr.bf16.mxu0 0
    %268 = vmatpush1.bf16.msra.mxu0 0
    %269 = vmatprep.subr.bf16.mxu0 0
    %270 = vmatpush1.bf16.msra.mxu0 0
    %271 = vmatprep.mubr.bf16.mxu0 0
    %272 = vmatmul.mubr.bf16.gmra.mrb[0].mxu0 %v155
    %v273 = vpop.f32.mrb[0].mxu0
    %v274 = vadd.f32 %v84, %v273
    %v275 = vpop.f32.mrb[0].mxu0
    %v276 = vadd.f32 %v88, %v275
    %v277 = vpop.f32.mrb[0].mxu0
    %v278 = vadd.f32 %v84, %v277
    %v279 = vpop.f32.mrb[0].mxu0
    %v280 = vadd.f32 %v88, %v279
    %281 = vmatprep.mubr.bf16.mxu0 0
    %282 = vmatmul.mubr.bf16.gmra.mrb[0].mxu0 %v158
    %v283 = vpop.f32.mrb[0].mxu0
    %v284 = vadd.f32 %v84, %v283
    %v285 = vpop.f32.mrb[0].mxu0
    %v286 = vadd.f32 %v88, %v285
    %v287 = vpop.f32.mrb[0].mxu0
    %v288 = vadd.f32 %v84, %v287
    %v289 = vpop.f32.mrb[0].mxu0
    %v290 = vadd.f32 %v88, %v289
    %291 = vmatprep.mubr.bf16.mxu0 0
    %292 = vmatmul.mubr.bf16.gmra.mrb[0].mxu0 %v161
    %v293 = vpop.f32.mrb[0].mxu0
    %v294 = vadd.f32 %v84, %v293
    %v295 = vpop.f32.mrb[0].mxu0
    %v296 = vadd.f32 %v88, %v295
    %v297 = vpop.f32.mrb[0].mxu0
    %v298 = vadd.f32 %v84, %v297
    %v299 = vpop.f32.mrb[0].mxu0
    %v300 = vadd.f32 %v88, %v299
    %301 = vmatprep.mubr.bf16.mxu0 0
    %302 = vmatmul.mubr.bf16.gmra.mrb[0].mxu0 %v164
    %v303 = vpop.f32.mrb[0].mxu0
    %v304 = vadd.f32 %v84, %v303
    %v305 = vpop.f32.mrb[0].mxu0
    %v306 = vadd.f32 %v88, %v305
    %v307 = vpop.f32.mrb[0].mxu0
    %v308 = vadd.f32 %v84, %v307
    %v309 = vpop.f32.mrb[0].mxu0
    %v310 = vadd.f32 %v88, %v309
    %311 = vdwg.mxu0
    %v312 = vpack.c.bf16 %v205, %v201
    %v313 = vpack.c.bf16 %v207, %v203
    %v314 = vpack.c.bf16 %v278, %v274
    %v315 = vpack.c.bf16 %v280, %v276
    %v316 = vpack.c.bf16 %v215, %v211
    %v317 = vpack.c.bf16 %v217, %v213
    %v318 = vpack.c.bf16 %v288, %v284
    %v319 = vpack.c.bf16 %v290, %v286
    %v320 = vpack.c.bf16 %v225, %v221
    %v321 = vpack.c.bf16 %v227, %v223
    %v322 = vpack.c.bf16 %v298, %v294
    %v323 = vpack.c.bf16 %v300, %v296
    %v324 = vpack.c.bf16 %v235, %v231
    %v325 = vpack.c.bf16 %v237, %v233
    %v326 = vpack.c.bf16 %v308, %v304
    %v327 = vpack.c.bf16 %v310, %v306
    %v344 = vunpack.c.l.b16 %v312
    %v345 = vunpack.c.l.b16 %v313
    %v346 = vunpack.c.l.b16 %v314
    %v347 = vunpack.c.l.b16 %v315
    %v348 = vunpack.c.h.b16 %v312
    %v349 = vunpack.c.h.b16 %v313
    %v350 = vunpack.c.h.b16 %v314
    %v351 = vunpack.c.h.b16 %v315
    %v352 = vunpack.c.l.b16 %v316
    %v353 = vunpack.c.l.b16 %v317
    %v354 = vunpack.c.l.b16 %v318
    %v355 = vunpack.c.l.b16 %v319
    %v356 = vunpack.c.h.b16 %v316
    %v357 = vunpack.c.h.b16 %v317
    %v358 = vunpack.c.h.b16 %v318
    %v359 = vunpack.c.h.b16 %v319
    %v360 = vunpack.c.l.b16 %v320
    %v361 = vunpack.c.l.b16 %v321
    %v362 = vunpack.c.l.b16 %v322
    %v363 = vunpack.c.l.b16 %v323
    %v364 = vunpack.c.h.b16 %v320
    %v365 = vunpack.c.h.b16 %v321
    %v366 = vunpack.c.h.b16 %v322
    %v367 = vunpack.c.h.b16 %v323
    %v368 = vunpack.c.l.b16 %v324
    %v369 = vunpack.c.l.b16 %v325
    %v370 = vunpack.c.l.b16 %v326
    %v371 = vunpack.c.l.b16 %v327
    %v372 = vunpack.c.h.b16 %v324
    %v373 = vunpack.c.h.b16 %v325
    %v374 = vunpack.c.h.b16 %v326
    %v375 = vunpack.c.h.b16 %v327
    %v376 = vpack.c.b16 %v345, %v344
    %v377 = vpack.c.b16 %v347, %v346
    %v378 = vpack.c.b16 %v349, %v348
    %v379 = vpack.c.b16 %v351, %v350
    %v380 = vpack.c.b16 %v353, %v352
    %v381 = vpack.c.b16 %v355, %v354
    %v382 = vpack.c.b16 %v357, %v356
    %v383 = vpack.c.b16 %v359, %v358
    %v384 = vpack.c.b16 %v361, %v360
    %v385 = vpack.c.b16 %v363, %v362
    %v386 = vpack.c.b16 %v365, %v364
    %v387 = vpack.c.b16 %v367, %v366
    %v388 = vpack.c.b16 %v369, %v368
    %v389 = vpack.c.b16 %v371, %v370
    %v390 = vpack.c.b16 %v373, %v372
    %v391 = vpack.c.b16 %v375, %v374
    %408 = vst [vmem:[#allocation8] sm:$0xff] %v376
    %409 = vst [vmem:[#allocation8 + $0x8] sm:$0xff] %v377
    %410 = vst [vmem:[#allocation8 + $0x10] sm:$0xff] %v378
    %411 = vst [vmem:[#allocation8 + $0x18] sm:$0xff] %v379
    %412 = vst [vmem:[#allocation8 + $0x20] sm:$0xff] %v380
    %413 = vst [vmem:[#allocation8 + $0x28] sm:$0xff] %v381
    %414 = vst [vmem:[#allocation8 + $0x30] sm:$0xff] %v382
    %415 = vst [vmem:[#allocation8 + $0x38] sm:$0xff] %v383
    %416 = vst [vmem:[#allocation8 + $0x40] sm:$0xff] %v384
    %417 = vst [vmem:[#allocation8 + $0x48] sm:$0xff] %v385
    %418 = vst [vmem:[#allocation8 + $0x50] sm:$0xff] %v386
    %419 = vst [vmem:[#allocation8 + $0x58] sm:$0xff] %v387
    %420 = vst [vmem:[#allocation8 + $0x60] sm:$0xff] %v388
    %421 = vst [vmem:[#allocation8 + $0x68] sm:$0xff] %v389
    %422 = vst [vmem:[#allocation8 + $0x70] sm:$0xff] %v390
    %423 = vst [vmem:[#allocation8 + $0x78] sm:$0xff] %v391
    // Predicated region
    $region26: #{model_forward.5} parent=1 // pred_check
      _
    $region27: #{model_forward.5} parent=1 // pred_check_branch
      %425 = sbr.rel (0) target = $region29
    $region28: #{model_forward.5} parent=1 // pred_region
      %s427 = ssub.s32 2048, 2048
      %428 = vsyncadd [#allocation4], %s427
      %s429 = sshll.u32 [#allocation8], 4
      %s430 = int_to_ptr.vmem [resolvable:$true] %s429
      %435 = dma.vmem_to_hbm [thread:$0]  %s430, 2048, %s3, [#allocation4], 256, 256, 16
    $region29: #{model_forward.5} parent=1 // pred_fallthru
      _
    // Predicated region
    $region30: #{model_forward.5} parent=1 // pred_check
      _
    $region31: #{model_forward.5} parent=1 // pred_check_branch
      %437 = sbr.rel (0) target = $region33
    $region32: #{model_forward.5} parent=1 // pred_region
      %438 = dma.done [#allocation4], 2048
    $region33: #{model_forward.5} parent=1 // pred_fallthru
      _
    %439 = vsyncpa [#allocation3], 1
    %440 = vsyncpa [#allocation6], 1
    %441 = vsyncpa [#allocation4], 1

// kernel: model_forward.7
$region0: #{model_forward.7}
  #allocation0 [shape = 'u32[]', space=smem, size = 0x4, offset = 0x4, fixed_abs, tag = 'smem constant byte address 0x4 - core index']
  #allocation1 [shape = 'u32[144,128]{1,0:T(1,128)}', space=vmem, size = 0x12000, scoped, tag = 'internal scratch']
  %s0 = inlined_call_operand.hbm [shape: bf16[64,128], index: 0, kind: input, shape index: {}]
  %s1 = inlined_call_operand.hbm [shape: bf16[128,512], index: 1, kind: input, shape index: {}]
  %s2 = inlined_call_operand.hbm [shape: f32[1,512], index: 2, kind: input, shape index: {}]
  %s3 = inlined_call_operand.hbm [shape: bf16[64,512], index: 3, kind: output, shape index: {}]
  %s4 = sld [smem:[#allocation0]]
  $region34: #{model_forward.7} parent=0
    _
  %s6 = ssub.s32 1, %s4
  %s7 = scalar_select 0, %s6, %s4
  $region1: #{model_forward.7} parent=0
    #allocation2 [shape = 'u8[16384]{0}', space=vmem, size = 0x4000, scoped, tag = 'input window, operand 0, single buffered']
    #allocation3 [shape = 's32[1]{0}', space=sflag, size = 0x4, scoped, tag = 'scoped memory for model_forward.7']
    #allocation4 [shape = 's32[1]{0}', space=sflag, size = 0x4, scoped, tag = 'scoped memory for model_forward.7']
    #allocation5 [shape = 'u8[131072]{0}', space=vmem, size = 0x20000, scoped, tag = 'input window, operand 1, single buffered']
    #allocation6 [shape = 's32[1]{0}', space=sflag, size = 0x4, scoped, tag = 'scoped memory for model_forward.7']
    #allocation7 [shape = 'u8[2048]{0}', space=vmem, size = 0x800, scoped, tag = 'input window, operand 2, single buffered']
    #allocation8 [shape = 'u8[65536]{0}', space=vmem, size = 0x10000, scoped, tag = 'output window, operand 0, single buffered']
    %8 = vsyncpa [#allocation3], 0
    %9 = vsyncpa [#allocation6], 0
    %10 = vsyncpa [#allocation4], 0
    // Predicated region
    $region2: #{model_forward.7} parent=1 // pred_check
      _
    $region3: #{model_forward.7} parent=1 // pred_check_branch
      %12 = sbr.rel (0) target = $region5
    $region4: #{model_forward.7} parent=1 // pred_region
      %s14 = ssub.s32 512, 512
      %15 = vsyncadd [#allocation3], %s14
      %s16 = sshll.u32 [#allocation2], 4
      %s17 = int_to_ptr.vmem [resolvable:$true] %s16
      %22 = dma.hbm_to_vmem [thread:$0]  %s0, 512, %s17, [#allocation3], 64, 64, 4
    $region5: #{model_forward.7} parent=1 // pred_fallthru
      _
    // Predicated region
    $region6: #{model_forward.7} parent=1 // pred_check
      _
    $region7: #{model_forward.7} parent=1 // pred_check_branch
      %24 = sbr.rel (0) target = $region9
    $region8: #{model_forward.7} parent=1 // pred_region
      %s26 = ssub.s32 4096, 4096
      %27 = vsyncadd [#allocation6], %s26
      %s28 = sshll.u32 [#allocation5], 4
      %s29 = int_to_ptr.vmem [resolvable:$true] %s28
      %34 = dma.hbm_to_vmem [thread:$0]  %s1, 4096, %s29, [#allocation6], 256, 256, 16
    $region9: #{model_forward.7} parent=1 // pred_fallthru
      _
    // Predicated region
    $region10: #{model_forward.7} parent=1 // pred_check
      _
    $region11: #{model_forward.7} parent=1 // pred_check_branch
      %36 = sbr.rel (0) target = $region13
    $region12: #{model_forward.7} parent=1 // pred_region
      %s38 = ssub.s32 64, 64
      %39 = vsyncadd [#allocation6], %s38
      %s41 = sshll.u32 [#allocation7], 4
      %s42 = int_to_ptr.vmem [resolvable:$true] %s41
      %44 = dma.hbm_to_vmem [thread:$0]  %s2, 64, %s42, [#allocation6]
    $region13: #{model_forward.7} parent=1 // pred_fallthru
      _
    // Predicated region
    $region14: #{model_forward.7} parent=1 // pred_check
      _
    $region15: #{model_forward.7} parent=1 // pred_check_branch
      %46 = sbr.rel (0) target = $region17
    $region16: #{model_forward.7} parent=1 // pred_region
      %47 = dma.done [#allocation3], 512
    $region17: #{model_forward.7} parent=1 // pred_fallthru
      _
    // Predicated region
    $region18: #{model_forward.7} parent=1 // pred_check
      _
    $region19: #{model_forward.7} parent=1 // pred_check_branch
      %49 = sbr.rel (0) target = $region21
    $region20: #{model_forward.7} parent=1 // pred_region
      %50 = dma.done [#allocation6], 4096
    $region21: #{model_forward.7} parent=1 // pred_fallthru
      _
    // Predicated region
    $region22: #{model_forward.7} parent=1 // pred_check
      _
    $region23: #{model_forward.7} parent=1 // pred_check_branch
      %52 = sbr.rel (0) target = $region25
    $region24: #{model_forward.7} parent=1 // pred_region
      %53 = dma.done [#allocation6], 64
    $region25: #{model_forward.7} parent=1 // pred_fallthru
      _
    %v55 = vld [vmem:[#allocation2] sm:$0xf]
    %v56 = vld [vmem:[#allocation2 + $0x4] sm:$0xf]
    %v57 = vld [vmem:[#allocation2 + $0x8] sm:$0xf]
    %v58 = vld [vmem:[#allocation2 + $0xc] sm:$0xf]
    %v59 = vld [vmem:[#allocation2 + $0x10] sm:$0xf]
    %v60 = vld [vmem:[#allocation2 + $0x14] sm:$0xf]
    %v61 = vld [vmem:[#allocation2 + $0x18] sm:$0xf]
    %v62 = vld [vmem:[#allocation2 + $0x1c] sm:$0xf]
    %v63 = vld [vmem:[#allocation5] sm:$0xff]
    %v64 = vld [vmem:[#allocation5 + $0x8] sm:$0xff]
    %v65 = vld [vmem:[#allocation5 + $0x10] sm:$0xff]
    %v66 = vld [vmem:[#allocation5 + $0x18] sm:$0xff]
    %v67 = vld [vmem:[#allocation5 + $0x20] sm:$0xff]
    %v68 = vld [vmem:[#allocation5 + $0x28] sm:$0xff]
    %v69 = vld [vmem:[#allocation5 + $0x30] sm:$0xff]
    %v70 = vld [vmem:[#allocation5 + $0x38] sm:$0xff]
    %v71 = vld [vmem:[#allocation5 + $0x40] sm:$0xff]
    %v72 = vld [vmem:[#allocation5 + $0x48] sm:$0xff]
    %v73 = vld [vmem:[#allocation5 + $0x50] sm:$0xff]
    %v74 = vld [vmem:[#allocation5 + $0x58] sm:$0xff]
    %v75 = vld [vmem:[#allocation5 + $0x60] sm:$0xff]
    %v76 = vld [vmem:[#allocation5 + $0x68] sm:$0xff]
    %v77 = vld [vmem:[#allocation5 + $0x70] sm:$0xff]
    %v78 = vld [vmem:[#allocation5 + $0x78] sm:$0xff]
    %v79 = vld [vmem:[#allocation5 + $0x80] sm:$0xff]
    %v80 = vld [vmem:[#allocation5 + $0x88] sm:$0xff]
    %v81 = vld [vmem:[#allocation5 + $0x90] sm:$0xff]
    %v82 = vld [vmem:[#allocation5 + $0x98] sm:$0xff]
    %v83 = vld [vmem:[#allocation5 + $0xa0] sm:$0xff]
    %v84 = vld [vmem:[#allocation5 + $0xa8] sm:$0xff]
    %v85 = vld [vmem:[#allocation5 + $0xb0] sm:$0xff]
    %v86 = vld [vmem:[#allocation5 + $0xb8] sm:$0xff]
    %v87 = vld [vmem:[#allocation5 + $0xc0] sm:$0xff]
    %v88 = vld [vmem:[#allocation5 + $0xc8] sm:$0xff]
    %v89 = vld [vmem:[#allocation5 + $0xd0] sm:$0xff]
    %v90 = vld [vmem:[#allocation5 + $0xd8] sm:$0xff]
    %v91 = vld [vmem:[#allocation5 + $0xe0] sm:$0xff]
    %v92 = vld [vmem:[#allocation5 + $0xe8] sm:$0xff]
    %v93 = vld [vmem:[#allocation5 + $0xf0] sm:$0xff]
    %v94 = vld [vmem:[#allocation5 + $0xf8] sm:$0xff]
    %v95 = vld [vmem:[#allocation7] sm:$0xf]
    %v97 = vlaneseq
    %v98 = vshrl.u32 %v97, 7
    %v99 = vsub.s32 0, %v98
    %v100 = vrot.slane %v95, %v99
    %v101 = vlaneseq
    %v102 = vshrl.u32 %v101, 7
    %v103 = vsub.s32 1, %v102
    %v104 = vrot.slane %v95, %v103
    %v105 = vlaneseq
    %v106 = vshrl.u32 %v105, 7
    %v107 = vsub.s32 2, %v106
    %v108 = vrot.slane %v95, %v107
    %v109 = vlaneseq
    %v110 = vshrl.u32 %v109, 7
    %v111 = vsub.s32 3, %v110
    %v112 = vrot.slane %v95, %v111
    %v125 = vunpack.c.l.b16 %v55
    %v126 = vunpack.c.l.b16 %v56
    %v127 = vunpack.c.l.b16 %v57
    %v128 = vunpack.c.l.b16 %v58
    %v129 = vunpack.c.l.b16 %v59
    %v130 = vunpack.c.l.b16 %v60
    %v131 = vunpack.c.l.b16 %v61
    %v132 = vunpack.c.l.b16 %v62
    %v133 = vpack.c.b16 %v126, %v125
    %v134 = vpack.c.b16 %v128, %v127
    %v135 = vpack.c.b16 %v130, %v129
    %v136 = vpack.c.b16 %v132, %v131
    %v173 = vunpack.c.l.b16 %v63
    %v174 = vunpack.c.h.b16 %v63
    %v175 = vunpack.c.l.b16 %v64
    %v176 = vunpack.c.h.b16 %v64
    %v177 = vunpack.c.l.b16 %v65
    %v178 = vunpack.c.h.b16 %v65
    %v179 = vunpack.c.l.b16 %v66
    %v180 = vunpack.c.h.b16 %v66
    %v181 = vunpack.c.l.b16 %v67
    %v182 = vunpack.c.h.b16 %v67
    %v183 = vunpack.c.l.b16 %v68
    %v184 = vunpack.c.h.b16 %v68
    %v185 = vunpack.c.l.b16 %v69
    %v186 = vunpack.c.h.b16 %v69
    %v187 = vunpack.c.l.b16 %v70
    %v188 = vunpack.c.h.b16 %v70
    %v189 = vunpack.c.l.b16 %v71
    %v190 = vunpack.c.h.b16 %v71
    %v191 = vunpack.c.l.b16 %v72
    %v192 = vunpack.c.h.b16 %v72
    %v193 = vunpack.c.l.b16 %v73
    %v194 = vunpack.c.h.b16 %v73
    %v195 = vunpack.c.l.b16 %v74
    %v196 = vunpack.c.h.b16 %v74
    %v197 = vunpack.c.l.b16 %v75
    %v198 = vunpack.c.h.b16 %v75
    %v199 = vunpack.c.l.b16 %v76
    %v200 = vunpack.c.h.b16 %v76
    %v201 = vunpack.c.l.b16 %v77
    %v202 = vunpack.c.h.b16 %v77
    %v203 = vunpack.c.l.b16 %v78
    %v204 = vunpack.c.h.b16 %v78
    %v205 = vunpack.c.l.b16 %v79
    %v206 = vunpack.c.h.b16 %v79
    %v207 = vunpack.c.l.b16 %v80
    %v208 = vunpack.c.h.b16 %v80
    %v209 = vunpack.c.l.b16 %v81
    %v210 = vunpack.c.h.b16 %v81
    %v211 = vunpack.c.l.b16 %v82
    %v212 = vunpack.c.h.b16 %v82
    %v213 = vunpack.c.l.b16 %v83
    %v214 = vunpack.c.h.b16 %v83
    %v215 = vunpack.c.l.b16 %v84
    %v216 = vunpack.c.h.b16 %v84
    %v217 = vunpack.c.l.b16 %v85
    %v218 = vunpack.c.h.b16 %v85
    %v219 = vunpack.c.l.b16 %v86
    %v220 = vunpack.c.h.b16 %v86
    %v221 = vunpack.c.l.b16 %v87
    %v222 = vunpack.c.h.b16 %v87
    %v223 = vunpack.c.l.b16 %v88
    %v224 = vunpack.c.h.b16 %v88
    %v225 = vunpack.c.l.b16 %v89
    %v226 = vunpack.c.h.b16 %v89
    %v227 = vunpack.c.l.b16 %v90
    %v228 = vunpack.c.h.b16 %v90
    %v229 = vunpack.c.l.b16 %v91
    %v230 = vunpack.c.h.b16 %v91
    %v231 = vunpack.c.l.b16 %v92
    %v232 = vunpack.c.h.b16 %v92
    %v233 = vunpack.c.l.b16 %v93
    %v234 = vunpack.c.h.b16 %v93
    %v235 = vunpack.c.l.b16 %v94
    %v236 = vunpack.c.h.b16 %v94
    %v237 = vpack.c.b16 %v177, %v173
    %v238 = vpack.c.b16 %v178, %v174
    %v239 = vpack.c.b16 %v179, %v175
    %v240 = vpack.c.b16 %v180, %v176
    %v241 = vpack.c.b16 %v185, %v181
    %v242 = vpack.c.b16 %v186, %v182
    %v243 = vpack.c.b16 %v187, %v183
    %v244 = vpack.c.b16 %v188, %v184
    %v245 = vpack.c.b16 %v193, %v189
    %v246 = vpack.c.b16 %v194, %v190
    %v247 = vpack.c.b16 %v195, %v191
    %v248 = vpack.c.b16 %v196, %v192
    %v249 = vpack.c.b16 %v201, %v197
    %v250 = vpack.c.b16 %v202, %v198
    %v251 = vpack.c.b16 %v203, %v199
    %v252 = vpack.c.b16 %v204, %v200
    %v253 = vpack.c.b16 %v209, %v205
    %v254 = vpack.c.b16 %v210, %v206
    %v255 = vpack.c.b16 %v211, %v207
    %v256 = vpack.c.b16 %v212, %v208
    %v257 = vpack.c.b16 %v217, %v213
    %v258 = vpack.c.b16 %v218, %v214
    %v259 = vpack.c.b16 %v219, %v215
    %v260 = vpack.c.b16 %v220, %v216
    %v261 = vpack.c.b16 %v225, %v221
    %v262 = vpack.c.b16 %v226, %v222
    %v263 = vpack.c.b16 %v227, %v223
    %v264 = vpack.c.b16 %v228, %v224
    %v265 = vpack.c.b16 %v233, %v229
    %v266 = vpack.c.b16 %v234, %v230
    %v267 = vpack.c.b16 %v235, %v231
    %v268 = vpack.c.b16 %v236, %v232
    %301 = vmatprep.subr.bf16.mxu0 %v238
    %302 = vmatpush1.bf16.msra.mxu0 %v237
    %303 = vmatprep.subr.bf16.mxu0 %v242
    %304 = vmatpush1.bf16.msra.mxu0 %v241
    %305 = vmatprep.subr.bf16.mxu0 %v246
    %306 = vmatpush1.bf16.msra.mxu0 %v245
    %307 = vmatprep.subr.bf16.mxu0 %v250
    %308 = vmatpush1.bf16.msra.mxu0 %v249
    %309 = vmatprep.subr.bf16.mxu0 %v254
    %310 = vmatpush1.bf16.msra.mxu0 %v253
    %311 = vmatprep.subr.bf16.mxu0 %v258
    %312 = vmatpush1.bf16.msra.mxu0 %v257
    %313 = vmatprep.subr.bf16.mxu0 %v262
    %314 = vmatpush1.bf16.msra.mxu0 %v261
    %315 = vmatprep.subr.bf16.mxu0 %v266
    %316 = vmatpush1.bf16.msra.mxu0 %v265
    %317 = vmatprep.subr.bf16.mxu0 0
    %318 = vmatpush1.bf16.msra.mxu0 0
    %319 = vmatprep.subr.bf16.mxu0 0
    %320 = vmatpush1.bf16.msra.mxu0 0
    %321 = vmatprep.subr.bf16.mxu0 0
    %322 = vmatpush1.bf16.msra.mxu0 0
    %323 = vmatprep.subr.bf16.mxu0 0
    %324 = vmatpush1.bf16.msra.mxu0 0
    %325 = vmatprep.subr.bf16.mxu0 0
    %326 = vmatpush1.bf16.msra.mxu0 0
    %327 = vmatprep.subr.bf16.mxu0 0
    %328 = vmatpush1.bf16.msra.mxu0 0
    %329 = vmatprep.subr.bf16.mxu0 0
    %330 = vmatpush1.bf16.msra.mxu0 0
    %331 = vmatprep.subr.bf16.mxu0 0
    %332 = vmatpush1.bf16.msra.mxu0 0
    %333 = vmatprep.mubr.bf16.mxu0 0
    %334 = vmatmul.mubr.bf16.gmra.mrb[0].mxu0 %v133
    %v335 = vpop.f32.mrb[0].mxu0
    %v336 = vadd.f32 %v100, %v335
    %v337 = vpop.f32.mrb[0].mxu0
    %v338 = vadd.f32 %v104, %v337
    %v339 = vpop.f32.mrb[0].mxu0
    %v340 = vadd.f32 %v100, %v339
    %v341 = vpop.f32.mrb[0].mxu0
    %v342 = vadd.f32 %v104, %v341
    %343 = vmatprep.mubr.bf16.mxu0 0
    %344 = vmatmul.mubr.bf16.gmra.mrb[0].mxu0 %v134
    %v345 = vpop.f32.mrb[0].mxu0
    %v346 = vadd.f32 %v100, %v345
    %v347 = vpop.f32.mrb[0].mxu0
    %v348 = vadd.f32 %v104, %v347
    %v349 = vpop.f32.mrb[0].mxu0
    %v350 = vadd.f32 %v100, %v349
    %v351 = vpop.f32.mrb[0].mxu0
    %v352 = vadd.f32 %v104, %v351
    %353 = vmatprep.mubr.bf16.mxu0 0
    %354 = vmatmul.mubr.bf16.gmra.mrb[0].mxu0 %v135
    %v355 = vpop.f32.mrb[0].mxu0
    %v356 = vadd.f32 %v100, %v355
    %v357 = vpop.f32.mrb[0].mxu0
    %v358 = vadd.f32 %v104, %v357
    %v359 = vpop.f32.mrb[0].mxu0
    %v360 = vadd.f32 %v100, %v359
    %v361 = vpop.f32.mrb[0].mxu0
    %v362 = vadd.f32 %v104, %v361
    %363 = vmatprep.mubr.bf16.mxu0 0
    %364 = vmatmul.mubr.bf16.gmra.mrb[0].mxu0 %v136
    %v365 = vpop.f32.mrb[0].mxu0
    %v366 = vadd.f32 %v100, %v365
    %v367 = vpop.f32.mrb[0].mxu0
    %v368 = vadd.f32 %v104, %v367
    %v369 = vpop.f32.mrb[0].mxu0
    %v370 = vadd.f32 %v100, %v369
    %v371 = vpop.f32.mrb[0].mxu0
    %v372 = vadd.f32 %v104, %v371
    %373 = vdwg.mxu0
    %374 = vmatprep.subr.bf16.mxu0 %v240
    %375 = vmatpush1.bf16.msra.mxu0 %v239
    %376 = vmatprep.subr.bf16.mxu0 %v244
    %377 = vmatpush1.bf16.msra.mxu0 %v243
    %378 = vmatprep.subr.bf16.mxu0 %v248
    %379 = vmatpush1.bf16.msra.mxu0 %v247
    %380 = vmatprep.subr.bf16.mxu0 %v252
    %381 = vmatpush1.bf16.msra.mxu0 %v251
    %382 = vmatprep.subr.bf16.mxu0 %v256
    %383 = vmatpush1.bf16.msra.mxu0 %v255
    %384 = vmatprep.subr.bf16.mxu0 %v260
    %385 = vmatpush1.bf16.msra.mxu0 %v259
    %386 = vmatprep.subr.bf16.mxu0 %v264
    %387 = vmatpush1.bf16.msra.mxu0 %v263
    %388 = vmatprep.subr.bf16.mxu0 %v268
    %389 = vmatpush1.bf16.msra.mxu0 %v267
    %390 = vmatprep.subr.bf16.mxu0 0
    %391 = vmatpush1.bf16.msra.mxu0 0
    %392 = vmatprep.subr.bf16.mxu0 0
    %393 = vmatpush1.bf16.msra.mxu0 0
    %394 = vmatprep.subr.bf16.mxu0 0
    %395 = vmatpush1.bf16.msra.mxu0 0
    %396 = vmatprep.subr.bf16.mxu0 0
    %397 = vmatpush1.bf16.msra.mxu0 0
    %398 = vmatprep.subr.bf16.mxu0 0
    %399 = vmatpush1.bf16.msra.mxu0 0
    %400 = vmatprep.subr.bf16.mxu0 0
    %401 = vmatpush1.bf16.msra.mxu0 0
    %402 = vmatprep.subr.bf16.mxu0 0
    %403 = vmatpush1.bf16.msra.mxu0 0
    %404 = vmatprep.subr.bf16.mxu0 0
    %405 = vmatpush1.bf16.msra.mxu0 0
    %406 = vmatprep.mubr.bf16.mxu0 0
    %407 = vmatmul.mubr.bf16.gmra.mrb[0].mxu0 %v133
    %v408 = vpop.f32.mrb[0].mxu0
    %v409 = vadd.f32 %v108, %v408
    %v410 = vpop.f32.mrb[0].mxu0
    %v411 = vadd.f32 %v112, %v410
    %v412 = vpop.f32.mrb[0].mxu0
    %v413 = vadd.f32 %v108, %v412
    %v414 = vpop.f32.mrb[0].mxu0
    %v415 = vadd.f32 %v112, %v414
    %416 = vmatprep.mubr.bf16.mxu0 0
    %417 = vmatmul.mubr.bf16.gmra.mrb[0].mxu0 %v134
    %v418 = vpop.f32.mrb[0].mxu0
    %v419 = vadd.f32 %v108, %v418
    %v420 = vpop.f32.mrb[0].mxu0
    %v421 = vadd.f32 %v112, %v420
    %v422 = vpop.f32.mrb[0].mxu0
    %v423 = vadd.f32 %v108, %v422
    %v424 = vpop.f32.mrb[0].mxu0
    %v425 = vadd.f32 %v112, %v424
    %426 = vmatprep.mubr.bf16.mxu0 0
    %427 = vmatmul.mubr.bf16.gmra.mrb[0].mxu0 %v135
    %v428 = vpop.f32.mrb[0].mxu0
    %v429 = vadd.f32 %v108, %v428
    %v430 = vpop.f32.mrb[0].mxu0
    %v431 = vadd.f32 %v112, %v430
    %v432 = vpop.f32.mrb[0].mxu0
    %v433 = vadd.f32 %v108, %v432
    %v434 = vpop.f32.mrb[0].mxu0
    %v435 = vadd.f32 %v112, %v434
    %436 = vmatprep.mubr.bf16.mxu0 0
    %437 = vmatmul.mubr.bf16.gmra.mrb[0].mxu0 %v136
    %v438 = vpop.f32.mrb[0].mxu0
    %v439 = vadd.f32 %v108, %v438
    %v440 = vpop.f32.mrb[0].mxu0
    %v441 = vadd.f32 %v112, %v440
    %v442 = vpop.f32.mrb[0].mxu0
    %v443 = vadd.f32 %v108, %v442
    %v444 = vpop.f32.mrb[0].mxu0
    %v445 = vadd.f32 %v112, %v444
    %446 = vdwg.mxu0
    %v447 = vpack.c.bf16 %v340, %v336
    %v448 = vpack.c.bf16 %v342, %v338
    %v449 = vpack.c.bf16 %v413, %v409
    %v450 = vpack.c.bf16 %v415, %v411
    %v451 = vpack.c.bf16 %v350, %v346
    %v452 = vpack.c.bf16 %v352, %v348
    %v453 = vpack.c.bf16 %v423, %v419
    %v454 = vpack.c.bf16 %v425, %v421
    %v455 = vpack.c.bf16 %v360, %v356
    %v456 = vpack.c.bf16 %v362, %v358
    %v457 = vpack.c.bf16 %v433, %v429
    %v458 = vpack.c.bf16 %v435, %v431
    %v459 = vpack.c.bf16 %v370, %v366
    %v460 = vpack.c.bf16 %v372, %v368
    %v461 = vpack.c.bf16 %v443, %v439
    %v462 = vpack.c.bf16 %v445, %v441
    %v479 = vunpack.c.l.b16 %v447
    %v480 = vunpack.c.l.b16 %v448
    %v481 = vunpack.c.l.b16 %v449
    %v482 = vunpack.c.l.b16 %v450
    %v483 = vunpack.c.h.b16 %v447
    %v484 = vunpack.c.h.b16 %v448
    %v485 = vunpack.c.h.b16 %v449
    %v486 = vunpack.c.h.b16 %v450
    %v487 = vunpack.c.l.b16 %v451
    %v488 = vunpack.c.l.b16 %v452
    %v489 = vunpack.c.l.b16 %v453
    %v490 = vunpack.c.l.b16 %v454
    %v491 = vunpack.c.h.b16 %v451
    %v492 = vunpack.c.h.b16 %v452
    %v493 = vunpack.c.h.b16 %v453
    %v494 = vunpack.c.h.b16 %v454
    %v495 = vunpack.c.l.b16 %v455
    %v496 = vunpack.c.l.b16 %v456
    %v497 = vunpack.c.l.b16 %v457
    %v498 = vunpack.c.l.b16 %v458
    %v499 = vunpack.c.h.b16 %v455
    %v500 = vunpack.c.h.b16 %v456
    %v501 = vunpack.c.h.b16 %v457
    %v502 = vunpack.c.h.b16 %v458
    %v503 = vunpack.c.l.b16 %v459
    %v504 = vunpack.c.l.b16 %v460
    %v505 = vunpack.c.l.b16 %v461
    %v506 = vunpack.c.l.b16 %v462
    %v507 = vunpack.c.h.b16 %v459
    %v508 = vunpack.c.h.b16 %v460
    %v509 = vunpack.c.h.b16 %v461
    %v510 = vunpack.c.h.b16 %v462
    %v511 = vpack.c.b16 %v480, %v479
    %v512 = vpack.c.b16 %v482, %v481
    %v513 = vpack.c.b16 %v484, %v483
    %v514 = vpack.c.b16 %v486, %v485
    %v515 = vpack.c.b16 %v488, %v487
    %v516 = vpack.c.b16 %v490, %v489
    %v517 = vpack.c.b16 %v492, %v491
    %v518 = vpack.c.b16 %v494, %v493
    %v519 = vpack.c.b16 %v496, %v495
    %v520 = vpack.c.b16 %v498, %v497
    %v521 = vpack.c.b16 %v500, %v499
    %v522 = vpack.c.b16 %v502, %v501
    %v523 = vpack.c.b16 %v504, %v503
    %v524 = vpack.c.b16 %v506, %v505
    %v525 = vpack.c.b16 %v508, %v507
    %v526 = vpack.c.b16 %v510, %v509
    %543 = vst [vmem:[#allocation8] sm:$0xff] %v511
    %544 = vst [vmem:[#allocation8 + $0x8] sm:$0xff] %v512
    %545 = vst [vmem:[#allocation8 + $0x10] sm:$0xff] %v513
    %546 = vst [vmem:[#allocation8 + $0x18] sm:$0xff] %v514
    %547 = vst [vmem:[#allocation8 + $0x20] sm:$0xff] %v515
    %548 = vst [vmem:[#allocation8 + $0x28] sm:$0xff] %v516
    %549 = vst [vmem:[#allocation8 + $0x30] sm:$0xff] %v517
    %550 = vst [vmem:[#allocation8 + $0x38] sm:$0xff] %v518
    %551 = vst [vmem:[#allocation8 + $0x40] sm:$0xff] %v519
    %552 = vst [vmem:[#allocation8 + $0x48] sm:$0xff] %v520
    %553 = vst [vmem:[#allocation8 + $0x50] sm:$0xff] %v521
    %554 = vst [vmem:[#allocation8 + $0x58] sm:$0xff] %v522
    %555 = vst [vmem:[#allocation8 + $0x60] sm:$0xff] %v523
    %556 = vst [vmem:[#allocation8 + $0x68] sm:$0xff] %v524
    %557 = vst [vmem:[#allocation8 + $0x70] sm:$0xff] %v525
    %558 = vst [vmem:[#allocation8 + $0x78] sm:$0xff] %v526
    // Predicated region
    $region26: #{model_forward.7} parent=1 // pred_check
      _
    $region27: #{model_forward.7} parent=1 // pred_check_branch
      %560 = sbr.rel (0) target = $region29
    $region28: #{model_forward.7} parent=1 // pred_region
      %s562 = ssub.s32 2048, 2048
      %563 = vsyncadd [#allocation4], %s562
      %s564 = sshll.u32 [#allocation8], 4
      %s565 = int_to_ptr.vmem [resolvable:$true] %s564
      %570 = dma.vmem_to_hbm [thread:$0]  %s565, 2048, %s3, [#allocation4], 256, 256, 16
    $region29: #{model_forward.7} parent=1 // pred_fallthru
      _
    // Predicated region
    $region30: #{model_forward.7} parent=1 // pred_check
      _
    $region31: #{model_forward.7} parent=1 // pred_check_branch
      %572 = sbr.rel (0) target = $region33
    $region32: #{model_forward.7} parent=1 // pred_region
      %573 = dma.done [#allocation4], 2048
    $region33: #{model_forward.7} parent=1 // pred_fallthru
      _
    %574 = vsyncpa [#allocation3], 1
    %575 = vsyncpa [#allocation6], 1
    %576 = vsyncpa [#allocation4], 1

// kernel: model_forward.9
$region0: #{model_forward.9}
  #allocation0 [shape = 'u32[]', space=smem, size = 0x4, offset = 0x4, fixed_abs, tag = 'smem constant byte address 0x4 - core index']
  #allocation1 [shape = 'u32[144,128]{1,0:T(1,128)}', space=vmem, size = 0x12000, scoped, tag = 'internal scratch']
  %s0 = inlined_call_operand.hbm [shape: bf16[16,32], index: 0, kind: input, shape index: {}]
  %s1 = inlined_call_operand.hbm [shape: bf16[32,128], index: 1, kind: input, shape index: {}]
  %s2 = inlined_call_operand.hbm [shape: f32[1,128], index: 2, kind: input, shape index: {}]
  %s3 = inlined_call_operand.hbm [shape: f32[16,128], index: 3, kind: output, shape index: {}]
  %s4 = sld [smem:[#allocation0]]
  $region34: #{model_forward.9} parent=0
    _
  %s6 = ssub.s32 1, %s4
  %s7 = scalar_select 0, %s6, %s4
  $region1: #{model_forward.9} parent=0
    #allocation2 [shape = 'u8[4096]{0}', space=vmem, size = 0x1000, scoped, tag = 'input window, operand 0, single buffered']
    #allocation3 [shape = 's32[1]{0}', space=sflag, size = 0x4, scoped, tag = 'scoped memory for model_forward.9']
    #allocation4 [shape = 's32[1]{0}', space=sflag, size = 0x4, scoped, tag = 'scoped memory for model_forward.9']
    #allocation5 [shape = 'u8[8192]{0}', space=vmem, size = 0x2000, scoped, tag = 'input window, operand 1, single buffered']
    #allocation6 [shape = 's32[1]{0}', space=sflag, size = 0x4, scoped, tag = 'scoped memory for model_forward.9']
    #allocation7 [shape = 'u8[512]{0}', space=vmem, size = 0x400, scoped, tag = 'input window, operand 2, single buffered']
    #allocation8 [shape = 'u8[8192]{0}', space=vmem, size = 0x2000, scoped, tag = 'output window, operand 0, single buffered']
    %8 = vsyncpa [#allocation3], 0
    %9 = vsyncpa [#allocation6], 0
    %10 = vsyncpa [#allocation4], 0
    // Predicated region
    $region2: #{model_forward.9} parent=1 // pred_check
      _
    $region3: #{model_forward.9} parent=1 // pred_check_branch
      %12 = sbr.rel (0) target = $region5
    $region4: #{model_forward.9} parent=1 // pred_region
      %s14 = ssub.s32 128, 128
      %15 = vsyncadd [#allocation3], %s14
      %s16 = sshll.u32 [#allocation2], 4
      %s17 = int_to_ptr.vmem [resolvable:$true] %s16
      %22 = dma.hbm_to_vmem [thread:$0]  %s0, 128, %s17, [#allocation3], 64, 64, 4
    $region5: #{model_forward.9} parent=1 // pred_fallthru
      _
    // Predicated region
    $region6: #{model_forward.9} parent=1 // pred_check
      _
    $region7: #{model_forward.9} parent=1 // pred_check_branch
      %24 = sbr.rel (0) target = $region9
    $region8: #{model_forward.9} parent=1 // pred_region
      %s26 = ssub.s32 256, 256
      %27 = vsyncadd [#allocation6], %s26
      %s28 = sshll.u32 [#allocation5], 4
      %s29 = int_to_ptr.vmem [resolvable:$true] %s28
      %34 = dma.hbm_to_vmem [thread:$0]  %s1, 256, %s29, [#allocation6], 64, 64, 4
    $region9: #{model_forward.9} parent=1 // pred_fallthru
      _
    // Predicated region
    $region10: #{model_forward.9} parent=1 // pred_check
      _
    $region11: #{model_forward.9} parent=1 // pred_check_branch
      %36 = sbr.rel (0) target = $region13
    $region12: #{model_forward.9} parent=1 // pred_region
      %s38 = ssub.s32 16, 16
      %39 = vsyncadd [#allocation6], %s38
      %s41 = sshll.u32 [#allocation7], 4
      %s42 = int_to_ptr.vmem [resolvable:$true] %s41
      %44 = dma.hbm_to_vmem [thread:$0]  %s2, 16, %s42, [#allocation6]
    $region13: #{model_forward.9} parent=1 // pred_fallthru
      _
    // Predicated region
    $region14: #{model_forward.9} parent=1 // pred_check
      _
    $region15: #{model_forward.9} parent=1 // pred_check_branch
      %46 = sbr.rel (0) target = $region17
    $region16: #{model_forward.9} parent=1 // pred_region
      %47 = dma.done [#allocation3], 128
    $region17: #{model_forward.9} parent=1 // pred_fallthru
      _
    // Predicated region
    $region18: #{model_forward.9} parent=1 // pred_check
      _
    $region19: #{model_forward.9} parent=1 // pred_check_branch
      %49 = sbr.rel (0) target = $region21
    $region20: #{model_forward.9} parent=1 // pred_region
      %50 = dma.done [#allocation6], 256
    $region21: #{model_forward.9} parent=1 // pred_fallthru
      _
    // Predicated region
    $region22: #{model_forward.9} parent=1 // pred_check
      _
    $region23: #{model_forward.9} parent=1 // pred_check_branch
      %52 = sbr.rel (0) target = $region25
    $region24: #{model_forward.9} parent=1 // pred_region
      %53 = dma.done [#allocation6], 16
    $region25: #{model_forward.9} parent=1 // pred_fallthru
      _
    %v55 = vld [vmem:[#allocation2] sm:$0xf]
    %v56 = vld [vmem:[#allocation2 + $0x4] sm:$0xf]
    %v57 = vld [vmem:[#allocation5] sm:$0xf]
    %v58 = vld [vmem:[#allocation5 + $0x4] sm:$0xf]
    %v59 = vld [vmem:[#allocation5 + $0x8] sm:$0xf]
    %v60 = vld [vmem:[#allocation5 + $0xc] sm:$0xf]
    %v61 = vld [vmem:[#allocation7] sm:$0x1]
    %v63 = vlaneseq
    %v64 = vshrl.u32 %v63, 7
    %v65 = vsub.s32 0, %v64
    %v66 = vrot.slane %v61, %v65
    %v70 = vunpack.c.l.b16 %v55
    %v71 = vunpack.c.l.b16 %v56
    %v72 = vpack.c.b16 %v71, %v70
    %v77 = vunpack.c.l.b16 %v57
    %v78 = vunpack.c.l.b16 %v58
    %v79 = vunpack.c.l.b16 %v59
    %v80 = vunpack.c.l.b16 %v60
    %v81 = vpack.c.b16 %v78, %v77
    %v82 = vpack.c.b16 %v80, %v79
    %vm85 = vcmask 261120
    %v87 = vsel %vm85, %v72, 0
    %89 = vmatprep.subr.bf16.mxu0 0
    %90 = vmatpush1.bf16.msra.mxu0 %v81
    %91 = vmatprep.subr.bf16.mxu0 0
    %92 = vmatpush1.bf16.msra.mxu0 %v82
    %93 = vmatprep.subr.bf16.mxu0 0
    %94 = vmatpush1.bf16.msra.mxu0 0
    %95 = vmatprep.subr.bf16.mxu0 0
    %96 = vmatpush1.bf16.msra.mxu0 0
    %97 = vmatprep.subr.bf16.mxu0 0
    %98 = vmatpush1.bf16.msra.mxu0 0
    %99 = vmatprep.subr.bf16.mxu0 0
    %100 = vmatpush1.bf16.msra.mxu0 0
    %101 = vmatprep.subr.bf16.mxu0 0
    %102 = vmatpush1.bf16.msra.mxu0 0
    %103 = vmatprep.subr.bf16.mxu0 0
    %104 = vmatpush1.bf16.msra.mxu0 0
    %105 = vmatprep.subr.bf16.mxu0 0
    %106 = vmatpush1.bf16.msra.mxu0 0
    %107 = vmatprep.subr.bf16.mxu0 0
    %108 = vmatpush1.bf16.msra.mxu0 0
    %109 = vmatprep.subr.bf16.mxu0 0
    %110 = vmatpush1.bf16.msra.mxu0 0
    %111 = vmatprep.subr.bf16.mxu0 0
    %112 = vmatpush1.bf16.msra.mxu0 0
    %113 = vmatprep.subr.bf16.mxu0 0
    %114 = vmatpush1.bf16.msra.mxu0 0
    %115 = vmatprep.subr.bf16.mxu0 0
    %116 = vmatpush1.bf16.msra.mxu0 0
    %117 = vmatprep.subr.bf16.mxu0 0
    %118 = vmatpush1.bf16.msra.mxu0 0
    %119 = vmatprep.subr.bf16.mxu0 0
    %120 = vmatpush1.bf16.msra.mxu0 0
    %121 = vmatprep.mubr.bf16.mxu0 0
    %122 = vmatmul.mubr.bf16.gmra.mrb[0].mxu0 %v87
    %v123 = vpop.f32.mrb[0].mxu0
    %v124 = vadd.f32 %v66, %v123
    %v125 = vpop.f32.mrb[0].mxu0
    %v126 = vpop.f32.mrb[0].mxu0
    %v127 = vadd.f32 %v66, %v126
    %v128 = vpop.f32.mrb[0].mxu0
    %129 = vdwg.mxu0
    %130 = vst [vmem:[#allocation8] sm:$0xff] %v124
    %131 = vst [vmem:[#allocation8 + $0x8] sm:$0xff] %v127
    // Predicated region
    $region26: #{model_forward.9} parent=1 // pred_check
      _
    $region27: #{model_forward.9} parent=1 // pred_check_branch
      %133 = sbr.rel (0) target = $region29
    $region28: #{model_forward.9} parent=1 // pred_region
      %s135 = ssub.s32 256, 256
      %136 = vsyncadd [#allocation4], %s135
      %s137 = sshll.u32 [#allocation8], 4
      %s138 = int_to_ptr.vmem [resolvable:$true] %s137
      %143 = dma.vmem_to_hbm [thread:$0]  %s138, 256, %s3, [#allocation4], 128, 128, 8
    $region29: #{model_forward.9} parent=1 // pred_fallthru
      _
    // Predicated region
    $region30: #{model_forward.9} parent=1 // pred_check
      _
    $region31: #{model_forward.9} parent=1 // pred_check_branch
      %145 = sbr.rel (0) target = $region33
    $region32: #{model_forward.9} parent=1 // pred_region
      %146 = dma.done [#allocation4], 256
    $region33: #{model_forward.9} parent=1 // pred_fallthru
      _
    %147 = vsyncpa [#allocation3], 1
    %148 = vsyncpa [#allocation6], 1
    %149 = vsyncpa [#allocation4], 1

// kernel: model_forward.6
$region0: #{model_forward.6}
  #allocation0 [shape = 'u32[]', space=smem, size = 0x4, offset = 0x4, fixed_abs, tag = 'smem constant byte address 0x4 - core index']
  #allocation1 [shape = 'u32[144,128]{1,0:T(1,128)}', space=vmem, size = 0x12000, scoped, tag = 'internal scratch']
  #allocation2 [shape = 'bf16[128,512]{1,0:T(16,128)(2,1)}', space=vmem, size = 0x20000, scoped, tag = 'scratch operand']
  #allocation3 [shape = 'f32[8,128]{1,0:T(8,128)}', space=vmem, size = 0x1000, scoped, tag = 'scratch operand']
  #allocation4 [shape = 'f32[8,128]{1,0:T(8,128)}', space=vmem, size = 0x1000, scoped, tag = 'scratch operand']
  #allocation5 [shape = 's32[1]{0}', space=sflag, size = 0x4, scoped, tag = 'scratch operand']
  #allocation16 [shape = 's32[]', space=sflag, size = 0x4, offset = 0, fixed_abs, tag = 'sflag constant byte address 0x0 - dummy sync flag']
  %s0 = inlined_call_operand.hbm [shape: bf16[8,8,512], index: 0, kind: input, shape index: {}]
  %s1 = inlined_call_operand.hbm [shape: f32[8,128], index: 1, kind: input, shape index: {}, may-alias: {1,2}]
  %s2 = inlined_call_operand.hbm [shape: f32[8,128], index: 2, kind: input, shape index: {}, may-alias: {1,2}]
  %s3 = inlined_call_operand.hbm [shape: bf16[128,512], index: 3, kind: input, shape index: {}]
  %s4 = inlined_call_operand.hbm [shape: f32[8,8,128], index: 4, kind: output, shape index: {0}]
  %s5 = inlined_call_operand.hbm [shape: f32[8,128], index: 5, kind: output, shape index: {1}]
  %s6 = inlined_call_operand.hbm [shape: f32[8,128], index: 6, kind: output, shape index: {2}]
  %7 = xla_tuple %s4, %s5, %s6
  %s8 = sld [smem:[#allocation0]]
  $region58: #{model_forward.6} parent=0
    _
  %s10 = ssub.s32 1, %s8
  %s11 = scalar_select 0, %s10, %s8
  $region1: #{model_forward.6} parent=0
    #allocation6 [shape = 'u8[65536]{0}', space=vmem, size = 0x10000, scoped, tag = 'input window, operand 0, single buffered']
    #allocation7 [shape = 's32[1]{0}', space=sflag, size = 0x4, scoped, tag = 'scoped memory for model_forward.6']
    #allocation8 [shape = 's32[1]{0}', space=sflag, size = 0x4, scoped, tag = 'scoped memory for model_forward.6']
    #allocation9 [shape = 'u8[4096]{0}', space=vmem, size = 0x1000, scoped, tag = 'input window, operand 1, single buffered']
    #allocation10 [shape = 's32[1]{0}', space=sflag, size = 0x4, scoped, tag = 'scoped memory for model_forward.6']
    #allocation11 [shape = 'u8[4096]{0}', space=vmem, size = 0x1000, scoped, tag = 'input window, operand 2, single buffered']
    #allocation12 [shape = 'u8[32768]{0}', space=vmem, size = 0x8000, scoped, tag = 'output window, operand 0, single buffered']
    #allocation13 [shape = 'u8[4096]{0}', space=vmem, size = 0x1000, scoped, tag = 'output window, operand 1, single buffered']
    #allocation14 [shape = 's32[1]{0}', space=sflag, size = 0x4, scoped, tag = 'scoped memory for model_forward.6']
    #allocation15 [shape = 'u8[4096]{0}', space=vmem, size = 0x1000, scoped, tag = 'output window, operand 2, single buffered']
    %12 = vsyncpa [#allocation7], 0
    %13 = vsyncpa [#allocation10], 0
    %14 = vsyncpa [#allocation8], 0
    %15 = vsyncpa [#allocation14], 0
    // Predicated region
    $region2: #{model_forward.6} parent=1 // pred_check
      _
    $region3: #{model_forward.6} parent=1 // pred_check_branch
      %17 = sbr.rel (0) target = $region5
    $region4: #{model_forward.6} parent=1 // pred_region
      %s19 = ssub.s32 2048, 2048
      %20 = vsyncadd [#allocation7], %s19
      %s21 = sshll.u32 [#allocation6], 4
      %s22 = int_to_ptr.vmem [resolvable:$true] %s21
      %27 = dma.hbm_to_vmem [thread:$0]  %s0, 2048, %s22, [#allocation7], 256, 256, 16
    $region5: #{model_forward.6} parent=1 // pred_fallthru
      _
    // Predicated region
    $region6: #{model_forward.6} parent=1 // pred_check
      _
    $region7: #{model_forward.6} parent=1 // pred_check_branch
      %29 = sbr.rel (0) target = $region9
    $region8: #{model_forward.6} parent=1 // pred_region
      %s31 = ssub.s32 128, 128
      %32 = vsyncadd [#allocation10], %s31
      %s34 = sshll.u32 [#allocation9], 4
      %s35 = int_to_ptr.vmem [resolvable:$true] %s34
      %37 = dma.hbm_to_vmem [thread:$0]  %s1, 128, %s35, [#allocation10]
    $region9: #{model_forward.6} parent=1 // pred_fallthru
      _
    // Predicated region
    $region10: #{model_forward.6} parent=1 // pred_check
      _
    $region11: #{model_forward.6} parent=1 // pred_check_branch
      %39 = sbr.rel (0) target = $region13
    $region12: #{model_forward.6} parent=1 // pred_region
      %s41 = ssub.s32 128, 128
      %42 = vsyncadd [#allocation10], %s41
      %s44 = sshll.u32 [#allocation11], 4
      %s45 = int_to_ptr.vmem [resolvable:$true] %s44
      %47 = dma.hbm_to_vmem [thread:$0]  %s2, 128, %s45, [#allocation10]
    $region13: #{model_forward.6} parent=1 // pred_fallthru
      _
    // Predicated region
    $region14: #{model_forward.6} parent=1 // pred_check
      _
    $region15: #{model_forward.6} parent=1 // pred_check_branch
      %49 = sbr.rel (0) target = $region17
    $region16: #{model_forward.6} parent=1 // pred_region
      %50 = dma.done [#allocation7], 2048
    $region17: #{model_forward.6} parent=1 // pred_fallthru
      _
    // Predicated region
    $region18: #{model_forward.6} parent=1 // pred_check
      _
    $region19: #{model_forward.6} parent=1 // pred_check_branch
      %52 = sbr.rel (0) target = $region21
    $region20: #{model_forward.6} parent=1 // pred_region
      %53 = dma.done [#allocation10], 128
    $region21: #{model_forward.6} parent=1 // pred_fallthru
      _
    // Predicated region
    $region22: #{model_forward.6} parent=1 // pred_check
      _
    $region23: #{model_forward.6} parent=1 // pred_check_branch
      %55 = sbr.rel (0) target = $region25
    $region24: #{model_forward.6} parent=1 // pred_region
      %56 = dma.done [#allocation10], 128
    $region25: #{model_forward.6} parent=1 // pred_fallthru
      _
    %p58 = scmp.eq.s32.totalorder 0, 0
    // Predicated region
    $region26: #{model_forward.6} parent=1 // pred_check
      %p59 = pneg %p58
    $region27: #{model_forward.6} parent=1 // pred_check_branch
      %61 = sbr.rel (%p59) target = $region29
    $region28: #{model_forward.6} parent=1 // pred_region
      #allocation17 [shape = 'u32[9]{0}', space=smem, size = 0x24, scoped, tag = 'DMA stride descriptor']
      %s63 = sshll.u32 1, 14
      %s64 = sxor.u32 4294967295, %s63
      %s66 = sld [smem:[#allocation0]]
      %s67 = sadd.s32 2, %s66
      %s69 = sshll.u32 7, 26
      %s70 = sxor.u32 4294967295, %s69
      %s71 = sand.u32 0, %s70
      %s72 = sshll.u32 %s67, 26
      %s73 = sor.u32 %s71, %s72
      %s74 = sshll.u32 [#allocation2], 4
      %s75 = int_to_ptr.vmem [resolvable:$true] %s74
      %78 = sst [smem:[#allocation17]] 512
      %s79 = scalar_lea.smem [#allocation17], 1
      %80 = sst [smem:[%s79]] 512
      %s81 = scalar_lea.smem [#allocation17], 2
      %82 = sst [smem:[%s81]] 4
      %s83 = scalar_lea.smem [#allocation17], 3
      %84 = sst [smem:[%s83]] 64
      %s85 = scalar_lea.smem [#allocation17], 4
      %86 = sst [smem:[%s85]] 128
      %s87 = scalar_lea.smem [#allocation17], 5
      %88 = sst [smem:[%s87]] 2
      %s89 = scalar_lea.smem [#allocation17], 6
      %90 = sst [smem:[%s89]] 256
      %s91 = scalar_lea.smem [#allocation17], 7
      %92 = sst [smem:[%s91]] 64
      %s93 = scalar_lea.smem [#allocation17], 8
      %94 = sst [smem:[%s93]] 4
      %96 = dma.general %s3, 4096, %s75, [#allocation5], [#allocation16], [#allocation17], %s73, 0
      %s97 = smul.u32 4, 16
      %s98 = smul.u32 %s97, 4
      %s99 = sshll.u32 %s98, 4
      %100 = dma.done [#allocation5], %s99
      %v101 = vld [vmem:[#allocation9] sm:$0xff]
      %102 = vst [vmem:[#allocation3] sm:$0xff] %v101
      %v103 = vld [vmem:[#allocation11] sm:$0xff]
      %104 = vst [vmem:[#allocation4] sm:$0xff] %v103
    $region29: #{model_forward.6} parent=1 // pred_fallthru
      _
    %v105 = vld [vmem:[#allocation2] sm:$0xff]
    %v106 = vld [vmem:[#allocation2 + $0x8] sm:$0xff]
    %v107 = vld [vmem:[#allocation2 + $0x10] sm:$0xff]
    %v108 = vld [vmem:[#allocation2 + $0x18] sm:$0xff]
    %v109 = vld [vmem:[#allocation2 + $0x20] sm:$0xff]
    %v110 = vld [vmem:[#allocation2 + $0x28] sm:$0xff]
    %v111 = vld [vmem:[#allocation2 + $0x30] sm:$0xff]
    %v112 = vld [vmem:[#allocation2 + $0x38] sm:$0xff]
    %v113 = vld [vmem:[#allocation2 + $0x40] sm:$0xff]
    %v114 = vld [vmem:[#allocation2 + $0x48] sm:$0xff]
    %v115 = vld [vmem:[#allocation2 + $0x50] sm:$0xff]
    %v116 = vld [vmem:[#allocation2 + $0x58] sm:$0xff]
    %v117 = vld [vmem:[#allocation2 + $0x60] sm:$0xff]
    %v118 = vld [vmem:[#allocation2 + $0x68] sm:$0xff]
    %v119 = vld [vmem:[#allocation2 + $0x70] sm:$0xff]
    %v120 = vld [vmem:[#allocation2 + $0x78] sm:$0xff]
    %v121 = vld [vmem:[#allocation2 + $0x80] sm:$0xff]
    %v122 = vld [vmem:[#allocation2 + $0x88] sm:$0xff]
    %v123 = vld [vmem:[#allocation2 + $0x90] sm:$0xff]
    %v124 = vld [vmem:[#allocation2 + $0x98] sm:$0xff]
    %v125 = vld [vmem:[#allocation2 + $0xa0] sm:$0xff]
    %v126 = vld [vmem:[#allocation2 + $0xa8] sm:$0xff]
    %v127 = vld [vmem:[#allocation2 + $0xb0] sm:$0xff]
    %v128 = vld [vmem:[#allocation2 + $0xb8] sm:$0xff]
    %v129 = vld [vmem:[#allocation2 + $0xc0] sm:$0xff]
    %v130 = vld [vmem:[#allocation2 + $0xc8] sm:$0xff]
    %v131 = vld [vmem:[#allocation2 + $0xd0] sm:$0xff]
    %v132 = vld [vmem:[#allocation2 + $0xd8] sm:$0xff]
    %v133 = vld [vmem:[#allocation2 + $0xe0] sm:$0xff]
    %v134 = vld [vmem:[#allocation2 + $0xe8] sm:$0xff]
    %v135 = vld [vmem:[#allocation2 + $0xf0] sm:$0xff]
    %v136 = vld [vmem:[#allocation2 + $0xf8] sm:$0xff]
    %v137 = vld [vmem:[#allocation3] sm:$0xff]
    %v138 = vld [vmem:[#allocation4] sm:$0xff]
    %v139 = vld [vmem:[#allocation6] sm:$0xff]
    %v140 = vld [vmem:[#allocation6 + $0x8] sm:$0xff]
    %v141 = vunpack.c.l.bf16 %v139
    %v142 = vunpack.c.h.bf16 %v139
    %v143 = vunpack.c.l.bf16 %v140
    %v144 = vunpack.c.h.bf16 %v140
    %v145 = vpack.c.bf16 %v137, %v137
    %146 = vmatprep.subr.bf16.mxu0 %v106
    %147 = vmatpush1.bf16.msra.mxu0 %v105
    %148 = vmatprep.subr.bf16.mxu0 %v110
    %149 = vmatpush1.bf16.msra.mxu0 %v109
    %150 = vmatprep.subr.bf16.mxu0 %v114
    %151 = vmatpush1.bf16.msra.mxu0 %v113
    %152 = vmatprep.subr.bf16.mxu0 %v118
    %153 = vmatpush1.bf16.msra.mxu0 %v117
    %154 = vmatprep.subr.bf16.mxu0 %v122
    %155 = vmatpush1.bf16.msra.mxu0 %v121
    %156 = vmatprep.subr.bf16.mxu0 %v126
    %157 = vmatpush1.bf16.msra.mxu0 %v125
    %158 = vmatprep.subr.bf16.mxu0 %v130
    %159 = vmatpush1.bf16.msra.mxu0 %v129
    %160 = vmatprep.subr.bf16.mxu0 %v134
    %161 = vmatpush1.bf16.msra.mxu0 %v133
    %162 = vmatprep.subr.bf16.mxu0 0
    %163 = vmatpush1.bf16.msra.mxu0 0
    %164 = vmatprep.subr.bf16.mxu0 0
    %165 = vmatpush1.bf16.msra.mxu0 0
    %166 = vmatprep.subr.bf16.mxu0 0
    %167 = vmatpush1.bf16.msra.mxu0 0
    %168 = vmatprep.subr.bf16.mxu0 0
    %169 = vmatpush1.bf16.msra.mxu0 0
    %170 = vmatprep.subr.bf16.mxu0 0
    %171 = vmatpush1.bf16.msra.mxu0 0
    %172 = vmatprep.subr.bf16.mxu0 0
    %173 = vmatpush1.bf16.msra.mxu0 0
    %174 = vmatprep.subr.bf16.mxu0 0
    %175 = vmatpush1.bf16.msra.mxu0 0
    %176 = vmatprep.subr.bf16.mxu0 0
    %177 = vmatpush1.bf16.msra.mxu0 0
    %178 = vmatprep.mubr.bf16.mxu0 0
    %179 = vmatmul.mubr.bf16.gmra.mrb[0].mxu0 %v145
    %v180 = vpop.f32.mrb[0].mxu0
    %v181 = vadd.f32 0.0, %v180
    %v182 = vpop.f32.mrb[0].mxu0
    %v183 = vadd.f32 0.0, %v182
    %v184 = vpop.f32.mrb[0].mxu0
    %v185 = vpop.f32.mrb[0].mxu0
    %186 = vdwg.mxu0
    %187 = vmatprep.subr.bf16.mxu0 %v108
    %188 = vmatpush1.bf16.msra.mxu0 %v107
    %189 = vmatprep.subr.bf16.mxu0 %v112
    %190 = vmatpush1.bf16.msra.mxu0 %v111
    %191 = vmatprep.subr.bf16.mxu0 %v116
    %192 = vmatpush1.bf16.msra.mxu0 %v115
    %193 = vmatprep.subr.bf16.mxu0 %v120
    %194 = vmatpush1.bf16.msra.mxu0 %v119
    %195 = vmatprep.subr.bf16.mxu0 %v124
    %196 = vmatpush1.bf16.msra.mxu0 %v123
    %197 = vmatprep.subr.bf16.mxu0 %v128
    %198 = vmatpush1.bf16.msra.mxu0 %v127
    %199 = vmatprep.subr.bf16.mxu0 %v132
    %200 = vmatpush1.bf16.msra.mxu0 %v131
    %201 = vmatprep.subr.bf16.mxu0 %v136
    %202 = vmatpush1.bf16.msra.mxu0 %v135
    %203 = vmatprep.subr.bf16.mxu0 0
    %204 = vmatpush1.bf16.msra.mxu0 0
    %205 = vmatprep.subr.bf16.mxu0 0
    %206 = vmatpush1.bf16.msra.mxu0 0
    %207 = vmatprep.subr.bf16.mxu0 0
    %208 = vmatpush1.bf16.msra.mxu0 0
    %209 = vmatprep.subr.bf16.mxu0 0
    %210 = vmatpush1.bf16.msra.mxu0 0
    %211 = vmatprep.subr.bf16.mxu0 0
    %212 = vmatpush1.bf16.msra.mxu0 0
    %213 = vmatprep.subr.bf16.mxu0 0
    %214 = vmatpush1.bf16.msra.mxu0 0
    %215 = vmatprep.subr.bf16.mxu0 0
    %216 = vmatpush1.bf16.msra.mxu0 0
    %217 = vmatprep.subr.bf16.mxu0 0
    %218 = vmatpush1.bf16.msra.mxu0 0
    %219 = vmatprep.mubr.bf16.mxu0 0
    %220 = vmatmul.mubr.bf16.gmra.mrb[0].mxu0 %v145
    %v221 = vpop.f32.mrb[0].mxu0
    %v222 = vadd.f32 0.0, %v221
    %v223 = vpop.f32.mrb[0].mxu0
    %v224 = vadd.f32 0.0, %v223
    %v225 = vpop.f32.mrb[0].mxu0
    %v226 = vpop.f32.mrb[0].mxu0
    %227 = vdwg.mxu0
    %v228 = vadd.f32 %v141, %v181
    %v229 = vadd.f32 %v142, %v183
    %v230 = vadd.f32 %v143, %v222
    %v231 = vadd.f32 %v144, %v224
    %v232 = vxor.u32 %v228, 2147483648
    %v233 = vmul.f32 %v232, 1.442695
    %v234 = vpow.pop %v233
    %v235 = vadd.f32 %v234, 1.0
    %v236 = vrcp.pop %v235
    %v237 = vmul.f32 1.0, %v236
    %v238 = vxor.u32 %v229, 2147483648
    %v239 = vmul.f32 %v238, 1.442695
    %v240 = vpow.pop %v239
    %v241 = vadd.f32 %v240, 1.0
    %v242 = vrcp.pop %v241
    %v243 = vmul.f32 1.0, %v242
    %v244 = vtanh.pop %v230
    %v245 = vxor.u32 %v231, 2147483648
    %v246 = vmul.f32 %v245, 1.442695
    %v247 = vpow.pop %v246
    %v248 = vadd.f32 %v247, 1.0
    %v249 = vrcp.pop %v248
    %v250 = vmul.f32 1.0, %v249
    %v251 = vmul.f32 %v243, %v138
    %v252 = vmul.f32 %v237, %v244
    %v253 = vadd.f32 %v251, %v252
    %v254 = vtanh.pop %v253
    %v255 = vmul.f32 %v250, %v254
    %256 = vst [vmem:[#allocation12] sm:$0xff] %v255
    %s257 = scalar_lea.vmem [#allocation6], 16
    %v258 = vld [vmem:[%s257] sm:$0xff]
    %v259 = vld [vmem:[%s257 + $0x8] sm:$0xff]
    %v260 = vunpack.c.l.bf16 %v258
    %v261 = vunpack.c.h.bf16 %v258
    %v262 = vunpack.c.l.bf16 %v259
    %v263 = vunpack.c.h.bf16 %v259
    %v264 = vpack.c.bf16 %v255, %v255
    %265 = vmatprep.subr.bf16.mxu0 %v106
    %266 = vmatpush1.bf16.msra.mxu0 %v105
    %267 = vmatprep.subr.bf16.mxu0 %v110
    %268 = vmatpush1.bf16.msra.mxu0 %v109
    %269 = vmatprep.subr.bf16.mxu0 %v114
    %270 = vmatpush1.bf16.msra.mxu0 %v113
    %271 = vmatprep.subr.bf16.mxu0 %v118
    %272 = vmatpush1.bf16.msra.mxu0 %v117
    %273 = vmatprep.subr.bf16.mxu0 %v122
    %274 = vmatpush1.bf16.msra.mxu0 %v121
    %275 = vmatprep.subr.bf16.mxu0 %v126
    %276 = vmatpush1.bf16.msra.mxu0 %v125
    %277 = vmatprep.subr.bf16.mxu0 %v130
    %278 = vmatpush1.bf16.msra.mxu0 %v129
    %279 = vmatprep.subr.bf16.mxu0 %v134
    %280 = vmatpush1.bf16.msra.mxu0 %v133
    %281 = vmatprep.subr.bf16.mxu0 0
    %282 = vmatpush1.bf16.msra.mxu0 0
    %283 = vmatprep.subr.bf16.mxu0 0
    %284 = vmatpush1.bf16.msra.mxu0 0
    %285 = vmatprep.subr.bf16.mxu0 0
    %286 = vmatpush1.bf16.msra.mxu0 0
    %287 = vmatprep.subr.bf16.mxu0 0
    %288 = vmatpush1.bf16.msra.mxu0 0
    %289 = vmatprep.subr.bf16.mxu0 0
    %290 = vmatpush1.bf16.msra.mxu0 0
    %291 = vmatprep.subr.bf16.mxu0 0
    %292 = vmatpush1.bf16.msra.mxu0 0
    %293 = vmatprep.subr.bf16.mxu0 0
    %294 = vmatpush1.bf16.msra.mxu0 0
    %295 = vmatprep.subr.bf16.mxu0 0
    %296 = vmatpush1.bf16.msra.mxu0 0
    %297 = vmatprep.mubr.bf16.mxu0 0
    %298 = vmatmul.mubr.bf16.gmra.mrb[0].mxu0 %v264
    %v299 = vpop.f32.mrb[0].mxu0
    %v300 = vadd.f32 0.0, %v299
    %v301 = vpop.f32.mrb[0].mxu0
    %v302 = vadd.f32 0.0, %v301
    %v303 = vpop.f32.mrb[0].mxu0
    %v304 = vpop.f32.mrb[0].mxu0
    %305 = vdwg.mxu0
    %306 = vmatprep.subr.bf16.mxu0 %v108
    %307 = vmatpush1.bf16.msra.mxu0 %v107
    %308 = vmatprep.subr.bf16.mxu0 %v112
    %309 = vmatpush1.bf16.msra.mxu0 %v111
    %310 = vmatprep.subr.bf16.mxu0 %v116
    %311 = vmatpush1.bf16.msra.mxu0 %v115
    %312 = vmatprep.subr.bf16.mxu0 %v120
    %313 = vmatpush1.bf16.msra.mxu0 %v119
    %314 = vmatprep.subr.bf16.mxu0 %v124
    %315 = vmatpush1.bf16.msra.mxu0 %v123
    %316 = vmatprep.subr.bf16.mxu0 %v128
    %317 = vmatpush1.bf16.msra.mxu0 %v127
    %318 = vmatprep.subr.bf16.mxu0 %v132
    %319 = vmatpush1.bf16.msra.mxu0 %v131
    %320 = vmatprep.subr.bf16.mxu0 %v136
    %321 = vmatpush1.bf16.msra.mxu0 %v135
    %322 = vmatprep.subr.bf16.mxu0 0
    %323 = vmatpush1.bf16.msra.mxu0 0
    %324 = vmatprep.subr.bf16.mxu0 0
    %325 = vmatpush1.bf16.msra.mxu0 0
    %326 = vmatprep.subr.bf16.mxu0 0
    %327 = vmatpush1.bf16.msra.mxu0 0
    %328 = vmatprep.subr.bf16.mxu0 0
    %329 = vmatpush1.bf16.msra.mxu0 0
    %330 = vmatprep.subr.bf16.mxu0 0
    %331 = vmatpush1.bf16.msra.mxu0 0
    %332 = vmatprep.subr.bf16.mxu0 0
    %333 = vmatpush1.bf16.msra.mxu0 0
    %334 = vmatprep.subr.bf16.mxu0 0
    %335 = vmatpush1.bf16.msra.mxu0 0
    %336 = vmatprep.subr.bf16.mxu0 0
    %337 = vmatpush1.bf16.msra.mxu0 0
    %338 = vmatprep.mubr.bf16.mxu0 0
    %339 = vmatmul.mubr.bf16.gmra.mrb[0].mxu0 %v264
    %v340 = vpop.f32.mrb[0].mxu0
    %v341 = vadd.f32 0.0, %v340
    %v342 = vpop.f32.mrb[0].mxu0
    %v343 = vadd.f32 0.0, %v342
    %v344 = vpop.f32.mrb[0].mxu0
    %v345 = vpop.f32.mrb[0].mxu0
    %346 = vdwg.mxu0
    %v347 = vadd.f32 %v260, %v300
    %v348 = vadd.f32 %v261, %v302
    %v349 = vadd.f32 %v262, %v341
    %v350 = vadd.f32 %v263, %v343
    %v351 = vxor.u32 %v347, 2147483648
    %v352 = vmul.f32 %v351, 1.442695
    %v353 = vpow.pop %v352
    %v354 = vadd.f32 %v353, 1.0
    %v355 = vrcp.pop %v354
    %v356 = vmul.f32 1.0, %v355
    %v357 = vxor.u32 %v348, 2147483648
    %v358 = vmul.f32 %v357, 1.442695
    %v359 = vpow.pop %v358
    %v360 = vadd.f32 %v359, 1.0
    %v361 = vrcp.pop %v360
    %v362 = vmul.f32 1.0, %v361
    %v363 = vtanh.pop %v349
    %v364 = vxor.u32 %v350, 2147483648
    %v365 = vmul.f32 %v364, 1.442695
    %v366 = vpow.pop %v365
    %v367 = vadd.f32 %v366, 1.0
    %v368 = vrcp.pop %v367
    %v369 = vmul.f32 1.0, %v368
    %v370 = vmul.f32 %v362, %v253
    %v371 = vmul.f32 %v356, %v363
    %v372 = vadd.f32 %v370, %v371
    %v373 = vtanh.pop %v372
    %v374 = vmul.f32 %v369, %v373
    %s375 = scalar_lea.vmem [#allocation12], 8
    %376 = vst [vmem:[%s375] sm:$0xff] %v374
    %s377 = scalar_lea.vmem [#allocation6], 32
    %v378 = vld [vmem:[%s377] sm:$0xff]
    %v379 = vld [vmem:[%s377 + $0x8] sm:$0xff]
    %v380 = vunpack.c.l.bf16 %v378
    %v381 = vunpack.c.h.bf16 %v378
    %v382 = vunpack.c.l.bf16 %v379
    %v383 = vunpack.c.h.bf16 %v379
    %v384 = vpack.c.bf16 %v374, %v374
    %385 = vmatprep.subr.bf16.mxu0 %v106
    %386 = vmatpush1.bf16.msra.mxu0 %v105
    %387 = vmatprep.subr.bf16.mxu0 %v110
    %388 = vmatpush1.bf16.msra.mxu0 %v109
    %389 = vmatprep.subr.bf16.mxu0 %v114
    %390 = vmatpush1.bf16.msra.mxu0 %v113
    %391 = vmatprep.subr.bf16.mxu0 %v118
    %392 = vmatpush1.bf16.msra.mxu0 %v117
    %393 = vmatprep.subr.bf16.mxu0 %v122
    %394 = vmatpush1.bf16.msra.mxu0 %v121
    %395 = vmatprep.subr.bf16.mxu0 %v126
    %396 = vmatpush1.bf16.msra.mxu0 %v125
    %397 = vmatprep.subr.bf16.mxu0 %v130
    %398 = vmatpush1.bf16.msra.mxu0 %v129
    %399 = vmatprep.subr.bf16.mxu0 %v134
    %400 = vmatpush1.bf16.msra.mxu0 %v133
    %401 = vmatprep.subr.bf16.mxu0 0
    %402 = vmatpush1.bf16.msra.mxu0 0
    %403 = vmatprep.subr.bf16.mxu0 0
    %404 = vmatpush1.bf16.msra.mxu0 0
    %405 = vmatprep.subr.bf16.mxu0 0
    %406 = vmatpush1.bf16.msra.mxu0 0
    %407 = vmatprep.subr.bf16.mxu0 0
    %408 = vmatpush1.bf16.msra.mxu0 0
    %409 = vmatprep.subr.bf16.mxu0 0
    %410 = vmatpush1.bf16.msra.mxu0 0
    %411 = vmatprep.subr.bf16.mxu0 0
    %412 = vmatpush1.bf16.msra.mxu0 0
    %413 = vmatprep.subr.bf16.mxu0 0
    %414 = vmatpush1.bf16.msra.mxu0 0
    %415 = vmatprep.subr.bf16.mxu0 0
    %416 = vmatpush1.bf16.msra.mxu0 0
    %417 = vmatprep.mubr.bf16.mxu0 0
    %418 = vmatmul.mubr.bf16.gmra.mrb[0].mxu0 %v384
    %v419 = vpop.f32.mrb[0].mxu0
    %v420 = vadd.f32 0.0, %v419
    %v421 = vpop.f32.mrb[0].mxu0
    %v422 = vadd.f32 0.0, %v421
    %v423 = vpop.f32.mrb[0].mxu0
    %v424 = vpop.f32.mrb[0].mxu0
    %425 = vdwg.mxu0
    %426 = vmatprep.subr.bf16.mxu0 %v108
    %427 = vmatpush1.bf16.msra.mxu0 %v107
    %428 = vmatprep.subr.bf16.mxu0 %v112
    %429 = vmatpush1.bf16.msra.mxu0 %v111
    %430 = vmatprep.subr.bf16.mxu0 %v116
    %431 = vmatpush1.bf16.msra.mxu0 %v115
    %432 = vmatprep.subr.bf16.mxu0 %v120
    %433 = vmatpush1.bf16.msra.mxu0 %v119
    %434 = vmatprep.subr.bf16.mxu0 %v124
    %435 = vmatpush1.bf16.msra.mxu0 %v123
    %436 = vmatprep.subr.bf16.mxu0 %v128
    %437 = vmatpush1.bf16.msra.mxu0 %v127
    %438 = vmatprep.subr.bf16.mxu0 %v132
    %439 = vmatpush1.bf16.msra.mxu0 %v131
    %440 = vmatprep.subr.bf16.mxu0 %v136
    %441 = vmatpush1.bf16.msra.mxu0 %v135
    %442 = vmatprep.subr.bf16.mxu0 0
    %443 = vmatpush1.bf16.msra.mxu0 0
    %444 = vmatprep.subr.bf16.mxu0 0
    %445 = vmatpush1.bf16.msra.mxu0 0
    %446 = vmatprep.subr.bf16.mxu0 0
    %447 = vmatpush1.bf16.msra.mxu0 0
    %448 = vmatprep.subr.bf16.mxu0 0
    %449 = vmatpush1.bf16.msra.mxu0 0
    %450 = vmatprep.subr.bf16.mxu0 0
    %451 = vmatpush1.bf16.msra.mxu0 0
    %452 = vmatprep.subr.bf16.mxu0 0
    %453 = vmatpush1.bf16.msra.mxu0 0
    %454 = vmatprep.subr.bf16.mxu0 0
    %455 = vmatpush1.bf16.msra.mxu0 0
    %456 = vmatprep.subr.bf16.mxu0 0
    %457 = vmatpush1.bf16.msra.mxu0 0
    %458 = vmatprep.mubr.bf16.mxu0 0
    %459 = vmatmul.mubr.bf16.gmra.mrb[0].mxu0 %v384
    %v460 = vpop.f32.mrb[0].mxu0
    %v461 = vadd.f32 0.0, %v460
    %v462 = vpop.f32.mrb[0].mxu0
    %v463 = vadd.f32 0.0, %v462
    %v464 = vpop.f32.mrb[0].mxu0
    %v465 = vpop.f32.mrb[0].mxu0
    %466 = vdwg.mxu0
    %v467 = vadd.f32 %v380, %v420
    %v468 = vadd.f32 %v381, %v422
    %v469 = vadd.f32 %v382, %v461
    %v470 = vadd.f32 %v383, %v463
    %v471 = vxor.u32 %v467, 2147483648
    %v472 = vmul.f32 %v471, 1.442695
    %v473 = vpow.pop %v472
    %v474 = vadd.f32 %v473, 1.0
    %v475 = vrcp.pop %v474
    %v476 = vmul.f32 1.0, %v475
    %v477 = vxor.u32 %v468, 2147483648
    %v478 = vmul.f32 %v477, 1.442695
    %v479 = vpow.pop %v478
    %v480 = vadd.f32 %v479, 1.0
    %v481 = vrcp.pop %v480
    %v482 = vmul.f32 1.0, %v481
    %v483 = vtanh.pop %v469
    %v484 = vxor.u32 %v470, 2147483648
    %v485 = vmul.f32 %v484, 1.442695
    %v486 = vpow.pop %v485
    %v487 = vadd.f32 %v486, 1.0
    %v488 = vrcp.pop %v487
    %v489 = vmul.f32 1.0, %v488
    %v490 = vmul.f32 %v482, %v372
    %v491 = vmul.f32 %v476, %v483
    %v492 = vadd.f32 %v490, %v491
    %v493 = vtanh.pop %v492
    %v494 = vmul.f32 %v489, %v493
    %s495 = scalar_lea.vmem [#allocation12], 16
    %496 = vst [vmem:[%s495] sm:$0xff] %v494
    %s497 = scalar_lea.vmem [#allocation6], 48
    %v498 = vld [vmem:[%s497] sm:$0xff]
    %v499 = vld [vmem:[%s497 + $0x8] sm:$0xff]
    %v500 = vunpack.c.l.bf16 %v498
    %v501 = vunpack.c.h.bf16 %v498
    %v502 = vunpack.c.l.bf16 %v499
    %v503 = vunpack.c.h.bf16 %v499
    %v504 = vpack.c.bf16 %v494, %v494
    %505 = vmatprep.subr.bf16.mxu0 %v106
    %506 = vmatpush1.bf16.msra.mxu0 %v105
    %507 = vmatprep.subr.bf16.mxu0 %v110
    %508 = vmatpush1.bf16.msra.mxu0 %v109
    %509 = vmatprep.subr.bf16.mxu0 %v114
    %510 = vmatpush1.bf16.msra.mxu0 %v113
    %511 = vmatprep.subr.bf16.mxu0 %v118
    %512 = vmatpush1.bf16.msra.mxu0 %v117
    %513 = vmatprep.subr.bf16.mxu0 %v122
    %514 = vmatpush1.bf16.msra.mxu0 %v121
    %515 = vmatprep.subr.bf16.mxu0 %v126
    %516 = vmatpush1.bf16.msra.mxu0 %v125
    %517 = vmatprep.subr.bf16.mxu0 %v130
    %518 = vmatpush1.bf16.msra.mxu0 %v129
    %519 = vmatprep.subr.bf16.mxu0 %v134
    %520 = vmatpush1.bf16.msra.mxu0 %v133
    %521 = vmatprep.subr.bf16.mxu0 0
    %522 = vmatpush1.bf16.msra.mxu0 0
    %523 = vmatprep.subr.bf16.mxu0 0
    %524 = vmatpush1.bf16.msra.mxu0 0
    %525 = vmatprep.subr.bf16.mxu0 0
    %526 = vmatpush1.bf16.msra.mxu0 0
    %527 = vmatprep.subr.bf16.mxu0 0
    %528 = vmatpush1.bf16.msra.mxu0 0
    %529 = vmatprep.subr.bf16.mxu0 0
    %530 = vmatpush1.bf16.msra.mxu0 0
    %531 = vmatprep.subr.bf16.mxu0 0
    %532 = vmatpush1.bf16.msra.mxu0 0
    %533 = vmatprep.subr.bf16.mxu0 0
    %534 = vmatpush1.bf16.msra.mxu0 0
    %535 = vmatprep.subr.bf16.mxu0 0
    %536 = vmatpush1.bf16.msra.mxu0 0
    %537 = vmatprep.mubr.bf16.mxu0 0
    %538 = vmatmul.mubr.bf16.gmra.mrb[0].mxu0 %v504
    %v539 = vpop.f32.mrb[0].mxu0
    %v540 = vadd.f32 0.0, %v539
    %v541 = vpop.f32.mrb[0].mxu0
    %v542 = vadd.f32 0.0, %v541
    %v543 = vpop.f32.mrb[0].mxu0
    %v544 = vpop.f32.mrb[0].mxu0
    %545 = vdwg.mxu0
    %546 = vmatprep.subr.bf16.mxu0 %v108
    %547 = vmatpush1.bf16.msra.mxu0 %v107
    %548 = vmatprep.subr.bf16.mxu0 %v112
    %549 = vmatpush1.bf16.msra.mxu0 %v111
    %550 = vmatprep.subr.bf16.mxu0 %v116
    %551 = vmatpush1.bf16.msra.mxu0 %v115
    %552 = vmatprep.subr.bf16.mxu0 %v120
    %553 = vmatpush1.bf16.msra.mxu0 %v119
    %554 = vmatprep.subr.bf16.mxu0 %v124
    %555 = vmatpush1.bf16.msra.mxu0 %v123
    %556 = vmatprep.subr.bf16.mxu0 %v128
    %557 = vmatpush1.bf16.msra.mxu0 %v127
    %558 = vmatprep.subr.bf16.mxu0 %v132
    %559 = vmatpush1.bf16.msra.mxu0 %v131
    %560 = vmatprep.subr.bf16.mxu0 %v136
    %561 = vmatpush1.bf16.msra.mxu0 %v135
    %562 = vmatprep.subr.bf16.mxu0 0
    %563 = vmatpush1.bf16.msra.mxu0 0
    %564 = vmatprep.subr.bf16.mxu0 0
    %565 = vmatpush1.bf16.msra.mxu0 0
    %566 = vmatprep.subr.bf16.mxu0 0
    %567 = vmatpush1.bf16.msra.mxu0 0
    %568 = vmatprep.subr.bf16.mxu0 0
    %569 = vmatpush1.bf16.msra.mxu0 0
    %570 = vmatprep.subr.bf16.mxu0 0
    %571 = vmatpush1.bf16.msra.mxu0 0
    %572 = vmatprep.subr.bf16.mxu0 0
    %573 = vmatpush1.bf16.msra.mxu0 0
    %574 = vmatprep.subr.bf16.mxu0 0
    %575 = vmatpush1.bf16.msra.mxu0 0
    %576 = vmatprep.subr.bf16.mxu0 0
    %577 = vmatpush1.bf16.msra.mxu0 0
    %578 = vmatprep.mubr.bf16.mxu0 0
    %579 = vmatmul.mubr.bf16.gmra.mrb[0].mxu0 %v504
    %v580 = vpop.f32.mrb[0].mxu0
    %v581 = vadd.f32 0.0, %v580
    %v582 = vpop.f32.mrb[0].mxu0
    %v583 = vadd.f32 0.0, %v582
    %v584 = vpop.f32.mrb[0].mxu0
    %v585 = vpop.f32.mrb[0].mxu0
    %586 = vdwg.mxu0
    %v587 = vadd.f32 %v500, %v540
    %v588 = vadd.f32 %v501, %v542
    %v589 = vadd.f32 %v502, %v581
    %v590 = vadd.f32 %v503, %v583
    %v591 = vxor.u32 %v587, 2147483648
    %v592 = vmul.f32 %v591, 1.442695
    %v593 = vpow.pop %v592
    %v594 = vadd.f32 %v593, 1.0
    %v595 = vrcp.pop %v594
    %v596 = vmul.f32 1.0, %v595
    %v597 = vxor.u32 %v588, 2147483648
    %v598 = vmul.f32 %v597, 1.442695
    %v599 = vpow.pop %v598
    %v600 = vadd.f32 %v599, 1.0
    %v601 = vrcp.pop %v600
    %v602 = vmul.f32 1.0, %v601
    %v603 = vtanh.pop %v589
    %v604 = vxor.u32 %v590, 2147483648
    %v605 = vmul.f32 %v604, 1.442695
    %v606 = vpow.pop %v605
    %v607 = vadd.f32 %v606, 1.0
    %v608 = vrcp.pop %v607
    %v609 = vmul.f32 1.0, %v608
    %v610 = vmul.f32 %v602, %v492
    %v611 = vmul.f32 %v596, %v603
    %v612 = vadd.f32 %v610, %v611
    %v613 = vtanh.pop %v612
    %v614 = vmul.f32 %v609, %v613
    %s615 = scalar_lea.vmem [#allocation12], 24
    %616 = vst [vmem:[%s615] sm:$0xff] %v614
    %s617 = scalar_lea.vmem [#allocation6], 64
    %v618 = vld [vmem:[%s617] sm:$0xff]
    %v619 = vld [vmem:[%s617 + $0x8] sm:$0xff]
    %v620 = vunpack.c.l.bf16 %v618
    %v621 = vunpack.c.h.bf16 %v618
    %v622 = vunpack.c.l.bf16 %v619
    %v623 = vunpack.c.h.bf16 %v619
    %v624 = vpack.c.bf16 %v614, %v614
    %625 = vmatprep.subr.bf16.mxu0 %v106
    %626 = vmatpush1.bf16.msra.mxu0 %v105
    %627 = vmatprep.subr.bf16.mxu0 %v110
    %628 = vmatpush1.bf16.msra.mxu0 %v109
    %629 = vmatprep.subr.bf16.mxu0 %v114
    %630 = vmatpush1.bf16.msra.mxu0 %v113
    %631 = vmatprep.subr.bf16.mxu0 %v118
    %632 = vmatpush1.bf16.msra.mxu0 %v117
    %633 = vmatprep.subr.bf16.mxu0 %v122
    %634 = vmatpush1.bf16.msra.mxu0 %v121
    %635 = vmatprep.subr.bf16.mxu0 %v126
    %636 = vmatpush1.bf16.msra.mxu0 %v125
    %637 = vmatprep.subr.bf16.mxu0 %v130
    %638 = vmatpush1.bf16.msra.mxu0 %v129
    %639 = vmatprep.subr.bf16.mxu0 %v134
    %640 = vmatpush1.bf16.msra.mxu0 %v133
    %641 = vmatprep.subr.bf16.mxu0 0
    %642 = vmatpush1.bf16.msra.mxu0 0
    %643 = vmatprep.subr.bf16.mxu0 0
    %644 = vmatpush1.bf16.msra.mxu0 0
    %645 = vmatprep.subr.bf16.mxu0 0
    %646 = vmatpush1.bf16.msra.mxu0 0
    %647 = vmatprep.subr.bf16.mxu0 0
    %648 = vmatpush1.bf16.msra.mxu0 0
    %649 = vmatprep.subr.bf16.mxu0 0
    %650 = vmatpush1.bf16.msra.mxu0 0
    %651 = vmatprep.subr.bf16.mxu0 0
    %652 = vmatpush1.bf16.msra.mxu0 0
    %653 = vmatprep.subr.bf16.mxu0 0
    %654 = vmatpush1.bf16.msra.mxu0 0
    %655 = vmatprep.subr.bf16.mxu0 0
    %656 = vmatpush1.bf16.msra.mxu0 0
    %657 = vmatprep.mubr.bf16.mxu0 0
    %658 = vmatmul.mubr.bf16.gmra.mrb[0].mxu0 %v624
    %v659 = vpop.f32.mrb[0].mxu0
    %v660 = vadd.f32 0.0, %v659
    %v661 = vpop.f32.mrb[0].mxu0
    %v662 = vadd.f32 0.0, %v661
    %v663 = vpop.f32.mrb[0].mxu0
    %v664 = vpop.f32.mrb[0].mxu0
    %665 = vdwg.mxu0
    %666 = vmatprep.subr.bf16.mxu0 %v108
    %667 = vmatpush1.bf16.msra.mxu0 %v107
    %668 = vmatprep.subr.bf16.mxu0 %v112
    %669 = vmatpush1.bf16.msra.mxu0 %v111
    %670 = vmatprep.subr.bf16.mxu0 %v116
    %671 = vmatpush1.bf16.msra.mxu0 %v115
    %672 = vmatprep.subr.bf16.mxu0 %v120
    %673 = vmatpush1.bf16.msra.mxu0 %v119
    %674 = vmatprep.subr.bf16.mxu0 %v124
    %675 = vmatpush1.bf16.msra.mxu0 %v123
    %676 = vmatprep.subr.bf16.mxu0 %v128
    %677 = vmatpush1.bf16.msra.mxu0 %v127
    %678 = vmatprep.subr.bf16.mxu0 %v132
    %679 = vmatpush1.bf16.msra.mxu0 %v131
    %680 = vmatprep.subr.bf16.mxu0 %v136
    %681 = vmatpush1.bf16.msra.mxu0 %v135
    %682 = vmatprep.subr.bf16.mxu0 0
    %683 = vmatpush1.bf16.msra.mxu0 0
    %684 = vmatprep.subr.bf16.mxu0 0
    %685 = vmatpush1.bf16.msra.mxu0 0
    %686 = vmatprep.subr.bf16.mxu0 0
    %687 = vmatpush1.bf16.msra.mxu0 0
    %688 = vmatprep.subr.bf16.mxu0 0
    %689 = vmatpush1.bf16.msra.mxu0 0
    %690 = vmatprep.subr.bf16.mxu0 0
    %691 = vmatpush1.bf16.msra.mxu0 0
    %692 = vmatprep.subr.bf16.mxu0 0
    %693 = vmatpush1.bf16.msra.mxu0 0
    %694 = vmatprep.subr.bf16.mxu0 0
    %695 = vmatpush1.bf16.msra.mxu0 0
    %696 = vmatprep.subr.bf16.mxu0 0
    %697 = vmatpush1.bf16.msra.mxu0 0
    %698 = vmatprep.mubr.bf16.mxu0 0
    %699 = vmatmul.mubr.bf16.gmra.mrb[0].mxu0 %v624
    %v700 = vpop.f32.mrb[0].mxu0
    %v701 = vadd.f32 0.0, %v700
    %v702 = vpop.f32.mrb[0].mxu0
    %v703 = vadd.f32 0.0, %v702
    %v704 = vpop.f32.mrb[0].mxu0
    %v705 = vpop.f32.mrb[0].mxu0
    %706 = vdwg.mxu0
    %v707 = vadd.f32 %v620, %v660
    %v708 = vadd.f32 %v621, %v662
    %v709 = vadd.f32 %v622, %v701
    %v710 = vadd.f32 %v623, %v703
    %v711 = vxor.u32 %v707, 2147483648
    %v712 = vmul.f32 %v711, 1.442695
    %v713 = vpow.pop %v712
    %v714 = vadd.f32 %v713, 1.0
    %v715 = vrcp.pop %v714
    %v716 = vmul.f32 1.0, %v715
    %v717 = vxor.u32 %v708, 2147483648
    %v718 = vmul.f32 %v717, 1.442695
    %v719 = vpow.pop %v718
    %v720 = vadd.f32 %v719, 1.0
    %v721 = vrcp.pop %v720
    %v722 = vmul.f32 1.0, %v721
    %v723 = vtanh.pop %v709
    %v724 = vxor.u32 %v710, 2147483648
    %v725 = vmul.f32 %v724, 1.442695
    %v726 = vpow.pop %v725
    %v727 = vadd.f32 %v726, 1.0
    %v728 = vrcp.pop %v727
    %v729 = vmul.f32 1.0, %v728
    %v730 = vmul.f32 %v722, %v612
    %v731 = vmul.f32 %v716, %v723
    %v732 = vadd.f32 %v730, %v731
    %v733 = vtanh.pop %v732
    %v734 = vmul.f32 %v729, %v733
    %s735 = scalar_lea.vmem [#allocation12], 32
    %736 = vst [vmem:[%s735] sm:$0xff] %v734
    %s737 = scalar_lea.vmem [#allocation6], 80
    %v738 = vld [vmem:[%s737] sm:$0xff]
    %v739 = vld [vmem:[%s737 + $0x8] sm:$0xff]
    %v740 = vunpack.c.l.bf16 %v738
    %v741 = vunpack.c.h.bf16 %v738
    %v742 = vunpack.c.l.bf16 %v739
    %v743 = vunpack.c.h.bf16 %v739
    %v744 = vpack.c.bf16 %v734, %v734
    %745 = vmatprep.subr.bf16.mxu0 %v106
    %746 = vmatpush1.bf16.msra.mxu0 %v105
    %747 = vmatprep.subr.bf16.mxu0 %v110
    %748 = vmatpush1.bf16.msra.mxu0 %v109
    %749 = vmatprep.subr.bf16.mxu0 %v114
    %750 = vmatpush1.bf16.msra.mxu0 %v113
    %751 = vmatprep.subr.bf16.mxu0 %v118
    %752 = vmatpush1.bf16.msra.mxu0 %v117
    %753 = vmatprep.subr.bf16.mxu0 %v122
    %754 = vmatpush1.bf16.msra.mxu0 %v121
    %755 = vmatprep.subr.bf16.mxu0 %v126
    %756 = vmatpush1.bf16.msra.mxu0 %v125
    %757 = vmatprep.subr.bf16.mxu0 %v130
    %758 = vmatpush1.bf16.msra.mxu0 %v129
    %759 = vmatprep.subr.bf16.mxu0 %v134
    %760 = vmatpush1.bf16.msra.mxu0 %v133
    %761 = vmatprep.subr.bf16.mxu0 0
    %762 = vmatpush1.bf16.msra.mxu0 0
    %763 = vmatprep.subr.bf16.mxu0 0
    %764 = vmatpush1.bf16.msra.mxu0 0
    %765 = vmatprep.subr.bf16.mxu0 0
    %766 = vmatpush1.bf16.msra.mxu0 0
    %767 = vmatprep.subr.bf16.mxu0 0
    %768 = vmatpush1.bf16.msra.mxu0 0
    %769 = vmatprep.subr.bf16.mxu0 0
    %770 = vmatpush1.bf16.msra.mxu0 0
    %771 = vmatprep.subr.bf16.mxu0 0
    %772 = vmatpush1.bf16.msra.mxu0 0
    %773 = vmatprep.subr.bf16.mxu0 0
    %774 = vmatpush1.bf16.msra.mxu0 0
    %775 = vmatprep.subr.bf16.mxu0 0
    %776 = vmatpush1.bf16.msra.mxu0 0
    %777 = vmatprep.mubr.bf16.mxu0 0
    %778 = vmatmul.mubr.bf16.gmra.mrb[0].mxu0 %v744
    %v779 = vpop.f32.mrb[0].mxu0
    %v780 = vadd.f32 0.0, %v779
    %v781 = vpop.f32.mrb[0].mxu0
    %v782 = vadd.f32 0.0, %v781
    %v783 = vpop.f32.mrb[0].mxu0
    %v784 = vpop.f32.mrb[0].mxu0
    %785 = vdwg.mxu0
    %786 = vmatprep.subr.bf16.mxu0 %v108
    %787 = vmatpush1.bf16.msra.mxu0 %v107
    %788 = vmatprep.subr.bf16.mxu0 %v112
    %789 = vmatpush1.bf16.msra.mxu0 %v111
    %790 = vmatprep.subr.bf16.mxu0 %v116
    %791 = vmatpush1.bf16.msra.mxu0 %v115
    %792 = vmatprep.subr.bf16.mxu0 %v120
    %793 = vmatpush1.bf16.msra.mxu0 %v119
    %794 = vmatprep.subr.bf16.mxu0 %v124
    %795 = vmatpush1.bf16.msra.mxu0 %v123
    %796 = vmatprep.subr.bf16.mxu0 %v128
    %797 = vmatpush1.bf16.msra.mxu0 %v127
    %798 = vmatprep.subr.bf16.mxu0 %v132
    %799 = vmatpush1.bf16.msra.mxu0 %v131
    %800 = vmatprep.subr.bf16.mxu0 %v136
    %801 = vmatpush1.bf16.msra.mxu0 %v135
    %802 = vmatprep.subr.bf16.mxu0 0
    %803 = vmatpush1.bf16.msra.mxu0 0
    %804 = vmatprep.subr.bf16.mxu0 0
    %805 = vmatpush1.bf16.msra.mxu0 0
    %806 = vmatprep.subr.bf16.mxu0 0
    %807 = vmatpush1.bf16.msra.mxu0 0
    %808 = vmatprep.subr.bf16.mxu0 0
    %809 = vmatpush1.bf16.msra.mxu0 0
    %810 = vmatprep.subr.bf16.mxu0 0
    %811 = vmatpush1.bf16.msra.mxu0 0
    %812 = vmatprep.subr.bf16.mxu0 0
    %813 = vmatpush1.bf16.msra.mxu0 0
    %814 = vmatprep.subr.bf16.mxu0 0
    %815 = vmatpush1.bf16.msra.mxu0 0
    %816 = vmatprep.subr.bf16.mxu0 0
    %817 = vmatpush1.bf16.msra.mxu0 0
    %818 = vmatprep.mubr.bf16.mxu0 0
    %819 = vmatmul.mubr.bf16.gmra.mrb[0].mxu0 %v744
    %v820 = vpop.f32.mrb[0].mxu0
    %v821 = vadd.f32 0.0, %v820
    %v822 = vpop.f32.mrb[0].mxu0
    %v823 = vadd.f32 0.0, %v822
    %v824 = vpop.f32.mrb[0].mxu0
    %v825 = vpop.f32.mrb[0].mxu0
    %826 = vdwg.mxu0
    %v827 = vadd.f32 %v740, %v780
    %v828 = vadd.f32 %v741, %v782
    %v829 = vadd.f32 %v742, %v821
    %v830 = vadd.f32 %v743, %v823
    %v831 = vxor.u32 %v827, 2147483648
    %v832 = vmul.f32 %v831, 1.442695
    %v833 = vpow.pop %v832
    %v834 = vadd.f32 %v833, 1.0
    %v835 = vrcp.pop %v834
    %v836 = vmul.f32 1.0, %v835
    %v837 = vxor.u32 %v828, 2147483648
    %v838 = vmul.f32 %v837, 1.442695
    %v839 = vpow.pop %v838
    %v840 = vadd.f32 %v839, 1.0
    %v841 = vrcp.pop %v840
    %v842 = vmul.f32 1.0, %v841
    %v843 = vtanh.pop %v829
    %v844 = vxor.u32 %v830, 2147483648
    %v845 = vmul.f32 %v844, 1.442695
    %v846 = vpow.pop %v845
    %v847 = vadd.f32 %v846, 1.0
    %v848 = vrcp.pop %v847
    %v849 = vmul.f32 1.0, %v848
    %v850 = vmul.f32 %v842, %v732
    %v851 = vmul.f32 %v836, %v843
    %v852 = vadd.f32 %v850, %v851
    %v853 = vtanh.pop %v852
    %v854 = vmul.f32 %v849, %v853
    %s855 = scalar_lea.vmem [#allocation12], 40
    %856 = vst [vmem:[%s855] sm:$0xff] %v854
    %s857 = scalar_lea.vmem [#allocation6], 96
    %v858 = vld [vmem:[%s857] sm:$0xff]
    %v859 = vld [vmem:[%s857 + $0x8] sm:$0xff]
    %v860 = vunpack.c.l.bf16 %v858
    %v861 = vunpack.c.h.bf16 %v858
    %v862 = vunpack.c.l.bf16 %v859
    %v863 = vunpack.c.h.bf16 %v859
    %v864 = vpack.c.bf16 %v854, %v854
    %865 = vmatprep.subr.bf16.mxu0 %v106
    %866 = vmatpush1.bf16.msra.mxu0 %v105
    %867 = vmatprep.subr.bf16.mxu0 %v110
    %868 = vmatpush1.bf16.msra.mxu0 %v109
    %869 = vmatprep.subr.bf16.mxu0 %v114
    %870 = vmatpush1.bf16.msra.mxu0 %v113
    %871 = vmatprep.subr.bf16.mxu0 %v118
    %872 = vmatpush1.bf16.msra.mxu0 %v117
    %873 = vmatprep.subr.bf16.mxu0 %v122
    %874 = vmatpush1.bf16.msra.mxu0 %v121
    %875 = vmatprep.subr.bf16.mxu0 %v126
    %876 = vmatpush1.bf16.msra.mxu0 %v125
    %877 = vmatprep.subr.bf16.mxu0 %v130
    %878 = vmatpush1.bf16.msra.mxu0 %v129
    %879 = vmatprep.subr.bf16.mxu0 %v134
    %880 = vmatpush1.bf16.msra.mxu0 %v133
    %881 = vmatprep.subr.bf16.mxu0 0
    %882 = vmatpush1.bf16.msra.mxu0 0
    %883 = vmatprep.subr.bf16.mxu0 0
    %884 = vmatpush1.bf16.msra.mxu0 0
    %885 = vmatprep.subr.bf16.mxu0 0
    %886 = vmatpush1.bf16.msra.mxu0 0
    %887 = vmatprep.subr.bf16.mxu0 0
    %888 = vmatpush1.bf16.msra.mxu0 0
    %889 = vmatprep.subr.bf16.mxu0 0
    %890 = vmatpush1.bf16.msra.mxu0 0
    %891 = vmatprep.subr.bf16.mxu0 0
    %892 = vmatpush1.bf16.msra.mxu0 0
    %893 = vmatprep.subr.bf16.mxu0 0
    %894 = vmatpush1.bf16.msra.mxu0 0
    %895 = vmatprep.subr.bf16.mxu0 0
    %896 = vmatpush1.bf16.msra.mxu0 0
    %897 = vmatprep.mubr.bf16.mxu0 0
    %898 = vmatmul.mubr.bf16.gmra.mrb[0].mxu0 %v864
    %v899 = vpop.f32.mrb[0].mxu0
    %v900 = vadd.f32 0.0, %v899
    %v901 = vpop.f32.mrb[0].mxu0
    %v902 = vadd.f32 0.0, %v901
    %v903 = vpop.f32.mrb[0].mxu0
    %v904 = vpop.f32.mrb[0].mxu0
    %905 = vdwg.mxu0
    %906 = vmatprep.subr.bf16.mxu0 %v108
    %907 = vmatpush1.bf16.msra.mxu0 %v107
    %908 = vmatprep.subr.bf16.mxu0 %v112
    %909 = vmatpush1.bf16.msra.mxu0 %v111
    %910 = vmatprep.subr.bf16.mxu0 %v116
    %911 = vmatpush1.bf16.msra.mxu0 %v115
    %912 = vmatprep.subr.bf16.mxu0 %v120
    %913 = vmatpush1.bf16.msra.mxu0 %v119
    %914 = vmatprep.subr.bf16.mxu0 %v124
    %915 = vmatpush1.bf16.msra.mxu0 %v123
    %916 = vmatprep.subr.bf16.mxu0 %v128
    %917 = vmatpush1.bf16.msra.mxu0 %v127
    %918 = vmatprep.subr.bf16.mxu0 %v132
    %919 = vmatpush1.bf16.msra.mxu0 %v131
    %920 = vmatprep.subr.bf16.mxu0 %v136
    %921 = vmatpush1.bf16.msra.mxu0 %v135
    %922 = vmatprep.subr.bf16.mxu0 0
    %923 = vmatpush1.bf16.msra.mxu0 0
    %924 = vmatprep.subr.bf16.mxu0 0
    %925 = vmatpush1.bf16.msra.mxu0 0
    %926 = vmatprep.subr.bf16.mxu0 0
    %927 = vmatpush1.bf16.msra.mxu0 0
    %928 = vmatprep.subr.bf16.mxu0 0
    %929 = vmatpush1.bf16.msra.mxu0 0
    %930 = vmatprep.subr.bf16.mxu0 0
    %931 = vmatpush1.bf16.msra.mxu0 0
    %932 = vmatprep.subr.bf16.mxu0 0
    %933 = vmatpush1.bf16.msra.mxu0 0
    %934 = vmatprep.subr.bf16.mxu0 0
    %935 = vmatpush1.bf16.msra.mxu0 0
    %936 = vmatprep.subr.bf16.mxu0 0
    %937 = vmatpush1.bf16.msra.mxu0 0
    %938 = vmatprep.mubr.bf16.mxu0 0
    %939 = vmatmul.mubr.bf16.gmra.mrb[0].mxu0 %v864
    %v940 = vpop.f32.mrb[0].mxu0
    %v941 = vadd.f32 0.0, %v940
    %v942 = vpop.f32.mrb[0].mxu0
    %v943 = vadd.f32 0.0, %v942
    %v944 = vpop.f32.mrb[0].mxu0
    %v945 = vpop.f32.mrb[0].mxu0
    %946 = vdwg.mxu0
    %v947 = vadd.f32 %v860, %v900
    %v948 = vadd.f32 %v861, %v902
    %v949 = vadd.f32 %v862, %v941
    %v950 = vadd.f32 %v863, %v943
    %v951 = vxor.u32 %v947, 2147483648
    %v952 = vmul.f32 %v951, 1.442695
    %v953 = vpow.pop %v952
    %v954 = vadd.f32 %v953, 1.0
    %v955 = vrcp.pop %v954
    %v956 = vmul.f32 1.0, %v955
    %v957 = vxor.u32 %v948, 2147483648
    %v958 = vmul.f32 %v957, 1.442695
    %v959 = vpow.pop %v958
    %v960 = vadd.f32 %v959, 1.0
    %v961 = vrcp.pop %v960
    %v962 = vmul.f32 1.0, %v961
    %v963 = vtanh.pop %v949
    %v964 = vxor.u32 %v950, 2147483648
    %v965 = vmul.f32 %v964, 1.442695
    %v966 = vpow.pop %v965
    %v967 = vadd.f32 %v966, 1.0
    %v968 = vrcp.pop %v967
    %v969 = vmul.f32 1.0, %v968
    %v970 = vmul.f32 %v962, %v852
    %v971 = vmul.f32 %v956, %v963
    %v972 = vadd.f32 %v970, %v971
    %v973 = vtanh.pop %v972
    %v974 = vmul.f32 %v969, %v973
    %s975 = scalar_lea.vmem [#allocation12], 48
    %976 = vst [vmem:[%s975] sm:$0xff] %v974
    %s977 = scalar_lea.vmem [#allocation6], 112
    %v978 = vld [vmem:[%s977] sm:$0xff]
    %v979 = vld [vmem:[%s977 + $0x8] sm:$0xff]
    %v980 = vunpack.c.l.bf16 %v978
    %v981 = vunpack.c.h.bf16 %v978
    %v982 = vunpack.c.l.bf16 %v979
    %v983 = vunpack.c.h.bf16 %v979
    %v984 = vpack.c.bf16 %v974, %v974
    %985 = vmatprep.subr.bf16.mxu0 %v106
    %986 = vmatpush1.bf16.msra.mxu0 %v105
    %987 = vmatprep.subr.bf16.mxu0 %v110
    %988 = vmatpush1.bf16.msra.mxu0 %v109
    %989 = vmatprep.subr.bf16.mxu0 %v114
    %990 = vmatpush1.bf16.msra.mxu0 %v113
    %991 = vmatprep.subr.bf16.mxu0 %v118
    %992 = vmatpush1.bf16.msra.mxu0 %v117
    %993 = vmatprep.subr.bf16.mxu0 %v122
    %994 = vmatpush1.bf16.msra.mxu0 %v121
    %995 = vmatprep.subr.bf16.mxu0 %v126
    %996 = vmatpush1.bf16.msra.mxu0 %v125
    %997 = vmatprep.subr.bf16.mxu0 %v130
    %998 = vmatpush1.bf16.msra.mxu0 %v129
    %999 = vmatprep.subr.bf16.mxu0 %v134
    %1000 = vmatpush1.bf16.msra.mxu0 %v133
    %1001 = vmatprep.subr.bf16.mxu0 0
    %1002 = vmatpush1.bf16.msra.mxu0 0
    %1003 = vmatprep.subr.bf16.mxu0 0
    %1004 = vmatpush1.bf16.msra.mxu0 0
    %1005 = vmatprep.subr.bf16.mxu0 0
    %1006 = vmatpush1.bf16.msra.mxu0 0
    %1007 = vmatprep.subr.bf16.mxu0 0
    %1008 = vmatpush1.bf16.msra.mxu0 0
    %1009 = vmatprep.subr.bf16.mxu0 0
    %1010 = vmatpush1.bf16.msra.mxu0 0
    %1011 = vmatprep.subr.bf16.mxu0 0
    %1012 = vmatpush1.bf16.msra.mxu0 0
    %1013 = vmatprep.subr.bf16.mxu0 0
    %1014 = vmatpush1.bf16.msra.mxu0 0
    %1015 = vmatprep.subr.bf16.mxu0 0
    %1016 = vmatpush1.bf16.msra.mxu0 0
    %1017 = vmatprep.mubr.bf16.mxu0 0
    %1018 = vmatmul.mubr.bf16.gmra.mrb[0].mxu0 %v984
    %v1019 = vpop.f32.mrb[0].mxu0
    %v1020 = vadd.f32 0.0, %v1019
    %v1021 = vpop.f32.mrb[0].mxu0
    %v1022 = vadd.f32 0.0, %v1021
    %v1023 = vpop.f32.mrb[0].mxu0
    %v1024 = vpop.f32.mrb[0].mxu0
    %1025 = vdwg.mxu0
    %1026 = vmatprep.subr.bf16.mxu0 %v108
    %1027 = vmatpush1.bf16.msra.mxu0 %v107
    %1028 = vmatprep.subr.bf16.mxu0 %v112
    %1029 = vmatpush1.bf16.msra.mxu0 %v111
    %1030 = vmatprep.subr.bf16.mxu0 %v116
    %1031 = vmatpush1.bf16.msra.mxu0 %v115
    %1032 = vmatprep.subr.bf16.mxu0 %v120
    %1033 = vmatpush1.bf16.msra.mxu0 %v119
    %1034 = vmatprep.subr.bf16.mxu0 %v124
    %1035 = vmatpush1.bf16.msra.mxu0 %v123
    %1036 = vmatprep.subr.bf16.mxu0 %v128
    %1037 = vmatpush1.bf16.msra.mxu0 %v127
    %1038 = vmatprep.subr.bf16.mxu0 %v132
    %1039 = vmatpush1.bf16.msra.mxu0 %v131
    %1040 = vmatprep.subr.bf16.mxu0 %v136
    %1041 = vmatpush1.bf16.msra.mxu0 %v135
    %1042 = vmatprep.subr.bf16.mxu0 0
    %1043 = vmatpush1.bf16.msra.mxu0 0
    %1044 = vmatprep.subr.bf16.mxu0 0
    %1045 = vmatpush1.bf16.msra.mxu0 0
    %1046 = vmatprep.subr.bf16.mxu0 0
    %1047 = vmatpush1.bf16.msra.mxu0 0
    %1048 = vmatprep.subr.bf16.mxu0 0
    %1049 = vmatpush1.bf16.msra.mxu0 0
    %1050 = vmatprep.subr.bf16.mxu0 0
    %1051 = vmatpush1.bf16.msra.mxu0 0
    %1052 = vmatprep.subr.bf16.mxu0 0
    %1053 = vmatpush1.bf16.msra.mxu0 0
    %1054 = vmatprep.subr.bf16.mxu0 0
    %1055 = vmatpush1.bf16.msra.mxu0 0
    %1056 = vmatprep.subr.bf16.mxu0 0
    %1057 = vmatpush1.bf16.msra.mxu0 0
    %1058 = vmatprep.mubr.bf16.mxu0 0
    %1059 = vmatmul.mubr.bf16.gmra.mrb[0].mxu0 %v984
    %v1060 = vpop.f32.mrb[0].mxu0
    %v1061 = vadd.f32 0.0, %v1060
    %v1062 = vpop.f32.mrb[0].mxu0
    %v1063 = vadd.f32 0.0, %v1062
    %v1064 = vpop.f32.mrb[0].mxu0
    %v1065 = vpop.f32.mrb[0].mxu0
    %1066 = vdwg.mxu0
    %v1067 = vadd.f32 %v980, %v1020
    %v1068 = vadd.f32 %v981, %v1022
    %v1069 = vadd.f32 %v982, %v1061
    %v1070 = vadd.f32 %v983, %v1063
    %v1071 = vxor.u32 %v1067, 2147483648
    %v1072 = vmul.f32 %v1071, 1.442695
    %v1073 = vpow.pop %v1072
    %v1074 = vadd.f32 %v1073, 1.0
    %v1075 = vrcp.pop %v1074
    %v1076 = vmul.f32 1.0, %v1075
    %v1077 = vxor.u32 %v1068, 2147483648
    %v1078 = vmul.f32 %v1077, 1.442695
    %v1079 = vpow.pop %v1078
    %v1080 = vadd.f32 %v1079, 1.0
    %v1081 = vrcp.pop %v1080
    %v1082 = vmul.f32 1.0, %v1081
    %v1083 = vtanh.pop %v1069
    %v1084 = vxor.u32 %v1070, 2147483648
    %v1085 = vmul.f32 %v1084, 1.442695
    %v1086 = vpow.pop %v1085
    %v1087 = vadd.f32 %v1086, 1.0
    %v1088 = vrcp.pop %v1087
    %v1089 = vmul.f32 1.0, %v1088
    %v1090 = vmul.f32 %v1082, %v972
    %v1091 = vmul.f32 %v1076, %v1083
    %v1092 = vadd.f32 %v1090, %v1091
    %v1093 = vtanh.pop %v1092
    %v1094 = vmul.f32 %v1089, %v1093
    %s1095 = scalar_lea.vmem [#allocation12], 56
    %1096 = vst [vmem:[%s1095] sm:$0xff] %v1094
    %1097 = vst [vmem:[#allocation3] sm:$0xff] %v1094
    %1098 = vst [vmem:[#allocation4] sm:$0xff] %v1092
    // Predicated region
    $region30: #{model_forward.6} parent=1 // pred_check
      %p1099 = pneg %p58
    $region31: #{model_forward.6} parent=1 // pred_check_branch
      %1101 = sbr.rel (%p1099) target = $region33
    $region32: #{model_forward.6} parent=1 // pred_region
      %1102 = vst [vmem:[#allocation13] sm:$0xff] %v1094
      %1103 = vst [vmem:[#allocation15] sm:$0xff] %v1092
    $region33: #{model_forward.6} parent=1 // pred_fallthru
      _
    // Predicated region
    $region34: #{model_forward.6} parent=1 // pred_check
      _
    $region35: #{model_forward.6} parent=1 // pred_check_branch
      %1105 = sbr.rel (0) target = $region37
    $region36: #{model_forward.6} parent=1 // pred_region
      %s1107 = ssub.s32 1024, 1024
      %1108 = vsyncadd [#allocation8], %s1107
      %s1109 = sshll.u32 [#allocation12], 4
      %s1110 = int_to_ptr.vmem [resolvable:$true] %s1109
      %1115 = dma.vmem_to_hbm [thread:$0]  %s1110, 1024, %s4, [#allocation8], 128, 128, 8
    $region37: #{model_forward.6} parent=1 // pred_fallthru
      _
    // Predicated region
    $region38: #{model_forward.6} parent=1 // pred_check
      _
    $region39: #{model_forward.6} parent=1 // pred_check_branch
      %1117 = sbr.rel (0) target = $region41
    $region40: #{model_forward.6} parent=1 // pred_region
      %s1119 = ssub.s32 128, 128
      %1120 = vsyncadd [#allocation14], %s1119
      %s1122 = sshll.u32 [#allocation13], 4
      %s1123 = int_to_ptr.vmem [resolvable:$true] %s1122
      %1125 = dma.vmem_to_hbm [thread:$0]  %s1123, 128, %s5, [#allocation14]
    $region41: #{model_forward.6} parent=1 // pred_fallthru
      _
    // Predicated region
    $region42: #{model_forward.6} parent=1 // pred_check
      _
    $region43: #{model_forward.6} parent=1 // pred_check_branch
      %1127 = sbr.rel (0) target = $region45
    $region44: #{model_forward.6} parent=1 // pred_region
      %s1129 = ssub.s32 128, 128
      %1130 = vsyncadd [#allocation14], %s1129
      %s1132 = sshll.u32 [#allocation15], 4
      %s1133 = int_to_ptr.vmem [resolvable:$true] %s1132
      %1135 = dma.vmem_to_hbm [thread:$0]  %s1133, 128, %s6, [#allocation14]
    $region45: #{model_forward.6} parent=1 // pred_fallthru
      _
    // Predicated region
    $region46: #{model_forward.6} parent=1 // pred_check
      _
    $region47: #{model_forward.6} parent=1 // pred_check_branch
      %1137 = sbr.rel (0) target = $region49
    $region48: #{model_forward.6} parent=1 // pred_region
      %1138 = dma.done [#allocation8], 1024
    $region49: #{model_forward.6} parent=1 // pred_fallthru
      _
    // Predicated region
    $region50: #{model_forward.6} parent=1 // pred_check
      _
    $region51: #{model_forward.6} parent=1 // pred_check_branch
      %1140 = sbr.rel (0) target = $region53
    $region52: #{model_forward.6} parent=1 // pred_region
      %1141 = dma.done [#allocation14], 128
    $region53: #{model_forward.6} parent=1 // pred_fallthru
      _
    // Predicated region
    $region54: #{model_forward.6} parent=1 // pred_check
      _
    $region55: #{model_forward.6} parent=1 // pred_check_branch
      %1143 = sbr.rel (0) target = $region57
    $region56: #{model_forward.6} parent=1 // pred_region
      %1144 = dma.done [#allocation14], 128
    $region57: #{model_forward.6} parent=1 // pred_fallthru
      _
    %1145 = vsyncpa [#allocation7], 1
    %1146 = vsyncpa [#allocation10], 1
    %1147 = vsyncpa [#allocation8], 1
    %1148 = vsyncpa [#allocation14], 1
  %1149 = vsyncmov [#allocation5]
  %s1150 = vpop.sfrf %1149
  %p1151 = scmp.eq.s32.totalorder %s1150, 0
  %p1152 = pneg %p1151
  %1154 = shalt.err (%p1152)

</llo_original>
